<compile_context>
chip_gen: v5e
topology: v5e:2x2
jax: 0.10.0
libtpu: 0.0.40
codegen_flags: <defaults>
</compile_context>

<pallas_src>
import functools
import math

import jax
import jax.numpy as jnp
from jax.experimental import pallas as pl
from jax.experimental.pallas import tpu as pltpu

LN_EPS = 1e-5
NEG_INF = -1e30          # stand-in for float('-inf'); identical after softmax
INV_SQRT2 = 0.7071067811865476


# ----------------------------------------------------------------------------
# small helpers
# ----------------------------------------------------------------------------
def _pick_tile(dim, candidates):
    """Largest candidate tile that divides `dim` exactly, else the full dim."""
    for c in candidates:
        if dim % c == 0:
            return c
    return dim


def _vmem_limit(blocks):
    """Explicit scoped-VMEM budget: double-buffered block footprint + headroom,
    clamped well under the 64 MiB physical VMEM of v7x."""
    total = 0
    for shape, dtype in blocks:
        total += 2 * math.prod(shape) * jnp.dtype(dtype).itemsize
    return int(min(max(total + (4 << 20), 8 << 20), 48 << 20))


def _erf(x):
    # Abramowitz & Stegun 7.1.26 rational approximation (max abs err ~1.5e-7,
    # i.e. float32-exact); avoids relying on an erf lowering inside Mosaic.
    a1, a2, a3, a4, a5 = (0.254829592, -0.284496736, 1.421413741,
                          -1.453152027, 1.061405429)
    p = 0.3275911
    ax = jnp.abs(x)
    t = 1.0 / (1.0 + p * ax)
    poly = ((((a5 * t + a4) * t + a3) * t + a2) * t + a1) * t
    y = 1.0 - poly * jnp.exp(-ax * ax)
    return jnp.where(x >= 0, y, -y)


def _gelu_exact(x):
    # matches torch.nn.GELU() default (erf formulation)
    return 0.5 * x * (1.0 + _erf(x * INV_SQRT2))


# ----------------------------------------------------------------------------
# Pallas kernels
# ----------------------------------------------------------------------------
def _ln_linear_kernel(x_ref, g_ref, bln_ref, w_ref, b_ref, o_ref, *, gelu):
    """Fused LayerNorm -> bf16 matmul -> +bias [-> exact GELU].

    LN / bias / GELU run in f32 on the VPU; only the MXU operands are bf16.
    LN of a row tile is recomputed per output-column tile (cheap vs. matmul).
    """
    x = x_ref[...].astype(jnp.float32)                       # (TM, Cin)
    mean = jnp.mean(x, axis=-1, keepdims=True)
    xc = x - mean
    var = jnp.mean(xc * xc, axis=-1, keepdims=True)
    y = xc * jax.lax.rsqrt(var + LN_EPS)
    y = y * g_ref[...] + bln_ref[...]
    out = jnp.dot(y.astype(jnp.bfloat16), w_ref[...],
                  preferred_element_type=jnp.float32)        # (TM, TN) f32
    out = out + b_ref[...]
    if gelu:
        out = _gelu_exact(out)
    o_ref[...] = out.astype(o_ref.dtype)


def ln_linear(x, ln_g, ln_b, w, b, *, gelu, out_dtype):
    N, Cin = x.shape
    Cout = w.shape[1]
    TM = _pick_tile(N, (512, 256, 128, 64, 32, 16, 8))
    TN = _pick_tile(Cout, (512, 256, 128))
    grid = (N // TM, Cout // TN)
    blocks = [((TM, Cin), x.dtype), ((1, Cin), ln_g.dtype), ((1, Cin), ln_b.dtype),
              ((Cin, TN), w.dtype), ((1, TN), b.dtype), ((TM, TN), out_dtype)]
    return pl.pallas_call(
        functools.partial(_ln_linear_kernel, gelu=gelu),
        out_shape=jax.ShapeDtypeStruct((N, Cout), out_dtype),
        grid=grid,
        in_specs=[
            pl.BlockSpec((TM, Cin), lambda i, j: (i, 0)),
            pl.BlockSpec((1, Cin), lambda i, j: (0, 0)),
            pl.BlockSpec((1, Cin), lambda i, j: (0, 0)),
            pl.BlockSpec((Cin, TN), lambda i, j: (0, j)),
            pl.BlockSpec((1, TN), lambda i, j: (0, j)),
        ],
        out_specs=pl.BlockSpec((TM, TN), lambda i, j: (i, j)),
        compiler_params=pltpu.CompilerParams(
            dimension_semantics=("parallel", "parallel"),
            vmem_limit_bytes=_vmem_limit(blocks)),
    )(x, ln_g.reshape(1, Cin), ln_b.reshape(1, Cin), w, b.reshape(1, Cout))


def _linear_residual_kernel_acc(x_ref, w_ref, b_ref, r_ref, o_ref, acc_ref):
    """Tiled matmul with f32 VMEM accumulator; bias + residual fused into the
    final-k writeback (dropout == identity in eval mode)."""
    k = pl.program_id(2)

    @pl.when(k == 0)
    def _init():
        acc_ref[...] = jnp.zeros_like(acc_ref)

    acc_ref[...] += jnp.dot(x_ref[...], w_ref[...],
                            preferred_element_type=jnp.float32)

    @pl.when(k == pl.num_programs(2) - 1)
    def _finish():
        o_ref[...] = (acc_ref[...] + b_ref[...]
                      + r_ref[...].astype(jnp.float32)).astype(o_ref.dtype)


def _linear_residual_kernel_1k(x_ref, w_ref, b_ref, r_ref, o_ref):
    """Single-K-tile variant: no scratch accumulator, direct writeback."""
    out = jnp.dot(x_ref[...], w_ref[...], preferred_element_type=jnp.float32)
    o_ref[...] = (out + b_ref[...]
                  + r_ref[...].astype(jnp.float32)).astype(o_ref.dtype)


def linear_residual(x, w, b, res, *, out_dtype=jnp.float32):
    N, Cin = x.shape
    Cout = w.shape[1]
    TM = _pick_tile(N, (512, 256, 128, 64, 32, 16, 8))
    TN = _pick_tile(Cout, (512, 256, 128))
    TK = _pick_tile(Cin, (512, 256, 128))
    kt = Cin // TK
    blocks = [((TM, TK), x.dtype), ((TK, TN), w.dtype), ((1, TN), b.dtype),
              ((TM, TN), res.dtype), ((TM, TN), out_dtype),
              ((TM, TN), jnp.float32)]
    if kt == 1:
        # whole contraction fits one tile: skip the scratch accumulator path
        return pl.pallas_call(
            _linear_residual_kernel_1k,
            out_shape=jax.ShapeDtypeStruct((N, Cout), out_dtype),
            grid=(N // TM, Cout // TN),
            in_specs=[
                pl.BlockSpec((TM, Cin), lambda i, j: (i, 0)),
                pl.BlockSpec((Cin, TN), lambda i, j: (0, j)),
                pl.BlockSpec((1, TN), lambda i, j: (0, j)),
                pl.BlockSpec((TM, TN), lambda i, j: (i, j)),
            ],
            out_specs=pl.BlockSpec((TM, TN), lambda i, j: (i, j)),
            compiler_params=pltpu.CompilerParams(
                dimension_semantics=("parallel", "parallel"),
                vmem_limit_bytes=_vmem_limit(blocks)),
        )(x, w, b.reshape(1, Cout), res)
    return pl.pallas_call(
        _linear_residual_kernel_acc,
        out_shape=jax.ShapeDtypeStruct((N, Cout), out_dtype),
        grid=(N // TM, Cout // TN, kt),
        in_specs=[
            pl.BlockSpec((TM, TK), lambda i, j, k: (i, k)),
            pl.BlockSpec((TK, TN), lambda i, j, k: (k, j)),
            pl.BlockSpec((1, TN), lambda i, j, k: (0, j)),
            pl.BlockSpec((TM, TN), lambda i, j, k: (i, j)),
        ],
        out_specs=pl.BlockSpec((TM, TN), lambda i, j, k: (i, j)),
        scratch_shapes=[pltpu.VMEM((TM, TN), jnp.float32)],
        compiler_params=pltpu.CompilerParams(
            dimension_semantics=("parallel", "parallel", "arbitrary"),
            vmem_limit_bytes=_vmem_limit(blocks)),
    )(x, w, b.reshape(1, Cout), res)


def _window_attn_kernel(*refs, num_heads, has_bias):
    """All nW windows of one image per grid step; per-head split via contiguous
    lane slices (qkv columns are pre-grouped [q|k|v] in the wrapper, q already
    carries the 1/sqrt(h_dim) scale).  Per-head outputs are concatenated once
    so the final store is a single full-lane-width vst."""
    if has_bias:
        qkv_ref, bias_ref, o_ref = refs
    else:
        qkv_ref, o_ref = refs
    qkv = qkv_ref[0]                                   # (nW, M, 3C) bf16
    C = qkv.shape[-1] // 3
    E = C // num_heads
    bias = bias_ref[...] if has_bias else None          # (nW, M, M) f32, resident
    outs = []
    for h in range(num_heads):                          # static unroll
        q = qkv[:, :, h * E:(h + 1) * E]
        k = qkv[:, :, C + h * E:C + (h + 1) * E]
        v = qkv[:, :, 2 * C + h * E:2 * C + (h + 1) * E]
        s = jnp.einsum('wme,wne->wmn', q, k,
                       preferred_element_type=jnp.float32)
        if has_bias:
            s = s + bias
        s = s - jnp.max(s, axis=-1, keepdims=True)
        p = jnp.exp(s)
        p = p * pl.reciprocal(jnp.sum(p, axis=-1, keepdims=True), approx=True)
        outs.append(jnp.einsum('wmn,wne->wme', p.astype(qkv.dtype), v,
                               preferred_element_type=jnp.float32))
    o_ref[0] = jnp.concatenate(outs, axis=-1).astype(o_ref.dtype)


def window_attention(qkv, bias, *, num_heads):
    B, nW, M, C3 = qkv.shape
    C = C3 // 3
    has_bias = bias is not None
    in_specs = [pl.BlockSpec((1, nW, M, C3), lambda b: (b, 0, 0, 0))]
    args = [qkv]
    blocks = [((1, nW, M, C3), qkv.dtype), ((1, nW, M, C), qkv.dtype)]
    if has_bias:
        # constant index_map -> the bias stays resident across the whole grid
        in_specs.append(pl.BlockSpec((nW, M, M), lambda b: (0, 0, 0)))
        args.append(bias)
        blocks.append(((nW, M, M), bias.dtype))
    return pl.pallas_call(
        functools.partial(_window_attn_kernel, num_heads=num_heads,
                          has_bias=has_bias),
        out_shape=jax.ShapeDtypeStruct((B, nW, M, C), qkv.dtype),
        grid=(B,),
        in_specs=in_specs,
        out_specs=pl.BlockSpec((1, nW, M, C), lambda b: (b, 0, 0, 0)),
        compiler_params=pltpu.CompilerParams(
            dimension_semantics=("parallel",),
            vmem_limit_bytes=_vmem_limit(blocks)),
    )(*args)


# ----------------------------------------------------------------------------
# module forward (glue = cheap reshapes/rolls; compute = Pallas kernels)
# ----------------------------------------------------------------------------
def _attention_bias(nh, nw, m):
    M = m * m
    kk = m * (m // 2)
    row_mask = jnp.zeros((M, M), jnp.float32)
    row_mask = row_mask.at[M - kk:, :M - kk].set(NEG_INF)
    row_mask = row_mask.at[:M - kk, M - kk:].set(NEG_INF)
    # einops '(r w1) (c w2) -> (w1 r) (w2 c)'
    col_mask = jnp.transpose(row_mask.reshape(m, m, m, m), (1, 0, 3, 2)).reshape(M, M)
    bias = jnp.zeros((nh, nw, M, M), jnp.float32)
    bias = bias.at[-1, :].add(row_mask)     # att_scores[:, :, -1, :] += row_mask
    bias = bias.at[:, -1].add(col_mask)     # att_scores[:, :, :, -1] += column_mask
    return bias.reshape(nh * nw, M, M)


def swin_encoder_block(x, params, *, num_heads, window_size, mask):
    """Pallas forward of SwinEncoderBlock.
    TODO(synk): nn.Dropout(0.1) is modeled as identity (eval-mode semantics)."""
    B, L, C = x.shape
    height = width = int(round(math.sqrt(L)))
    m = window_size
    nh, nw = height // m, width // m
    nW, M = nh * nw, m * m
    C3 = 3 * C

    # --- weight preprocessing (column regroup, scale folding, bf16 cast) ------
    # proj1 output columns are interleaved '(c K)' (K=3 minor); regroup them to
    # [q | k | v] (each in (head, e) order) so the in-kernel head/qkv split is a
    # contiguous lane slice, and fold the 1/sqrt(h_dim) attention scale into the
    # q columns (scales C weight columns once instead of M*M scores every step).
    scale = 1.0 / math.sqrt(C / num_heads)          # h_dim = embed_dim / num_heads
    w_qkv = params['w_qkv'].reshape(C, C, 3).transpose(0, 2, 1).reshape(C, C3)
    b_qkv = params['b_qkv'].reshape(C, 3).transpose(1, 0).reshape(C3)
    qscale = jnp.concatenate([jnp.full((C,), scale, jnp.float32),
                              jnp.ones((2 * C,), jnp.float32)])
    w_qkv = (w_qkv * qscale[None, :]).astype(jnp.bfloat16)
    b_qkv = b_qkv * qscale
    w_proj = params['w_proj'].astype(jnp.bfloat16)
    w_fc1 = params['w_fc1'].astype(jnp.bfloat16)
    w_fc2 = params['w_fc2'].astype(jnp.bfloat16)
    ln_g, ln_b = params['ln_g'], params['ln_b']   # torch block shares ONE LayerNorm

    x2d = x.reshape(B * L, C)

    # --- LN1 fused with QKV projection ---------------------------------------
    qkv = ln_linear(x2d, ln_g, ln_b, w_qkv, b_qkv,
                    gelu=False, out_dtype=jnp.bfloat16)          # (B*L, 3C)

    # --- window partition (single cheap transpose each way; roll matches the
    #     torch expressions -window_size // 2 and window_size // 2 exactly) ----
    qkv = qkv.reshape(B, height, width, C3)
    if mask:
        qkv = jnp.roll(qkv, (-m // 2, -m // 2), axis=(1, 2))
    qkv = (qkv.reshape(B, nh, m, nw, m, C3)
              .transpose(0, 1, 3, 2, 4, 5)
              .reshape(B, nW, M, C3))

    bias = _attention_bias(nh, nw, m) if mask else None
    att = window_attention(qkv, bias, num_heads=num_heads)        # (B, nW, M, C)

    att = (att.reshape(B, nh, nw, m, m, C)
              .transpose(0, 1, 3, 2, 4, 5)
              .reshape(B, height, width, C))
    if mask:
        att = jnp.roll(att, (m // 2, m // 2), axis=(1, 2))
    att = att.reshape(B * L, C)

    # --- proj2 fused with the first residual add ------------------------------
    res1 = linear_residual(att, w_proj, params['b_proj'], x2d)    # (B*L, C) f32

    # --- LN2 (shared weights) fused with FC1 + exact GELU ---------------------
    h = ln_linear(res1, ln_g, ln_b, w_fc1, params['b_fc1'],
                  gelu=True, out_dtype=jnp.bfloat16)              # (B*L, 4C)

    # --- FC2 fused with the second residual add -------------------------------
    out = linear_residual(h, w_fc2, params['b_fc2'], res1)        # (B*L, C) f32
    return out.reshape(B, L, C)


# ----------------------------------------------------------------------------
# pure-JAX reference (faithful port of the torch module, f32, for checking)
# ----------------------------------------------------------------------------
def _ref_layernorm(x, g, b):
    mean = jnp.mean(x, axis=-1, keepdims=True)
    var = jnp.mean((x - mean) ** 2, axis=-1, keepdims=True)
    return (x - mean) / jnp.sqrt(var + LN_EPS) * g + b


def _ref_shifted_window_msa(x, params, *, num_heads, window_size, mask):
    B, L, C = x.shape
    height = width = int(round(math.sqrt(L)))
    m = window_size
    nh, nw = height // m, width // m
    M = m * m
    E = C // num_heads

    x = x @ params['w_qkv'] + params['b_qkv']                     # proj1
    x = x.reshape(B, height, width, C, 3)                         # 'b (h w) (c K)'
    if mask:
        x = jnp.roll(x, (-m // 2, -m // 2), axis=(1, 2))
    x = x.reshape(B, nh, m, nw, m, num_heads, E, 3)
    x = jnp.transpose(x, (0, 5, 1, 3, 2, 4, 6, 7))                # b H h w m1 m2 E K
    x = x.reshape(B, num_heads, nh, nw, M, E, 3)
    q, k, v = x[..., 0], x[..., 1], x[..., 2]

    att = jnp.einsum('bHhwme,bHhwne->bHhwmn', q, k) / math.sqrt(C / num_heads)
    if mask:
        kk = m * (m // 2)
        row_mask = jnp.zeros((M, M), jnp.float32)
        row_mask = row_mask.at[M - kk:, :M - kk].set(NEG_INF)
        row_mask = row_mask.at[:M - kk, M - kk:].set(NEG_INF)
        col_mask = jnp.transpose(row_mask.reshape(m, m, m, m),
                                 (1, 0, 3, 2)).reshape(M, M)
        att = att.at[:, :, -1, :].add(row_mask)
        att = att.at[:, :, :, -1].add(col_mask)
    att = jax.nn.softmax(att, axis=-1)
    out = jnp.einsum('bHhwmn,bHhwne->bHhwme', att, v)

    out = out.reshape(B, num_heads, nh, nw, m, m, E)
    out = jnp.transpose(out, (0, 2, 4, 3, 5, 1, 6)).reshape(B, height, width, C)
    if mask:
        out = jnp.roll(out, (m // 2, m // 2), axis=(1, 2))
    out = out.reshape(B, L, C)
    return out @ params['w_proj'] + params['b_proj']              # proj2


def swin_encoder_block_ref(x, params, *, num_heads, window_size, mask):
    ln = lambda t: _ref_layernorm(t, params['ln_g'], params['ln_b'])
    res1 = _ref_shifted_window_msa(ln(x), params, num_heads=num_heads,
                                   window_size=window_size, mask=mask) + x
    y = ln(res1)
    h = jax.nn.gelu(y @ params['w_fc1'] + params['b_fc1'], approximate=False)
    return h @ params['w_fc2'] + params['b_fc2'] + res1


# ----------------------------------------------------------------------------
# params + test harness
# ----------------------------------------------------------------------------
def init_params(key, C):
    ks = jax.random.split(key, 10)
    s = 0.05
    n = lambda k, shape: s * jax.random.normal(k, shape, jnp.float32)
    return dict(
        ln_g=1.0 + n(ks[0], (C,)),
        ln_b=n(ks[1], (C,)),
        w_qkv=n(ks[2], (C, 3 * C)), b_qkv=n(ks[3], (3 * C,)),   # proj1
        w_proj=n(ks[4], (C, C)),    b_proj=n(ks[5], (C,)),      # proj2
        w_fc1=n(ks[6], (C, 4 * C)), b_fc1=n(ks[7], (4 * C,)),   # MLP1[0]
        w_fc2=n(ks[8], (4 * C, C)), b_fc2=n(ks[9], (C,)),       # MLP1[2]
    )


if __name__ == "__main__":
    B = 2
    EMBED_DIM = 32
    NUM_HEADS = 4
    WINDOW_SIZE = 4
    H = W = 8                       # 2x2 windows of 4x4 tokens
    L = H * W

    key = jax.random.PRNGKey(0)
    kx, kp = jax.random.split(key)
    x = jax.random.normal(kx, (B, L, EMBED_DIM), jnp.float32)
    params = init_params(kp, EMBED_DIM)

    for use_mask in (True, False):          # shifted (masked) and plain blocks
        fwd = jax.jit(functools.partial(
            swin_encoder_block, num_heads=NUM_HEADS,
            window_size=WINDOW_SIZE, mask=use_mask))
        out = jax.block_until_ready(fwd(x, params))
        ref = jax.block_until_ready(
            swin_encoder_block_ref(x, params, num_heads=NUM_HEADS,
                                   window_size=WINDOW_SIZE, mask=use_mask))
        assert out.shape == (B, L, EMBED_DIM)
        assert bool(jnp.all(jnp.isfinite(out)))
        max_diff = float(jnp.max(jnp.abs(out - ref)))
        assert max_diff < 5e-2, f"mask={use_mask}: mismatch vs reference: {max_diff}"

    print("KERNEL_OK")
</pallas_src>

<mosaic_0001>
module attributes {stable_mosaic.version = 11 : i64} {
  func.func @_ln_linear_kernel(%arg0: i32, %arg1: i32, %arg2: memref<128x32xf32, #tpu.memory_space<vmem>>, %arg3: memref<1x32xf32, #tpu.memory_space<vmem>>, %arg4: memref<1x32xf32, #tpu.memory_space<vmem>>, %arg5: memref<32x96xbf16, #tpu.memory_space<vmem>>, %arg6: memref<1x96xf32, #tpu.memory_space<vmem>>, %arg7: memref<128x96xbf16, #tpu.memory_space<vmem>>) attributes {dimension_semantics = [#tpu.dimension_semantics<parallel>, #tpu.dimension_semantics<parallel>], iteration_bounds = array<i64: 1, 1>, scalar_prefetch = 0 : i64, scratch_operands = 0 : i64, tpu.core_type = #tpu.core_type<tc>, window_params = [{transform_indices = @transform_0, window_bounds = array<i64: 128, 32>}, {pipeline_mode = #tpu.pipeline_mode<synchronous>, transform_indices = @transform_1, window_bounds = array<i64: 1, 32>}, {pipeline_mode = #tpu.pipeline_mode<synchronous>, transform_indices = @transform_2, window_bounds = array<i64: 1, 32>}, {transform_indices = @transform_3, window_bounds = array<i64: 32, 96>}, {transform_indices = @transform_4, window_bounds = array<i64: 1, 96>}, {transform_indices = @transform_5, window_bounds = array<i64: 128, 96>}]} {
    %c0 = arith.constant 0 : index
    %c0_0 = arith.constant 0 : index
    %0 = vector.load %arg2[%c0, %c0_0] : memref<128x32xf32, #tpu.memory_space<vmem>>, vector<128x32xf32>
    %cst = arith.constant dense<0.000000e+00> : vector<128xf32>
    %1 = vector.multi_reduction <add>, %0, %cst [1] : vector<128x32xf32> to vector<128xf32>
    %2 = vector.shape_cast %1 : vector<128xf32> to vector<128x1xf32>
    %cst_1 = arith.constant 3.200000e+01 : f32
    %3 = vector.broadcast %cst_1 : f32 to vector<128x1xf32>
    %4 = arith.divf %2, %3 : vector<128x1xf32>
    %5 = vector.broadcast %4 : vector<128x1xf32> to vector<128x32xf32>
    %6 = arith.subf %0, %5 : vector<128x32xf32>
    %7 = arith.mulf %6, %6 : vector<128x32xf32>
    %cst_2 = arith.constant dense<0.000000e+00> : vector<128xf32>
    %8 = vector.multi_reduction <add>, %7, %cst_2 [1] : vector<128x32xf32> to vector<128xf32>
    %9 = vector.shape_cast %8 : vector<128xf32> to vector<128x1xf32>
    %cst_3 = arith.constant 3.200000e+01 : f32
    %10 = vector.broadcast %cst_3 : f32 to vector<128x1xf32>
    %11 = arith.divf %9, %10 : vector<128x1xf32>
    %cst_4 = arith.constant 9.99999974E-6 : f32
    %12 = vector.broadcast %cst_4 : f32 to vector<128x1xf32>
    %13 = arith.addf %11, %12 : vector<128x1xf32>
    %14 = math.rsqrt %13 : vector<128x1xf32>
    %15 = vector.broadcast %14 : vector<128x1xf32> to vector<128x32xf32>
    %16 = arith.mulf %6, %15 : vector<128x32xf32>
    %c0_5 = arith.constant 0 : index
    %c0_6 = arith.constant 0 : index
    %17 = vector.load %arg3[%c0_5, %c0_6] : memref<1x32xf32, #tpu.memory_space<vmem>>, vector<1x32xf32>
    %18 = vector.broadcast %17 : vector<1x32xf32> to vector<128x32xf32>
    %19 = arith.mulf %16, %18 : vector<128x32xf32>
    %c0_7 = arith.constant 0 : index
    %c0_8 = arith.constant 0 : index
    %20 = vector.load %arg4[%c0_7, %c0_8] : memref<1x32xf32, #tpu.memory_space<vmem>>, vector<1x32xf32>
    %21 = vector.broadcast %20 : vector<1x32xf32> to vector<128x32xf32>
    %22 = arith.addf %19, %21 : vector<128x32xf32>
    %23 = arith.truncf %22 : vector<128x32xf32> to vector<128x32xbf16>
    %c0_9 = arith.constant 0 : index
    %c0_10 = arith.constant 0 : index
    %24 = vector.load %arg5[%c0_9, %c0_10] : memref<32x96xbf16, #tpu.memory_space<vmem>>, vector<32x96xbf16>
    %cst_11 = arith.constant dense<0.000000e+00> : vector<128x96xf32>
    %25 = tpu.matmul %23, %24, %cst_11 {dimension_numbers = #tpu.dot_dimension_numbers<[1], [0], [0], [1], [0, 0, 1, 1], [], []>} : vector<128x32xbf16>, vector<32x96xbf16>, vector<128x96xf32> -> vector<128x96xf32>
    %c0_12 = arith.constant 0 : index
    %c0_13 = arith.constant 0 : index
    %26 = vector.load %arg6[%c0_12, %c0_13] : memref<1x96xf32, #tpu.memory_space<vmem>>, vector<1x96xf32>
    %27 = vector.broadcast %26 : vector<1x96xf32> to vector<128x96xf32>
    %28 = arith.addf %25, %27 : vector<128x96xf32>
    %29 = arith.truncf %28 : vector<128x96xf32> to vector<128x96xbf16>
    %c0_14 = arith.constant 0 : index
    %c0_15 = arith.constant 0 : index
    %30 = vector.load %arg7[%c0_14, %c0_15] : memref<128x96xbf16, #tpu.memory_space<vmem>>, vector<128x96xbf16>
    tpu.vector_store %arg7[%c0_14, %c0_15], %29 {strides = array<i32>} : memref<128x96xbf16, #tpu.memory_space<vmem>>, vector<128x96xbf16>,
    return
  }
  func.func @transform_0(%arg0: i32, %arg1: i32) -> (i32, i32) {
    %c0_i32 = arith.constant 0 : i32
    %c0_i32_0 = arith.constant 0 : i32
    return %arg0, %c0_i32 : i32, i32
  }
  func.func @transform_1(%arg0: i32, %arg1: i32) -> (i32, i32) {
    %c0_i32 = arith.constant 0 : i32
    %c0_i32_0 = arith.constant 0 : i32
    %c0_i32_1 = arith.constant 0 : i32
    return %c0_i32, %c0_i32_0 : i32, i32
  }
  func.func @transform_2(%arg0: i32, %arg1: i32) -> (i32, i32) {
    %c0_i32 = arith.constant 0 : i32
    %c0_i32_0 = arith.constant 0 : i32
    %c0_i32_1 = arith.constant 0 : i32
    return %c0_i32, %c0_i32_0 : i32, i32
  }
  func.func @transform_3(%arg0: i32, %arg1: i32) -> (i32, i32) {
    %c0_i32 = arith.constant 0 : i32
    %c0_i32_0 = arith.constant 0 : i32
    return %c0_i32, %arg1 : i32, i32
  }
  func.func @transform_4(%arg0: i32, %arg1: i32) -> (i32, i32) {
    %c0_i32 = arith.constant 0 : i32
    %c0_i32_0 = arith.constant 0 : i32
    return %c0_i32, %arg1 : i32, i32
  }
  func.func @transform_5(%arg0: i32, %arg1: i32) -> (i32, i32) {
    %c0_i32 = arith.constant 0 : i32
    return %arg0, %arg1 : i32, i32
  }
}

module attributes {stable_mosaic.version = 11 : i64} {
  func.func @_window_attn_kernel(%arg0: i32, %arg1: memref<1x4x16x96xbf16, #tpu.memory_space<vmem>>, %arg2: memref<4x16x16xf32, #tpu.memory_space<vmem>>, %arg3: memref<1x4x16x32xbf16, #tpu.memory_space<vmem>>) attributes {dimension_semantics = [#tpu.dimension_semantics<parallel>], iteration_bounds = array<i64: 2>, scalar_prefetch = 0 : i64, scratch_operands = 0 : i64, tpu.core_type = #tpu.core_type<tc>, window_params = [{transform_indices = @transform_0, window_bounds = array<i64: 1, 4, 16, 96>}, {pipeline_mode = #tpu.pipeline_mode<synchronous>, transform_indices = @transform_1, window_bounds = array<i64: 4, 16, 16>}, {transform_indices = @transform_2, window_bounds = array<i64: 1, 4, 16, 32>}]} {
    %c0 = arith.constant 0 : index
    %c0_0 = arith.constant 0 : index
    %c0_1 = arith.constant 0 : index
    %c0_2 = arith.constant 0 : index
    %0 = vector.load %arg1[%c0, %c0_0, %c0_1, %c0_2] : memref<1x4x16x96xbf16, #tpu.memory_space<vmem>>, vector<1x4x16x96xbf16>
    %1 = vector.shape_cast %0 : vector<1x4x16x96xbf16> to vector<4x16x96xbf16>
    %c0_3 = arith.constant 0 : index
    %c0_4 = arith.constant 0 : index
    %c0_5 = arith.constant 0 : index
    %2 = vector.load %arg2[%c0_3, %c0_4, %c0_5] : memref<4x16x16xf32, #tpu.memory_space<vmem>>, vector<4x16x16xf32>
    %3 = vector.extract_strided_slice %1 {offsets = [0, 0, 0], sizes = [4, 16, 8], strides = [1, 1, 1]} : vector<4x16x96xbf16> to vector<4x16x8xbf16>
    %4 = vector.extract_strided_slice %1 {offsets = [0, 0, 32], sizes = [4, 16, 8], strides = [1, 1, 1]} : vector<4x16x96xbf16> to vector<4x16x8xbf16>
    %5 = vector.extract_strided_slice %1 {offsets = [0, 0, 64], sizes = [4, 16, 8], strides = [1, 1, 1]} : vector<4x16x96xbf16> to vector<4x16x8xbf16>
    "tpu.trace_start"() <{level = 10 : i32, message = "wme,wne->wmn"}> : () -> ()
    %cst = arith.constant dense<0.000000e+00> : vector<4x16x16xf32>
    %6 = tpu.matmul %3, %4, %cst {dimension_numbers = #tpu.dot_dimension_numbers<[2], [2], [1], [1], [0, 0, 0, 1, 1, 1], [0], [0]>} : vector<4x16x8xbf16>, vector<4x16x8xbf16>, vector<4x16x16xf32> -> vector<4x16x16xf32>
    "tpu.trace_stop"() : () -> ()
    %7 = arith.addf %6, %2 : vector<4x16x16xf32>
    %cst_6 = arith.constant dense<0xFF800000> : vector<4x16xf32>
    %8 = vector.multi_reduction <maximumf>, %7, %cst_6 [2] : vector<4x16x16xf32> to vector<4x16xf32>
    %9 = vector.shape_cast %8 : vector<4x16xf32> to vector<4x16x1xf32>
    %10 = vector.broadcast %9 : vector<4x16x1xf32> to vector<4x16x16xf32>
    %11 = arith.subf %7, %10 : vector<4x16x16xf32>
    %12 = math.exp %11 : vector<4x16x16xf32>
    %cst_7 = arith.constant dense<0.000000e+00> : vector<4x16xf32>
    %13 = vector.multi_reduction <add>, %12, %cst_7 [2] : vector<4x16x16xf32> to vector<4x16xf32>
    %14 = vector.shape_cast %13 : vector<4x16xf32> to vector<4x16x1xf32>
    %15 = tpu.reciprocal %14 {approx = true} : vector<4x16x1xf32> -> vector<4x16x1xf32>
    %16 = vector.broadcast %15 : vector<4x16x1xf32> to vector<4x16x16xf32>
    %17 = arith.mulf %12, %16 : vector<4x16x16xf32>
    %18 = arith.truncf %17 : vector<4x16x16xf32> to vector<4x16x16xbf16>
    "tpu.trace_start"() <{level = 10 : i32, message = "wmn,wne->wme"}> : () -> ()
    %cst_8 = arith.constant dense<0.000000e+00> : vector<4x16x8xf32>
    %19 = tpu.matmul %18, %5, %cst_8 {dimension_numbers = #tpu.dot_dimension_numbers<[2], [1], [1], [2], [0, 0, 0, 1, 1, 2], [0], [0]>} : vector<4x16x16xbf16>, vector<4x16x8xbf16>, vector<4x16x8xf32> -> vector<4x16x8xf32>
    "tpu.trace_stop"() : () -> ()
    %20 = vector.extract_strided_slice %1 {offsets = [0, 0, 8], sizes = [4, 16, 8], strides = [1, 1, 1]} : vector<4x16x96xbf16> to vector<4x16x8xbf16>
    %21 = vector.extract_strided_slice %1 {offsets = [0, 0, 40], sizes = [4, 16, 8], strides = [1, 1, 1]} : vector<4x16x96xbf16> to vector<4x16x8xbf16>
    %22 = vector.extract_strided_slice %1 {offsets = [0, 0, 72], sizes = [4, 16, 8], strides = [1, 1, 1]} : vector<4x16x96xbf16> to vector<4x16x8xbf16>
    "tpu.trace_start"() <{level = 10 : i32, message = "wme,wne->wmn"}> : () -> ()
    %cst_9 = arith.constant dense<0.000000e+00> : vector<4x16x16xf32>
    %23 = tpu.matmul %20, %21, %cst_9 {dimension_numbers = #tpu.dot_dimension_numbers<[2], [2], [1], [1], [0, 0, 0, 1, 1, 1], [0], [0]>} : vector<4x16x8xbf16>, vector<4x16x8xbf16>, vector<4x16x16xf32> -> vector<4x16x16xf32>
    "tpu.trace_stop"() : () -> ()
    %24 = arith.addf %23, %2 : vector<4x16x16xf32>
    %cst_10 = arith.constant dense<0xFF800000> : vector<4x16xf32>
    %25 = vector.multi_reduction <maximumf>, %24, %cst_10 [2] : vector<4x16x16xf32> to vector<4x16xf32>
    %26 = vector.shape_cast %25 : vector<4x16xf32> to vector<4x16x1xf32>
    %27 = vector.broadcast %26 : vector<4x16x1xf32> to vector<4x16x16xf32>
    %28 = arith.subf %24, %27 : vector<4x16x16xf32>
    %29 = math.exp %28 : vector<4x16x16xf32>
    %cst_11 = arith.constant dense<0.000000e+00> : vector<4x16xf32>
    %30 = vector.multi_reduction <add>, %29, %cst_11 [2] : vector<4x16x16xf32> to vector<4x16xf32>
    %31 = vector.shape_cast %30 : vector<4x16xf32> to vector<4x16x1xf32>
    %32 = tpu.reciprocal %31 {approx = true} : vector<4x16x1xf32> -> vector<4x16x1xf32>
    %33 = vector.broadcast %32 : vector<4x16x1xf32> to vector<4x16x16xf32>
    %34 = arith.mulf %29, %33 : vector<4x16x16xf32>
    %35 = arith.truncf %34 : vector<4x16x16xf32> to vector<4x16x16xbf16>
    "tpu.trace_start"() <{level = 10 : i32, message = "wmn,wne->wme"}> : () -> ()
    %cst_12 = arith.constant dense<0.000000e+00> : vector<4x16x8xf32>
    %36 = tpu.matmul %35, %22, %cst_12 {dimension_numbers = #tpu.dot_dimension_numbers<[2], [1], [1], [2], [0, 0, 0, 1, 1, 2], [0], [0]>} : vector<4x16x16xbf16>, vector<4x16x8xbf16>, vector<4x16x8xf32> -> vector<4x16x8xf32>
    "tpu.trace_stop"() : () -> ()
    %37 = vector.extract_strided_slice %1 {offsets = [0, 0, 16], sizes = [4, 16, 8], strides = [1, 1, 1]} : vector<4x16x96xbf16> to vector<4x16x8xbf16>
    %38 = vector.extract_strided_slice %1 {offsets = [0, 0, 48], sizes = [4, 16, 8], strides = [1, 1, 1]} : vector<4x16x96xbf16> to vector<4x16x8xbf16>
    %39 = vector.extract_strided_slice %1 {offsets = [0, 0, 80], sizes = [4, 16, 8], strides = [1, 1, 1]} : vector<4x16x96xbf16> to vector<4x16x8xbf16>
    "tpu.trace_start"() <{level = 10 : i32, message = "wme,wne->wmn"}> : () -> ()
    %cst_13 = arith.constant dense<0.000000e+00> : vector<4x16x16xf32>
    %40 = tpu.matmul %37, %38, %cst_13 {dimension_numbers = #tpu.dot_dimension_numbers<[2], [2], [1], [1], [0, 0, 0, 1, 1, 1], [0], [0]>} : vector<4x16x8xbf16>, vector<4x16x8xbf16>, vector<4x16x16xf32> -> vector<4x16x16xf32>
    "tpu.trace_stop"() : () -> ()
    %41 = arith.addf %40, %2 : vector<4x16x16xf32>
    %cst_14 = arith.constant dense<0xFF800000> : vector<4x16xf32>
    %42 = vector.multi_reduction <maximumf>, %41, %cst_14 [2] : vector<4x16x16xf32> to vector<4x16xf32>
    %43 = vector.shape_cast %42 : vector<4x16xf32> to vector<4x16x1xf32>
    %44 = vector.broadcast %43 : vector<4x16x1xf32> to vector<4x16x16xf32>
    %45 = arith.subf %41, %44 : vector<4x16x16xf32>
    %46 = math.exp %45 : vector<4x16x16xf32>
    %cst_15 = arith.constant dense<0.000000e+00> : vector<4x16xf32>
    %47 = vector.multi_reduction <add>, %46, %cst_15 [2] : vector<4x16x16xf32> to vector<4x16xf32>
    %48 = vector.shape_cast %47 : vector<4x16xf32> to vector<4x16x1xf32>
    %49 = tpu.reciprocal %48 {approx = true} : vector<4x16x1xf32> -> vector<4x16x1xf32>
    %50 = vector.broadcast %49 : vector<4x16x1xf32> to vector<4x16x16xf32>
    %51 = arith.mulf %46, %50 : vector<4x16x16xf32>
    %52 = arith.truncf %51 : vector<4x16x16xf32> to vector<4x16x16xbf16>
    "tpu.trace_start"() <{level = 10 : i32, message = "wmn,wne->wme"}> : () -> ()
    %cst_16 = arith.constant dense<0.000000e+00> : vector<4x16x8xf32>
    %53 = tpu.matmul %52, %39, %cst_16 {dimension_numbers = #tpu.dot_dimension_numbers<[2], [1], [1], [2], [0, 0, 0, 1, 1, 2], [0], [0]>} : vector<4x16x16xbf16>, vector<4x16x8xbf16>, vector<4x16x8xf32> -> vector<4x16x8xf32>
    "tpu.trace_stop"() : () -> ()
    %54 = vector.extract_strided_slice %1 {offsets = [0, 0, 24], sizes = [4, 16, 8], strides = [1, 1, 1]} : vector<4x16x96xbf16> to vector<4x16x8xbf16>
    %55 = vector.extract_strided_slice %1 {offsets = [0, 0, 56], sizes = [4, 16, 8], strides = [1, 1, 1]} : vector<4x16x96xbf16> to vector<4x16x8xbf16>
    %56 = vector.extract_strided_slice %1 {offsets = [0, 0, 88], sizes = [4, 16, 8], strides = [1, 1, 1]} : vector<4x16x96xbf16> to vector<4x16x8xbf16>
    "tpu.trace_start"() <{level = 10 : i32, message = "wme,wne->wmn"}> : () -> ()
    %cst_17 = arith.constant dense<0.000000e+00> : vector<4x16x16xf32>
    %57 = tpu.matmul %54, %55, %cst_17 {dimension_numbers = #tpu.dot_dimension_numbers<[2], [2], [1], [1], [0, 0, 0, 1, 1, 1], [0], [0]>} : vector<4x16x8xbf16>, vector<4x16x8xbf16>, vector<4x16x16xf32> -> vector<4x16x16xf32>
    "tpu.trace_stop"() : () -> ()
    %58 = arith.addf %57, %2 : vector<4x16x16xf32>
    %cst_18 = arith.constant dense<0xFF800000> : vector<4x16xf32>
    %59 = vector.multi_reduction <maximumf>, %58, %cst_18 [2] : vector<4x16x16xf32> to vector<4x16xf32>
    %60 = vector.shape_cast %59 : vector<4x16xf32> to vector<4x16x1xf32>
    %61 = vector.broadcast %60 : vector<4x16x1xf32> to vector<4x16x16xf32>
    %62 = arith.subf %58, %61 : vector<4x16x16xf32>
    %63 = math.exp %62 : vector<4x16x16xf32>
    %cst_19 = arith.constant dense<0.000000e+00> : vector<4x16xf32>
    %64 = vector.multi_reduction <add>, %63, %cst_19 [2] : vector<4x16x16xf32> to vector<4x16xf32>
    %65 = vector.shape_cast %64 : vector<4x16xf32> to vector<4x16x1xf32>
    %66 = tpu.reciprocal %65 {approx = true} : vector<4x16x1xf32> -> vector<4x16x1xf32>
    %67 = vector.broadcast %66 : vector<4x16x1xf32> to vector<4x16x16xf32>
    %68 = arith.mulf %63, %67 : vector<4x16x16xf32>
    %69 = arith.truncf %68 : vector<4x16x16xf32> to vector<4x16x16xbf16>
    "tpu.trace_start"() <{level = 10 : i32, message = "wmn,wne->wme"}> : () -> ()
    %cst_20 = arith.constant dense<0.000000e+00> : vector<4x16x8xf32>
    %70 = tpu.matmul %69, %56, %cst_20 {dimension_numbers = #tpu.dot_dimension_numbers<[2], [1], [1], [2], [0, 0, 0, 1, 1, 2], [0], [0]>} : vector<4x16x16xbf16>, vector<4x16x8xbf16>, vector<4x16x8xf32> -> vector<4x16x8xf32>
    "tpu.trace_stop"() : () -> ()
    %71 = tpu.concatenate %19, %36, %53, %70 in 2 : vector<4x16x8xf32>, vector<4x16x8xf32>, vector<4x16x8xf32>, vector<4x16x8xf32> -> vector<4x16x32xf32>
    %72 = arith.truncf %71 : vector<4x16x32xf32> to vector<4x16x32xbf16>
    %c0_21 = arith.constant 0 : index
    %c0_22 = arith.constant 0 : index
    %c0_23 = arith.constant 0 : index
    %c0_24 = arith.constant 0 : index
    %73 = vector.load %arg3[%c0_21, %c0_22, %c0_23, %c0_24] : memref<1x4x16x32xbf16, #tpu.memory_space<vmem>>, vector<1x4x16x32xbf16>
    %74 = vector.shape_cast %73 : vector<1x4x16x32xbf16> to vector<4x16x32xbf16>
    %75 = vector.shape_cast %72 : vector<4x16x32xbf16> to vector<1x4x16x32xbf16>
    tpu.vector_store %arg3[%c0_21, %c0_22, %c0_23, %c0_24], %75 {strides = array<i32>} : memref<1x4x16x32xbf16, #tpu.memory_space<vmem>>, vector<1x4x16x32xbf16>,
    return
  }
  func.func @transform_0(%arg0: i32) -> (i32, i32, i32, i32) {
    %c0_i32 = arith.constant 0 : i32
    %c0_i32_0 = arith.constant 0 : i32
    %c0_i32_1 = arith.constant 0 : i32
    %c0_i32_2 = arith.constant 0 : i32
    return %arg0, %c0_i32, %c0_i32_0, %c0_i32_1 : i32, i32, i32, i32
  }
  func.func @transform_1(%arg0: i32) -> (i32, i32, i32) {
    %c0_i32 = arith.constant 0 : i32
    %c0_i32_0 = arith.constant 0 : i32
    %c0_i32_1 = arith.constant 0 : i32
    %c0_i32_2 = arith.constant 0 : i32
    return %c0_i32, %c0_i32_0, %c0_i32_1 : i32, i32, i32
  }
  func.func @transform_2(%arg0: i32) -> (i32, i32, i32, i32) {
    %c0_i32 = arith.constant 0 : i32
    %c0_i32_0 = arith.constant 0 : i32
    %c0_i32_1 = arith.constant 0 : i32
    %c0_i32_2 = arith.constant 0 : i32
    return %arg0, %c0_i32, %c0_i32_0, %c0_i32_1 : i32, i32, i32, i32
  }
}

module attributes {stable_mosaic.version = 11 : i64} {
  func.func @_linear_residual_kernel_1k(%arg0: i32, %arg1: i32, %arg2: memref<128x32xbf16, #tpu.memory_space<vmem>>, %arg3: memref<32x32xbf16, #tpu.memory_space<vmem>>, %arg4: memref<1x32xf32, #tpu.memory_space<vmem>>, %arg5: memref<128x32xf32, #tpu.memory_space<vmem>>, %arg6: memref<128x32xf32, #tpu.memory_space<vmem>>) attributes {dimension_semantics = [#tpu.dimension_semantics<parallel>, #tpu.dimension_semantics<parallel>], iteration_bounds = array<i64: 1, 1>, scalar_prefetch = 0 : i64, scratch_operands = 0 : i64, tpu.core_type = #tpu.core_type<tc>, window_params = [{transform_indices = @transform_0, window_bounds = array<i64: 128, 32>}, {transform_indices = @transform_1, window_bounds = array<i64: 32, 32>}, {transform_indices = @transform_2, window_bounds = array<i64: 1, 32>}, {transform_indices = @transform_3, window_bounds = array<i64: 128, 32>}, {transform_indices = @transform_4, window_bounds = array<i64: 128, 32>}]} {
    %c0 = arith.constant 0 : index
    %c0_0 = arith.constant 0 : index
    %0 = vector.load %arg2[%c0, %c0_0] : memref<128x32xbf16, #tpu.memory_space<vmem>>, vector<128x32xbf16>
    %c0_1 = arith.constant 0 : index
    %c0_2 = arith.constant 0 : index
    %1 = vector.load %arg3[%c0_1, %c0_2] : memref<32x32xbf16, #tpu.memory_space<vmem>>, vector<32x32xbf16>
    %cst = arith.constant dense<0.000000e+00> : vector<128x32xf32>
    %2 = tpu.matmul %0, %1, %cst {dimension_numbers = #tpu.dot_dimension_numbers<[1], [0], [0], [1], [0, 0, 1, 1], [], []>} : vector<128x32xbf16>, vector<32x32xbf16>, vector<128x32xf32> -> vector<128x32xf32>
    %c0_3 = arith.constant 0 : index
    %c0_4 = arith.constant 0 : index
    %3 = vector.load %arg4[%c0_3, %c0_4] : memref<1x32xf32, #tpu.memory_space<vmem>>, vector<1x32xf32>
    %4 = vector.broadcast %3 : vector<1x32xf32> to vector<128x32xf32>
    %5 = arith.addf %2, %4 : vector<128x32xf32>
    %c0_5 = arith.constant 0 : index
    %c0_6 = arith.constant 0 : index
    %6 = vector.load %arg5[%c0_5, %c0_6] : memref<128x32xf32, #tpu.memory_space<vmem>>, vector<128x32xf32>
    %7 = arith.addf %5, %6 : vector<128x32xf32>
    %c0_7 = arith.constant 0 : index
    %c0_8 = arith.constant 0 : index
    %8 = vector.load %arg6[%c0_7, %c0_8] : memref<128x32xf32, #tpu.memory_space<vmem>>, vector<128x32xf32>
    tpu.vector_store %arg6[%c0_7, %c0_8], %7 {strides = array<i32>} : memref<128x32xf32, #tpu.memory_space<vmem>>, vector<128x32xf32>,
    return
  }
  func.func @transform_0(%arg0: i32, %arg1: i32) -> (i32, i32) {
    %c0_i32 = arith.constant 0 : i32
    %c0_i32_0 = arith.constant 0 : i32
    return %arg0, %c0_i32 : i32, i32
  }
  func.func @transform_1(%arg0: i32, %arg1: i32) -> (i32, i32) {
    %c0_i32 = arith.constant 0 : i32
    %c0_i32_0 = arith.constant 0 : i32
    return %c0_i32, %arg1 : i32, i32
  }
  func.func @transform_2(%arg0: i32, %arg1: i32) -> (i32, i32) {
    %c0_i32 = arith.constant 0 : i32
    %c0_i32_0 = arith.constant 0 : i32
    return %c0_i32, %arg1 : i32, i32
  }
  func.func @transform_3(%arg0: i32, %arg1: i32) -> (i32, i32) {
    %c0_i32 = arith.constant 0 : i32
    return %arg0, %arg1 : i32, i32
  }
  func.func @transform_4(%arg0: i32, %arg1: i32) -> (i32, i32) {
    %c0_i32 = arith.constant 0 : i32
    return %arg0, %arg1 : i32, i32
  }
}

module attributes {stable_mosaic.version = 11 : i64} {
  func.func @_ln_linear_kernel(%arg0: i32, %arg1: i32, %arg2: memref<128x32xf32, #tpu.memory_space<vmem>>, %arg3: memref<1x32xf32, #tpu.memory_space<vmem>>, %arg4: memref<1x32xf32, #tpu.memory_space<vmem>>, %arg5: memref<32x128xbf16, #tpu.memory_space<vmem>>, %arg6: memref<1x128xf32, #tpu.memory_space<vmem>>, %arg7: memref<128x128xbf16, #tpu.memory_space<vmem>>) attributes {dimension_semantics = [#tpu.dimension_semantics<parallel>, #tpu.dimension_semantics<parallel>], iteration_bounds = array<i64: 1, 1>, scalar_prefetch = 0 : i64, scratch_operands = 0 : i64, tpu.core_type = #tpu.core_type<tc>, window_params = [{transform_indices = @transform_0, window_bounds = array<i64: 128, 32>}, {pipeline_mode = #tpu.pipeline_mode<synchronous>, transform_indices = @transform_1, window_bounds = array<i64: 1, 32>}, {pipeline_mode = #tpu.pipeline_mode<synchronous>, transform_indices = @transform_2, window_bounds = array<i64: 1, 32>}, {transform_indices = @transform_3, window_bounds = array<i64: 32, 128>}, {transform_indices = @transform_4, window_bounds = array<i64: 1, 128>}, {transform_indices = @transform_5, window_bounds = array<i64: 128, 128>}]} {
    %c0 = arith.constant 0 : index
    %c0_0 = arith.constant 0 : index
    %0 = vector.load %arg2[%c0, %c0_0] : memref<128x32xf32, #tpu.memory_space<vmem>>, vector<128x32xf32>
    %cst = arith.constant dense<0.000000e+00> : vector<128xf32>
    %1 = vector.multi_reduction <add>, %0, %cst [1] : vector<128x32xf32> to vector<128xf32>
    %2 = vector.shape_cast %1 : vector<128xf32> to vector<128x1xf32>
    %cst_1 = arith.constant 3.200000e+01 : f32
    %3 = vector.broadcast %cst_1 : f32 to vector<128x1xf32>
    %4 = arith.divf %2, %3 : vector<128x1xf32>
    %5 = vector.broadcast %4 : vector<128x1xf32> to vector<128x32xf32>
    %6 = arith.subf %0, %5 : vector<128x32xf32>
    %7 = arith.mulf %6, %6 : vector<128x32xf32>
    %cst_2 = arith.constant dense<0.000000e+00> : vector<128xf32>
    %8 = vector.multi_reduction <add>, %7, %cst_2 [1] : vector<128x32xf32> to vector<128xf32>
    %9 = vector.shape_cast %8 : vector<128xf32> to vector<128x1xf32>
    %cst_3 = arith.constant 3.200000e+01 : f32
    %10 = vector.broadcast %cst_3 : f32 to vector<128x1xf32>
    %11 = arith.divf %9, %10 : vector<128x1xf32>
    %cst_4 = arith.constant 9.99999974E-6 : f32
    %12 = vector.broadcast %cst_4 : f32 to vector<128x1xf32>
    %13 = arith.addf %11, %12 : vector<128x1xf32>
    %14 = math.rsqrt %13 : vector<128x1xf32>
    %15 = vector.broadcast %14 : vector<128x1xf32> to vector<128x32xf32>
    %16 = arith.mulf %6, %15 : vector<128x32xf32>
    %c0_5 = arith.constant 0 : index
    %c0_6 = arith.constant 0 : index
    %17 = vector.load %arg3[%c0_5, %c0_6] : memref<1x32xf32, #tpu.memory_space<vmem>>, vector<1x32xf32>
    %18 = vector.broadcast %17 : vector<1x32xf32> to vector<128x32xf32>
    %19 = arith.mulf %16, %18 : vector<128x32xf32>
    %c0_7 = arith.constant 0 : index
    %c0_8 = arith.constant 0 : index
    %20 = vector.load %arg4[%c0_7, %c0_8] : memref<1x32xf32, #tpu.memory_space<vmem>>, vector<1x32xf32>
    %21 = vector.broadcast %20 : vector<1x32xf32> to vector<128x32xf32>
    %22 = arith.addf %19, %21 : vector<128x32xf32>
    %23 = arith.truncf %22 : vector<128x32xf32> to vector<128x32xbf16>
    %c0_9 = arith.constant 0 : index
    %c0_10 = arith.constant 0 : index
    %24 = vector.load %arg5[%c0_9, %c0_10] : memref<32x128xbf16, #tpu.memory_space<vmem>>, vector<32x128xbf16>
    %cst_11 = arith.constant dense<0.000000e+00> : vector<128x128xf32>
    %25 = tpu.matmul %23, %24, %cst_11 {dimension_numbers = #tpu.dot_dimension_numbers<[1], [0], [0], [1], [0, 0, 1, 1], [], []>} : vector<128x32xbf16>, vector<32x128xbf16>, vector<128x128xf32> -> vector<128x128xf32>
    %c0_12 = arith.constant 0 : index
    %c0_13 = arith.constant 0 : index
    %26 = vector.load %arg6[%c0_12, %c0_13] : memref<1x128xf32, #tpu.memory_space<vmem>>, vector<1x128xf32>
    %27 = vector.broadcast %26 : vector<1x128xf32> to vector<128x128xf32>
    %28 = arith.addf %25, %27 : vector<128x128xf32>
    %cst_14 = arith.constant 5.000000e-01 : f32
    %29 = vector.broadcast %cst_14 : f32 to vector<128x128xf32>
    %30 = arith.mulf %29, %28 : vector<128x128xf32>
    %cst_15 = arith.constant 0.707106769 : f32
    %31 = vector.broadcast %cst_15 : f32 to vector<128x128xf32>
    %32 = arith.mulf %28, %31 : vector<128x128xf32>
    %33 = math.absf %32 : vector<128x128xf32>
    %cst_16 = arith.constant 0.327591091 : f32
    %34 = vector.broadcast %cst_16 : f32 to vector<128x128xf32>
    %35 = arith.mulf %34, %33 : vector<128x128xf32>
    %cst_17 = arith.constant 1.000000e+00 : f32
    %36 = vector.broadcast %cst_17 : f32 to vector<128x128xf32>
    %37 = arith.addf %36, %35 : vector<128x128xf32>
    %cst_18 = arith.constant 1.000000e+00 : f32
    %38 = vector.broadcast %cst_18 : f32 to vector<128x128xf32>
    %39 = arith.divf %38, %37 : vector<128x128xf32>
    %cst_19 = arith.constant 1.06140542 : f32
    %40 = vector.broadcast %cst_19 : f32 to vector<128x128xf32>
    %41 = arith.mulf %40, %39 : vector<128x128xf32>
    %cst_20 = arith.constant -1.45315206 : f32
    %42 = vector.broadcast %cst_20 : f32 to vector<128x128xf32>
    %43 = arith.addf %41, %42 : vector<128x128xf32>
    %44 = arith.mulf %43, %39 : vector<128x128xf32>
    %cst_21 = arith.constant 1.42141378 : f32
    %45 = vector.broadcast %cst_21 : f32 to vector<128x128xf32>
    %46 = arith.addf %44, %45 : vector<128x128xf32>
    %47 = arith.mulf %46, %39 : vector<128x128xf32>
    %cst_22 = arith.constant -0.284496725 : f32
    %48 = vector.broadcast %cst_22 : f32 to vector<128x128xf32>
    %49 = arith.addf %47, %48 : vector<128x128xf32>
    %50 = arith.mulf %49, %39 : vector<128x128xf32>
    %cst_23 = arith.constant 0.254829586 : f32
    %51 = vector.broadcast %cst_23 : f32 to vector<128x128xf32>
    %52 = arith.addf %50, %51 : vector<128x128xf32>
    %53 = arith.mulf %52, %39 : vector<128x128xf32>
    %cst_24 = arith.constant 0.000000e+00 : f32
    %54 = vector.broadcast %cst_24 : f32 to vector<128x128xf32>
    %55 = arith.subf %54, %33 : vector<128x128xf32>
    %56 = arith.mulf %55, %33 : vector<128x128xf32>
    %57 = math.exp %56 : vector<128x128xf32>
    %58 = arith.mulf %53, %57 : vector<128x128xf32>
    %cst_25 = arith.constant 1.000000e+00 : f32
    %59 = vector.broadcast %cst_25 : f32 to vector<128x128xf32>
    %60 = arith.subf %59, %58 : vector<128x128xf32>
    %cst_26 = arith.constant 0.000000e+00 : f32
    %61 = vector.broadcast %cst_26 : f32 to vector<128x128xf32>
    %62 = arith.cmpf oge, %32, %61 : vector<128x128xf32>
    %cst_27 = arith.constant 0.000000e+00 : f32
    %63 = vector.broadcast %cst_27 : f32 to vector<128x128xf32>
    %64 = arith.subf %63, %60 : vector<128x128xf32>
    %65 = arith.select %62, %60, %64 : vector<128x128xi1>, vector<128x128xf32>
    %cst_28 = arith.constant 1.000000e+00 : f32
    %66 = vector.broadcast %cst_28 : f32 to vector<128x128xf32>
    %67 = arith.addf %66, %65 : vector<128x128xf32>
    %68 = arith.mulf %30, %67 : vector<128x128xf32>
    %69 = arith.truncf %68 : vector<128x128xf32> to vector<128x128xbf16>
    %c0_29 = arith.constant 0 : index
    %c0_30 = arith.constant 0 : index
    %70 = vector.load %arg7[%c0_29, %c0_30] : memref<128x128xbf16, #tpu.memory_space<vmem>>, vector<128x128xbf16>
    tpu.vector_store %arg7[%c0_29, %c0_30], %69 {strides = array<i32>} : memref<128x128xbf16, #tpu.memory_space<vmem>>, vector<128x128xbf16>,
    return
  }
  func.func @transform_0(%arg0: i32, %arg1: i32) -> (i32, i32) {
    %c0_i32 = arith.constant 0 : i32
    %c0_i32_0 = arith.constant 0 : i32
    return %arg0, %c0_i32 : i32, i32
  }
  func.func @transform_1(%arg0: i32, %arg1: i32) -> (i32, i32) {
    %c0_i32 = arith.constant 0 : i32
    %c0_i32_0 = arith.constant 0 : i32
    %c0_i32_1 = arith.constant 0 : i32
    return %c0_i32, %c0_i32_0 : i32, i32
  }
  func.func @transform_2(%arg0: i32, %arg1: i32) -> (i32, i32) {
    %c0_i32 = arith.constant 0 : i32
    %c0_i32_0 = arith.constant 0 : i32
    %c0_i32_1 = arith.constant 0 : i32
    return %c0_i32, %c0_i32_0 : i32, i32
  }
  func.func @transform_3(%arg0: i32, %arg1: i32) -> (i32, i32) {
    %c0_i32 = arith.constant 0 : i32
    %c0_i32_0 = arith.constant 0 : i32
    return %c0_i32, %arg1 : i32, i32
  }
  func.func @transform_4(%arg0: i32, %arg1: i32) -> (i32, i32) {
    %c0_i32 = arith.constant 0 : i32
    %c0_i32_0 = arith.constant 0 : i32
    return %c0_i32, %arg1 : i32, i32
  }
  func.func @transform_5(%arg0: i32, %arg1: i32) -> (i32, i32) {
    %c0_i32 = arith.constant 0 : i32
    return %arg0, %arg1 : i32, i32
  }
}

module attributes {stable_mosaic.version = 11 : i64} {
  func.func @_linear_residual_kernel_1k(%arg0: i32, %arg1: i32, %arg2: memref<128x128xbf16, #tpu.memory_space<vmem>>, %arg3: memref<128x32xbf16, #tpu.memory_space<vmem>>, %arg4: memref<1x32xf32, #tpu.memory_space<vmem>>, %arg5: memref<128x32xf32, #tpu.memory_space<vmem>>, %arg6: memref<128x32xf32, #tpu.memory_space<vmem>>) attributes {dimension_semantics = [#tpu.dimension_semantics<parallel>, #tpu.dimension_semantics<parallel>], iteration_bounds = array<i64: 1, 1>, scalar_prefetch = 0 : i64, scratch_operands = 0 : i64, tpu.core_type = #tpu.core_type<tc>, window_params = [{transform_indices = @transform_0, window_bounds = array<i64: 128, 128>}, {transform_indices = @transform_1, window_bounds = array<i64: 128, 32>}, {transform_indices = @transform_2, window_bounds = array<i64: 1, 32>}, {transform_indices = @transform_3, window_bounds = array<i64: 128, 32>}, {transform_indices = @transform_4, window_bounds = array<i64: 128, 32>}]} {
    %c0 = arith.constant 0 : index
    %c0_0 = arith.constant 0 : index
    %0 = vector.load %arg2[%c0, %c0_0] : memref<128x128xbf16, #tpu.memory_space<vmem>>, vector<128x128xbf16>
    %c0_1 = arith.constant 0 : index
    %c0_2 = arith.constant 0 : index
    %1 = vector.load %arg3[%c0_1, %c0_2] : memref<128x32xbf16, #tpu.memory_space<vmem>>, vector<128x32xbf16>
    %cst = arith.constant dense<0.000000e+00> : vector<128x32xf32>
    %2 = tpu.matmul %0, %1, %cst {dimension_numbers = #tpu.dot_dimension_numbers<[1], [0], [0], [1], [0, 0, 1, 1], [], []>} : vector<128x128xbf16>, vector<128x32xbf16>, vector<128x32xf32> -> vector<128x32xf32>
    %c0_3 = arith.constant 0 : index
    %c0_4 = arith.constant 0 : index
    %3 = vector.load %arg4[%c0_3, %c0_4] : memref<1x32xf32, #tpu.memory_space<vmem>>, vector<1x32xf32>
    %4 = vector.broadcast %3 : vector<1x32xf32> to vector<128x32xf32>
    %5 = arith.addf %2, %4 : vector<128x32xf32>
    %c0_5 = arith.constant 0 : index
    %c0_6 = arith.constant 0 : index
    %6 = vector.load %arg5[%c0_5, %c0_6] : memref<128x32xf32, #tpu.memory_space<vmem>>, vector<128x32xf32>
    %7 = arith.addf %5, %6 : vector<128x32xf32>
    %c0_7 = arith.constant 0 : index
    %c0_8 = arith.constant 0 : index
    %8 = vector.load %arg6[%c0_7, %c0_8] : memref<128x32xf32, #tpu.memory_space<vmem>>, vector<128x32xf32>
    tpu.vector_store %arg6[%c0_7, %c0_8], %7 {strides = array<i32>} : memref<128x32xf32, #tpu.memory_space<vmem>>, vector<128x32xf32>,
    return
  }
  func.func @transform_0(%arg0: i32, %arg1: i32) -> (i32, i32) {
    %c0_i32 = arith.constant 0 : i32
    %c0_i32_0 = arith.constant 0 : i32
    return %arg0, %c0_i32 : i32, i32
  }
  func.func @transform_1(%arg0: i32, %arg1: i32) -> (i32, i32) {
    %c0_i32 = arith.constant 0 : i32
    %c0_i32_0 = arith.constant 0 : i32
    return %c0_i32, %arg1 : i32, i32
  }
  func.func @transform_2(%arg0: i32, %arg1: i32) -> (i32, i32) {
    %c0_i32 = arith.constant 0 : i32
    %c0_i32_0 = arith.constant 0 : i32
    return %c0_i32, %arg1 : i32, i32
  }
  func.func @transform_3(%arg0: i32, %arg1: i32) -> (i32, i32) {
    %c0_i32 = arith.constant 0 : i32
    return %arg0, %arg1 : i32, i32
  }
  func.func @transform_4(%arg0: i32, %arg1: i32) -> (i32, i32) {
    %c0_i32 = arith.constant 0 : i32
    return %arg0, %arg1 : i32, i32
  }
}

</mosaic_0001>

<llo_original>
// kernel: mul.3
$region0: #{mul.3}
  #allocation0 [shape = 's32[1]{0}', space=sflag, size = 0x4, scoped, tag = 'scoped memory for mul.3']
  %s0 = inlined_call_operand.vmem [shape: f32[96], index: 0, kind: input, shape index: {}]
  %s1 = inlined_call_operand.vmem [shape: f32[96], index: 1, kind: input, shape index: {}]
  %s2 = inlined_call_operand.vmem [shape: f32[96], index: 2, kind: output, shape index: {}]
  %v3 = vld [vmem:[%s0] sm:$0x1]
  %v4 = vld [vmem:[%s1] sm:$0x1]
  %5 = xla_tuple %v3, %v4
  %6 = xla_tuple %5
  %v7 = vmul.f32 %v3, %v4
  %8 = xla_tuple %v7
  %9 = vst [vmem:[%s2] sm:$0x1] %v7

// kernel: swin_encoder_block.5
$region0: #{swin_encoder_block.5}
  #allocation0 [shape = 'u32[]', space=smem, size = 0x4, offset = 0x4, fixed_abs, tag = 'smem constant byte address 0x4 - core index']
  #allocation1 [shape = 'u32[72,128]{1,0:T(1,128)}', space=vmem, size = 0x9000, scoped, tag = 'internal scratch']
  %s0 = inlined_call_operand.vmem [shape: f32[128,32], index: 0, kind: input, shape index: {}]
  %s1 = inlined_call_operand.vmem [shape: f32[1,32], index: 1, kind: input, shape index: {}]
  %s2 = inlined_call_operand.vmem [shape: f32[1,32], index: 2, kind: input, shape index: {}]
  %s3 = inlined_call_operand.vmem [shape: bf16[32,96], index: 3, kind: input, shape index: {}]
  %s4 = inlined_call_operand.vmem [shape: f32[1,96], index: 4, kind: input, shape index: {}]
  %s5 = inlined_call_operand.vmem [shape: bf16[128,96], index: 5, kind: output, shape index: {}]
  %s6 = sld [smem:[#allocation0]]
  $region30: #{swin_encoder_block.5} parent=0
    _
  %s8 = ssub.s32 1, %s6
  %s9 = scalar_select 0, %s8, %s6
  // Predicated region
  $region2: #{swin_encoder_block.5} parent=0 // pred_check
    _
  $region3: #{swin_encoder_block.5} parent=0 // pred_check_branch
    %11 = sbr.rel (0) target = $region5
  $region4: #{swin_encoder_block.5} parent=0 // pred_region
    _
  $region5: #{swin_encoder_block.5} parent=0 // pred_fallthru
    _
  // Predicated region
  $region6: #{swin_encoder_block.5} parent=0 // pred_check
    _
  $region7: #{swin_encoder_block.5} parent=0 // pred_check_branch
    %13 = sbr.rel (0) target = $region9
  $region8: #{swin_encoder_block.5} parent=0 // pred_region
    _
  $region9: #{swin_encoder_block.5} parent=0 // pred_fallthru
    _
  // Predicated region
  $region10: #{swin_encoder_block.5} parent=0 // pred_check
    _
  $region11: #{swin_encoder_block.5} parent=0 // pred_check_branch
    %15 = sbr.rel (0) target = $region13
  $region12: #{swin_encoder_block.5} parent=0 // pred_region
    _
  $region13: #{swin_encoder_block.5} parent=0 // pred_fallthru
    _
  // Predicated region
  $region14: #{swin_encoder_block.5} parent=0 // pred_check
    _
  $region15: #{swin_encoder_block.5} parent=0 // pred_check_branch
    %17 = sbr.rel (0) target = $region17
  $region16: #{swin_encoder_block.5} parent=0 // pred_region
    _
  $region17: #{swin_encoder_block.5} parent=0 // pred_fallthru
    _
  // Predicated region
  $region18: #{swin_encoder_block.5} parent=0 // pred_check
    _
  $region19: #{swin_encoder_block.5} parent=0 // pred_check_branch
    %19 = sbr.rel (0) target = $region21
  $region20: #{swin_encoder_block.5} parent=0 // pred_region
    _
  $region21: #{swin_encoder_block.5} parent=0 // pred_fallthru
    _
  %v21 = vld [vmem:[%s0] sm:$0xff]
  %v22 = vld [vmem:[%s0 + $0x8] sm:$0xff]
  %v23 = vld [vmem:[%s0 + $0x10] sm:$0xff]
  %v24 = vld [vmem:[%s0 + $0x18] sm:$0xff]
  %v25 = vld [vmem:[%s0 + $0x20] sm:$0xff]
  %v26 = vld [vmem:[%s0 + $0x28] sm:$0xff]
  %v27 = vld [vmem:[%s0 + $0x30] sm:$0xff]
  %v28 = vld [vmem:[%s0 + $0x38] sm:$0xff]
  %v29 = vld [vmem:[%s0 + $0x40] sm:$0xff]
  %v30 = vld [vmem:[%s0 + $0x48] sm:$0xff]
  %v31 = vld [vmem:[%s0 + $0x50] sm:$0xff]
  %v32 = vld [vmem:[%s0 + $0x58] sm:$0xff]
  %v33 = vld [vmem:[%s0 + $0x60] sm:$0xff]
  %v34 = vld [vmem:[%s0 + $0x68] sm:$0xff]
  %v35 = vld [vmem:[%s0 + $0x70] sm:$0xff]
  %v36 = vld [vmem:[%s0 + $0x78] sm:$0xff]
  %vm37 = vcmask 261120
  %v38 = vsel %vm37, %v21, 0.0
  %39 = vadd.xlane.f32.xlu0 %v38
  %v40 = vpop.xlane.xlu0 %39
  %v41 = vsel %vm37, %v22, 0.0
  %42 = vadd.xlane.f32.xlu0 %v41
  %v43 = vpop.xlane.xlu0 %42
  %v44 = vsel %vm37, %v23, 0.0
  %45 = vadd.xlane.f32.xlu0 %v44
  %v46 = vpop.xlane.xlu0 %45
  %v47 = vsel %vm37, %v24, 0.0
  %48 = vadd.xlane.f32.xlu0 %v47
  %v49 = vpop.xlane.xlu0 %48
  %v50 = vsel %vm37, %v25, 0.0
  %51 = vadd.xlane.f32.xlu0 %v50
  %v52 = vpop.xlane.xlu0 %51
  %v53 = vsel %vm37, %v26, 0.0
  %54 = vadd.xlane.f32.xlu0 %v53
  %v55 = vpop.xlane.xlu0 %54
  %v56 = vsel %vm37, %v27, 0.0
  %57 = vadd.xlane.f32.xlu0 %v56
  %v58 = vpop.xlane.xlu0 %57
  %v59 = vsel %vm37, %v28, 0.0
  %60 = vadd.xlane.f32.xlu0 %v59
  %v61 = vpop.xlane.xlu0 %60
  %v62 = vsel %vm37, %v29, 0.0
  %63 = vadd.xlane.f32.xlu0 %v62
  %v64 = vpop.xlane.xlu0 %63
  %v65 = vsel %vm37, %v30, 0.0
  %66 = vadd.xlane.f32.xlu0 %v65
  %v67 = vpop.xlane.xlu0 %66
  %v68 = vsel %vm37, %v31, 0.0
  %69 = vadd.xlane.f32.xlu0 %v68
  %v70 = vpop.xlane.xlu0 %69
  %v71 = vsel %vm37, %v32, 0.0
  %72 = vadd.xlane.f32.xlu0 %v71
  %v73 = vpop.xlane.xlu0 %72
  %v74 = vsel %vm37, %v33, 0.0
  %75 = vadd.xlane.f32.xlu0 %v74
  %v76 = vpop.xlane.xlu0 %75
  %v77 = vsel %vm37, %v34, 0.0
  %78 = vadd.xlane.f32.xlu0 %v77
  %v79 = vpop.xlane.xlu0 %78
  %v80 = vsel %vm37, %v35, 0.0
  %81 = vadd.xlane.f32.xlu0 %v80
  %v82 = vpop.xlane.xlu0 %81
  %v83 = vsel %vm37, %v36, 0.0
  %84 = vadd.xlane.f32.xlu0 %v83
  %v85 = vpop.xlane.xlu0 %84
  %v86 = vrcp.pop 32.0
  %v87 = vmul.f32 32.0, %v86
  %v88 = vsub.f32 1.0, %v87
  %v89 = vmul.f32 %v86, %v88
  %v90 = vadd.f32 %v86, %v89
  %vm91 = vweird.f32 %v86
  %v92 = vsel %vm91, %v86, %v90
  %v93 = vmul.f32 %v40, %v92
  %v94 = vmul.f32 %v43, %v92
  %v95 = vmul.f32 %v46, %v92
  %v96 = vmul.f32 %v49, %v92
  %v97 = vmul.f32 %v52, %v92
  %v98 = vmul.f32 %v55, %v92
  %v99 = vmul.f32 %v58, %v92
  %v100 = vmul.f32 %v61, %v92
  %v101 = vmul.f32 %v64, %v92
  %v102 = vmul.f32 %v67, %v92
  %v103 = vmul.f32 %v70, %v92
  %v104 = vmul.f32 %v73, %v92
  %v105 = vmul.f32 %v76, %v92
  %v106 = vmul.f32 %v79, %v92
  %v107 = vmul.f32 %v82, %v92
  %v108 = vmul.f32 %v85, %v92
  %v109 = vsub.f32 %v21, %v93
  %v110 = vsub.f32 %v22, %v94
  %v111 = vsub.f32 %v23, %v95
  %v112 = vsub.f32 %v24, %v96
  %v113 = vsub.f32 %v25, %v97
  %v114 = vsub.f32 %v26, %v98
  %v115 = vsub.f32 %v27, %v99
  %v116 = vsub.f32 %v28, %v100
  %v117 = vsub.f32 %v29, %v101
  %v118 = vsub.f32 %v30, %v102
  %v119 = vsub.f32 %v31, %v103
  %v120 = vsub.f32 %v32, %v104
  %v121 = vsub.f32 %v33, %v105
  %v122 = vsub.f32 %v34, %v106
  %v123 = vsub.f32 %v35, %v107
  %v124 = vsub.f32 %v36, %v108
  %v125 = vmul.f32 %v109, %v109
  %v126 = vmul.f32 %v110, %v110
  %v127 = vmul.f32 %v111, %v111
  %v128 = vmul.f32 %v112, %v112
  %v129 = vmul.f32 %v113, %v113
  %v130 = vmul.f32 %v114, %v114
  %v131 = vmul.f32 %v115, %v115
  %v132 = vmul.f32 %v116, %v116
  %v133 = vmul.f32 %v117, %v117
  %v134 = vmul.f32 %v118, %v118
  %v135 = vmul.f32 %v119, %v119
  %v136 = vmul.f32 %v120, %v120
  %v137 = vmul.f32 %v121, %v121
  %v138 = vmul.f32 %v122, %v122
  %v139 = vmul.f32 %v123, %v123
  %v140 = vmul.f32 %v124, %v124
  %v141 = vsel %vm37, %v125, 0.0
  %142 = vadd.xlane.f32.xlu0 %v141
  %v143 = vpop.xlane.xlu0 %142
  %v144 = vsel %vm37, %v126, 0.0
  %145 = vadd.xlane.f32.xlu0 %v144
  %v146 = vpop.xlane.xlu0 %145
  %v147 = vsel %vm37, %v127, 0.0
  %148 = vadd.xlane.f32.xlu0 %v147
  %v149 = vpop.xlane.xlu0 %148
  %v150 = vsel %vm37, %v128, 0.0
  %151 = vadd.xlane.f32.xlu0 %v150
  %v152 = vpop.xlane.xlu0 %151
  %v153 = vsel %vm37, %v129, 0.0
  %154 = vadd.xlane.f32.xlu0 %v153
  %v155 = vpop.xlane.xlu0 %154
  %v156 = vsel %vm37, %v130, 0.0
  %157 = vadd.xlane.f32.xlu0 %v156
  %v158 = vpop.xlane.xlu0 %157
  %v159 = vsel %vm37, %v131, 0.0
  %160 = vadd.xlane.f32.xlu0 %v159
  %v161 = vpop.xlane.xlu0 %160
  %v162 = vsel %vm37, %v132, 0.0
  %163 = vadd.xlane.f32.xlu0 %v162
  %v164 = vpop.xlane.xlu0 %163
  %v165 = vsel %vm37, %v133, 0.0
  %166 = vadd.xlane.f32.xlu0 %v165
  %v167 = vpop.xlane.xlu0 %166
  %v168 = vsel %vm37, %v134, 0.0
  %169 = vadd.xlane.f32.xlu0 %v168
  %v170 = vpop.xlane.xlu0 %169
  %v171 = vsel %vm37, %v135, 0.0
  %172 = vadd.xlane.f32.xlu0 %v171
  %v173 = vpop.xlane.xlu0 %172
  %v174 = vsel %vm37, %v136, 0.0
  %175 = vadd.xlane.f32.xlu0 %v174
  %v176 = vpop.xlane.xlu0 %175
  %v177 = vsel %vm37, %v137, 0.0
  %178 = vadd.xlane.f32.xlu0 %v177
  %v179 = vpop.xlane.xlu0 %178
  %v180 = vsel %vm37, %v138, 0.0
  %181 = vadd.xlane.f32.xlu0 %v180
  %v182 = vpop.xlane.xlu0 %181
  %v183 = vsel %vm37, %v139, 0.0
  %184 = vadd.xlane.f32.xlu0 %v183
  %v185 = vpop.xlane.xlu0 %184
  %v186 = vsel %vm37, %v140, 0.0
  %187 = vadd.xlane.f32.xlu0 %v186
  %v188 = vpop.xlane.xlu0 %187
  %v189 = vmul.f32 %v143, %v92
  %v190 = vmul.f32 %v146, %v92
  %v191 = vmul.f32 %v149, %v92
  %v192 = vmul.f32 %v152, %v92
  %v193 = vmul.f32 %v155, %v92
  %v194 = vmul.f32 %v158, %v92
  %v195 = vmul.f32 %v161, %v92
  %v196 = vmul.f32 %v164, %v92
  %v197 = vmul.f32 %v167, %v92
  %v198 = vmul.f32 %v170, %v92
  %v199 = vmul.f32 %v173, %v92
  %v200 = vmul.f32 %v176, %v92
  %v201 = vmul.f32 %v179, %v92
  %v202 = vmul.f32 %v182, %v92
  %v203 = vmul.f32 %v185, %v92
  %v204 = vmul.f32 %v188, %v92
  %v205 = vadd.f32 %v189, 1e-05
  %v206 = vadd.f32 %v190, 1e-05
  %v207 = vadd.f32 %v191, 1e-05
  %v208 = vadd.f32 %v192, 1e-05
  %v209 = vadd.f32 %v193, 1e-05
  %v210 = vadd.f32 %v194, 1e-05
  %v211 = vadd.f32 %v195, 1e-05
  %v212 = vadd.f32 %v196, 1e-05
  %v213 = vadd.f32 %v197, 1e-05
  %v214 = vadd.f32 %v198, 1e-05
  %v215 = vadd.f32 %v199, 1e-05
  %v216 = vadd.f32 %v200, 1e-05
  %v217 = vadd.f32 %v201, 1e-05
  %v218 = vadd.f32 %v202, 1e-05
  %v219 = vadd.f32 %v203, 1e-05
  %v220 = vadd.f32 %v204, 1e-05
  %v221 = vrsqrt.pop %v205
  %v222 = vmul.f32 %v221, %v205
  %v223 = vmul.f32 %v222, %v221
  %v224 = vmul.f32 0.5, %v223
  %v225 = vsub.f32 1.5, %v224
  %v226 = vmul.f32 %v221, %v225
  %vm227 = vweird.f32 %v205
  %vm228 = vweird.f32 %v221
  %vm229 = vmor %vm227, %vm228
  %v230 = vsel %vm229, %v221, %v226
  %v231 = vrsqrt.pop %v206
  %v232 = vmul.f32 %v231, %v206
  %v233 = vmul.f32 %v232, %v231
  %v234 = vmul.f32 0.5, %v233
  %v235 = vsub.f32 1.5, %v234
  %v236 = vmul.f32 %v231, %v235
  %vm237 = vweird.f32 %v206
  %vm238 = vweird.f32 %v231
  %vm239 = vmor %vm237, %vm238
  %v240 = vsel %vm239, %v231, %v236
  %v241 = vrsqrt.pop %v207
  %v242 = vmul.f32 %v241, %v207
  %v243 = vmul.f32 %v242, %v241
  %v244 = vmul.f32 0.5, %v243
  %v245 = vsub.f32 1.5, %v244
  %v246 = vmul.f32 %v241, %v245
  %vm247 = vweird.f32 %v207
  %vm248 = vweird.f32 %v241
  %vm249 = vmor %vm247, %vm248
  %v250 = vsel %vm249, %v241, %v246
  %v251 = vrsqrt.pop %v208
  %v252 = vmul.f32 %v251, %v208
  %v253 = vmul.f32 %v252, %v251
  %v254 = vmul.f32 0.5, %v253
  %v255 = vsub.f32 1.5, %v254
  %v256 = vmul.f32 %v251, %v255
  %vm257 = vweird.f32 %v208
  %vm258 = vweird.f32 %v251
  %vm259 = vmor %vm257, %vm258
  %v260 = vsel %vm259, %v251, %v256
  %v261 = vrsqrt.pop %v209
  %v262 = vmul.f32 %v261, %v209
  %v263 = vmul.f32 %v262, %v261
  %v264 = vmul.f32 0.5, %v263
  %v265 = vsub.f32 1.5, %v264
  %v266 = vmul.f32 %v261, %v265
  %vm267 = vweird.f32 %v209
  %vm268 = vweird.f32 %v261
  %vm269 = vmor %vm267, %vm268
  %v270 = vsel %vm269, %v261, %v266
  %v271 = vrsqrt.pop %v210
  %v272 = vmul.f32 %v271, %v210
  %v273 = vmul.f32 %v272, %v271
  %v274 = vmul.f32 0.5, %v273
  %v275 = vsub.f32 1.5, %v274
  %v276 = vmul.f32 %v271, %v275
  %vm277 = vweird.f32 %v210
  %vm278 = vweird.f32 %v271
  %vm279 = vmor %vm277, %vm278
  %v280 = vsel %vm279, %v271, %v276
  %v281 = vrsqrt.pop %v211
  %v282 = vmul.f32 %v281, %v211
  %v283 = vmul.f32 %v282, %v281
  %v284 = vmul.f32 0.5, %v283
  %v285 = vsub.f32 1.5, %v284
  %v286 = vmul.f32 %v281, %v285
  %vm287 = vweird.f32 %v211
  %vm288 = vweird.f32 %v281
  %vm289 = vmor %vm287, %vm288
  %v290 = vsel %vm289, %v281, %v286
  %v291 = vrsqrt.pop %v212
  %v292 = vmul.f32 %v291, %v212
  %v293 = vmul.f32 %v292, %v291
  %v294 = vmul.f32 0.5, %v293
  %v295 = vsub.f32 1.5, %v294
  %v296 = vmul.f32 %v291, %v295
  %vm297 = vweird.f32 %v212
  %vm298 = vweird.f32 %v291
  %vm299 = vmor %vm297, %vm298
  %v300 = vsel %vm299, %v291, %v296
  %v301 = vrsqrt.pop %v213
  %v302 = vmul.f32 %v301, %v213
  %v303 = vmul.f32 %v302, %v301
  %v304 = vmul.f32 0.5, %v303
  %v305 = vsub.f32 1.5, %v304
  %v306 = vmul.f32 %v301, %v305
  %vm307 = vweird.f32 %v213
  %vm308 = vweird.f32 %v301
  %vm309 = vmor %vm307, %vm308
  %v310 = vsel %vm309, %v301, %v306
  %v311 = vrsqrt.pop %v214
  %v312 = vmul.f32 %v311, %v214
  %v313 = vmul.f32 %v312, %v311
  %v314 = vmul.f32 0.5, %v313
  %v315 = vsub.f32 1.5, %v314
  %v316 = vmul.f32 %v311, %v315
  %vm317 = vweird.f32 %v214
  %vm318 = vweird.f32 %v311
  %vm319 = vmor %vm317, %vm318
  %v320 = vsel %vm319, %v311, %v316
  %v321 = vrsqrt.pop %v215
  %v322 = vmul.f32 %v321, %v215
  %v323 = vmul.f32 %v322, %v321
  %v324 = vmul.f32 0.5, %v323
  %v325 = vsub.f32 1.5, %v324
  %v326 = vmul.f32 %v321, %v325
  %vm327 = vweird.f32 %v215
  %vm328 = vweird.f32 %v321
  %vm329 = vmor %vm327, %vm328
  %v330 = vsel %vm329, %v321, %v326
  %v331 = vrsqrt.pop %v216
  %v332 = vmul.f32 %v331, %v216
  %v333 = vmul.f32 %v332, %v331
  %v334 = vmul.f32 0.5, %v333
  %v335 = vsub.f32 1.5, %v334
  %v336 = vmul.f32 %v331, %v335
  %vm337 = vweird.f32 %v216
  %vm338 = vweird.f32 %v331
  %vm339 = vmor %vm337, %vm338
  %v340 = vsel %vm339, %v331, %v336
  %v341 = vrsqrt.pop %v217
  %v342 = vmul.f32 %v341, %v217
  %v343 = vmul.f32 %v342, %v341
  %v344 = vmul.f32 0.5, %v343
  %v345 = vsub.f32 1.5, %v344
  %v346 = vmul.f32 %v341, %v345
  %vm347 = vweird.f32 %v217
  %vm348 = vweird.f32 %v341
  %vm349 = vmor %vm347, %vm348
  %v350 = vsel %vm349, %v341, %v346
  %v351 = vrsqrt.pop %v218
  %v352 = vmul.f32 %v351, %v218
  %v353 = vmul.f32 %v352, %v351
  %v354 = vmul.f32 0.5, %v353
  %v355 = vsub.f32 1.5, %v354
  %v356 = vmul.f32 %v351, %v355
  %vm357 = vweird.f32 %v218
  %vm358 = vweird.f32 %v351
  %vm359 = vmor %vm357, %vm358
  %v360 = vsel %vm359, %v351, %v356
  %v361 = vrsqrt.pop %v219
  %v362 = vmul.f32 %v361, %v219
  %v363 = vmul.f32 %v362, %v361
  %v364 = vmul.f32 0.5, %v363
  %v365 = vsub.f32 1.5, %v364
  %v366 = vmul.f32 %v361, %v365
  %vm367 = vweird.f32 %v219
  %vm368 = vweird.f32 %v361
  %vm369 = vmor %vm367, %vm368
  %v370 = vsel %vm369, %v361, %v366
  %v371 = vrsqrt.pop %v220
  %v372 = vmul.f32 %v371, %v220
  %v373 = vmul.f32 %v372, %v371
  %v374 = vmul.f32 0.5, %v373
  %v375 = vsub.f32 1.5, %v374
  %v376 = vmul.f32 %v371, %v375
  %vm377 = vweird.f32 %v220
  %vm378 = vweird.f32 %v371
  %vm379 = vmor %vm377, %vm378
  %v380 = vsel %vm379, %v371, %v376
  %v381 = vmul.f32 %v109, %v230
  %v382 = vmul.f32 %v110, %v240
  %v383 = vmul.f32 %v111, %v250
  %v384 = vmul.f32 %v112, %v260
  %v385 = vmul.f32 %v113, %v270
  %v386 = vmul.f32 %v114, %v280
  %v387 = vmul.f32 %v115, %v290
  %v388 = vmul.f32 %v116, %v300
  %v389 = vmul.f32 %v117, %v310
  %v390 = vmul.f32 %v118, %v320
  %v391 = vmul.f32 %v119, %v330
  %v392 = vmul.f32 %v120, %v340
  %v393 = vmul.f32 %v121, %v350
  %v394 = vmul.f32 %v122, %v360
  %v395 = vmul.f32 %v123, %v370
  %v396 = vmul.f32 %v124, %v380
  %v397 = vld [vmem:[%s1] sm:$0x1]
  %v399 = vperm.slane %v397, 0
  %v401 = vmul.f32 %v381, %v399
  %v402 = vmul.f32 %v382, %v399
  %v403 = vmul.f32 %v383, %v399
  %v404 = vmul.f32 %v384, %v399
  %v405 = vmul.f32 %v385, %v399
  %v406 = vmul.f32 %v386, %v399
  %v407 = vmul.f32 %v387, %v399
  %v408 = vmul.f32 %v388, %v399
  %v409 = vmul.f32 %v389, %v399
  %v410 = vmul.f32 %v390, %v399
  %v411 = vmul.f32 %v391, %v399
  %v412 = vmul.f32 %v392, %v399
  %v413 = vmul.f32 %v393, %v399
  %v414 = vmul.f32 %v394, %v399
  %v415 = vmul.f32 %v395, %v399
  %v416 = vmul.f32 %v396, %v399
  %v417 = vld [vmem:[%s2] sm:$0x1]
  %v419 = vperm.slane %v417, 0
  %v421 = vadd.f32 %v401, %v419
  %v422 = vadd.f32 %v402, %v419
  %v423 = vadd.f32 %v403, %v419
  %v424 = vadd.f32 %v404, %v419
  %v425 = vadd.f32 %v405, %v419
  %v426 = vadd.f32 %v406, %v419
  %v427 = vadd.f32 %v407, %v419
  %v428 = vadd.f32 %v408, %v419
  %v429 = vadd.f32 %v409, %v419
  %v430 = vadd.f32 %v410, %v419
  %v431 = vadd.f32 %v411, %v419
  %v432 = vadd.f32 %v412, %v419
  %v433 = vadd.f32 %v413, %v419
  %v434 = vadd.f32 %v414, %v419
  %v435 = vadd.f32 %v415, %v419
  %v436 = vadd.f32 %v416, %v419
  %v437 = vpack.c.bf16 %v422, %v421
  %v438 = vpack.c.bf16 %v424, %v423
  %v439 = vpack.c.bf16 %v426, %v425
  %v440 = vpack.c.bf16 %v428, %v427
  %v441 = vpack.c.bf16 %v430, %v429
  %v442 = vpack.c.bf16 %v432, %v431
  %v443 = vpack.c.bf16 %v434, %v433
  %v444 = vpack.c.bf16 %v436, %v435
  %v445 = vld [vmem:[%s3] sm:$0xf]
  %v446 = vld [vmem:[%s3 + $0x4] sm:$0xf]
  %v447 = vld [vmem:[%s3 + $0x8] sm:$0xf]
  %v448 = vld [vmem:[%s3 + $0xc] sm:$0xf]
  %v449 = vld [vmem:[%s4] sm:$0x1]
  %v451 = vperm.slane %v449, 0
  %v457 = vunpack.c.l.b16 %v445
  %v458 = vunpack.c.l.b16 %v446
  %v459 = vunpack.c.l.b16 %v447
  %v460 = vunpack.c.l.b16 %v448
  %v461 = vpack.c.b16 %v458, %v457
  %v462 = vpack.c.b16 %v460, %v459
  %v466 = vsel %vm37, %v437, 0
  %v469 = vsel %vm37, %v438, 0
  %v472 = vsel %vm37, %v439, 0
  %v475 = vsel %vm37, %v440, 0
  %v478 = vsel %vm37, %v441, 0
  %v481 = vsel %vm37, %v442, 0
  %v484 = vsel %vm37, %v443, 0
  %v487 = vsel %vm37, %v444, 0
  %489 = vmatpush.bf16.msra.mxu0 0
  %490 = vmatpush.bf16.msra.mxu0 0
  %491 = vmatpush.bf16.msra.mxu0 0
  %492 = vmatpush.bf16.msra.mxu0 0
  %493 = vmatpush.bf16.msra.mxu0 0
  %494 = vmatpush.bf16.msra.mxu0 0
  %495 = vmatpush.bf16.msra.mxu0 %v462
  %496 = vmatpush.bf16.msra.mxu0 %v461
  %497 = vmatmul.bf16.gmra.mxu0 %v466
  %v498 = vpop.f32.mrf.mxu0
  %v499 = vadd.f32 %v451, %v498
  %v500 = vpop.f32.mrf.mxu0
  %v501 = vadd.f32 %v451, %v500
  %502 = vmatmul.bf16.gmra.mxu0 %v469
  %v503 = vpop.f32.mrf.mxu0
  %v504 = vadd.f32 %v451, %v503
  %v505 = vpop.f32.mrf.mxu0
  %v506 = vadd.f32 %v451, %v505
  %507 = vmatmul.bf16.gmra.mxu0 %v472
  %v508 = vpop.f32.mrf.mxu0
  %v509 = vadd.f32 %v451, %v508
  %v510 = vpop.f32.mrf.mxu0
  %v511 = vadd.f32 %v451, %v510
  %512 = vmatmul.bf16.gmra.mxu0 %v475
  %v513 = vpop.f32.mrf.mxu0
  %v514 = vadd.f32 %v451, %v513
  %v515 = vpop.f32.mrf.mxu0
  %v516 = vadd.f32 %v451, %v515
  %517 = vmatmul.bf16.gmra.mxu0 %v478
  %v518 = vpop.f32.mrf.mxu0
  %v519 = vadd.f32 %v451, %v518
  %v520 = vpop.f32.mrf.mxu0
  %v521 = vadd.f32 %v451, %v520
  %522 = vmatmul.bf16.gmra.mxu0 %v481
  %v523 = vpop.f32.mrf.mxu0
  %v524 = vadd.f32 %v451, %v523
  %v525 = vpop.f32.mrf.mxu0
  %v526 = vadd.f32 %v451, %v525
  %527 = vmatmul.bf16.gmra.mxu0 %v484
  %v528 = vpop.f32.mrf.mxu0
  %v529 = vadd.f32 %v451, %v528
  %v530 = vpop.f32.mrf.mxu0
  %v531 = vadd.f32 %v451, %v530
  %532 = vmatmul.bf16.gmra.mxu0 %v487
  %v533 = vpop.f32.mrf.mxu0
  %v534 = vadd.f32 %v451, %v533
  %v535 = vpop.f32.mrf.mxu0
  %v536 = vadd.f32 %v451, %v535
  %537 = vdwg.mxu0
  %v538 = vpack.c.bf16 %v499, %v499
  %v539 = vpack.c.bf16 %v501, %v501
  %v540 = vpack.c.bf16 %v504, %v504
  %v541 = vpack.c.bf16 %v506, %v506
  %v542 = vpack.c.bf16 %v509, %v509
  %v543 = vpack.c.bf16 %v511, %v511
  %v544 = vpack.c.bf16 %v514, %v514
  %v545 = vpack.c.bf16 %v516, %v516
  %v546 = vpack.c.bf16 %v519, %v519
  %v547 = vpack.c.bf16 %v521, %v521
  %v548 = vpack.c.bf16 %v524, %v524
  %v549 = vpack.c.bf16 %v526, %v526
  %v550 = vpack.c.bf16 %v529, %v529
  %v551 = vpack.c.bf16 %v531, %v531
  %v552 = vpack.c.bf16 %v534, %v534
  %v553 = vpack.c.bf16 %v536, %v536
  %vm554 = vcmask 781312
  %555 = vst.msk [vmem:[%s5] sm:$0xf] %vm554, %v538
  %556 = vst.msk [vmem:[%s5 + $0x4] sm:$0xf] %vm554, %v539
  %557 = vst.msk [vmem:[%s5 + $0x8] sm:$0xf] %vm554, %v540
  %558 = vst.msk [vmem:[%s5 + $0xc] sm:$0xf] %vm554, %v541
  %559 = vst.msk [vmem:[%s5 + $0x10] sm:$0xf] %vm554, %v542
  %560 = vst.msk [vmem:[%s5 + $0x14] sm:$0xf] %vm554, %v543
  %561 = vst.msk [vmem:[%s5 + $0x18] sm:$0xf] %vm554, %v544
  %562 = vst.msk [vmem:[%s5 + $0x1c] sm:$0xf] %vm554, %v545
  %563 = vst.msk [vmem:[%s5 + $0x20] sm:$0xf] %vm554, %v546
  %564 = vst.msk [vmem:[%s5 + $0x24] sm:$0xf] %vm554, %v547
  %565 = vst.msk [vmem:[%s5 + $0x28] sm:$0xf] %vm554, %v548
  %566 = vst.msk [vmem:[%s5 + $0x2c] sm:$0xf] %vm554, %v549
  %567 = vst.msk [vmem:[%s5 + $0x30] sm:$0xf] %vm554, %v550
  %568 = vst.msk [vmem:[%s5 + $0x34] sm:$0xf] %vm554, %v551
  %569 = vst.msk [vmem:[%s5 + $0x38] sm:$0xf] %vm554, %v552
  %570 = vst.msk [vmem:[%s5 + $0x3c] sm:$0xf] %vm554, %v553
  // Predicated region
  $region22: #{swin_encoder_block.5} parent=0 // pred_check
    _
  $region23: #{swin_encoder_block.5} parent=0 // pred_check_branch
    %572 = sbr.rel (0) target = $region25
  $region24: #{swin_encoder_block.5} parent=0 // pred_region
    _
  $region25: #{swin_encoder_block.5} parent=0 // pred_fallthru
    _
  // Predicated region
  $region26: #{swin_encoder_block.5} parent=0 // pred_check
    _
  $region27: #{swin_encoder_block.5} parent=0 // pred_check_branch
    %574 = sbr.rel (0) target = $region29
  $region28: #{swin_encoder_block.5} parent=0 // pred_region
    _
  $region29: #{swin_encoder_block.5} parent=0 // pred_fallthru
    _

// kernel: swin_encoder_block.7
$region0: #{swin_encoder_block.7}
  #allocation0 [shape = 'u32[]', space=smem, size = 0x4, offset = 0x4, fixed_abs, tag = 'smem constant byte address 0x4 - core index']
  #allocation1 [shape = 'u32[72,128]{1,0:T(1,128)}', space=vmem, size = 0x9000, scoped, tag = 'internal scratch']
  %s0 = inlined_call_operand.vmem [shape: bf16[128,32], index: 0, kind: input, shape index: {}]
  %s1 = inlined_call_operand.vmem [shape: bf16[32,32], index: 1, kind: input, shape index: {}]
  %s2 = inlined_call_operand.vmem [shape: f32[1,32], index: 2, kind: input, shape index: {}]
  %s3 = inlined_call_operand.vmem [shape: f32[128,32], index: 3, kind: input, shape index: {}]
  %s4 = inlined_call_operand.vmem [shape: f32[128,32], index: 4, kind: output, shape index: {}]
  %s5 = sld [smem:[#allocation0]]
  $region26: #{swin_encoder_block.7} parent=0
    _
  %s7 = ssub.s32 1, %s5
  %s8 = scalar_select 0, %s7, %s5
  // Predicated region
  $region2: #{swin_encoder_block.7} parent=0 // pred_check
    _
  $region3: #{swin_encoder_block.7} parent=0 // pred_check_branch
    %10 = sbr.rel (0) target = $region5
  $region4: #{swin_encoder_block.7} parent=0 // pred_region
    _
  $region5: #{swin_encoder_block.7} parent=0 // pred_fallthru
    _
  // Predicated region
  $region6: #{swin_encoder_block.7} parent=0 // pred_check
    _
  $region7: #{swin_encoder_block.7} parent=0 // pred_check_branch
    %12 = sbr.rel (0) target = $region9
  $region8: #{swin_encoder_block.7} parent=0 // pred_region
    _
  $region9: #{swin_encoder_block.7} parent=0 // pred_fallthru
    _
  // Predicated region
  $region10: #{swin_encoder_block.7} parent=0 // pred_check
    _
  $region11: #{swin_encoder_block.7} parent=0 // pred_check_branch
    %14 = sbr.rel (0) target = $region13
  $region12: #{swin_encoder_block.7} parent=0 // pred_region
    _
  $region13: #{swin_encoder_block.7} parent=0 // pred_fallthru
    _
  // Predicated region
  $region14: #{swin_encoder_block.7} parent=0 // pred_check
    _
  $region15: #{swin_encoder_block.7} parent=0 // pred_check_branch
    %16 = sbr.rel (0) target = $region17
  $region16: #{swin_encoder_block.7} parent=0 // pred_region
    _
  $region17: #{swin_encoder_block.7} parent=0 // pred_fallthru
    _
  %v18 = vld [vmem:[%s0] sm:$0xf]
  %v19 = vld [vmem:[%s0 + $0x4] sm:$0xf]
  %v20 = vld [vmem:[%s0 + $0x8] sm:$0xf]
  %v21 = vld [vmem:[%s0 + $0xc] sm:$0xf]
  %v22 = vld [vmem:[%s0 + $0x10] sm:$0xf]
  %v23 = vld [vmem:[%s0 + $0x14] sm:$0xf]
  %v24 = vld [vmem:[%s0 + $0x18] sm:$0xf]
  %v25 = vld [vmem:[%s0 + $0x1c] sm:$0xf]
  %v26 = vld [vmem:[%s0 + $0x20] sm:$0xf]
  %v27 = vld [vmem:[%s0 + $0x24] sm:$0xf]
  %v28 = vld [vmem:[%s0 + $0x28] sm:$0xf]
  %v29 = vld [vmem:[%s0 + $0x2c] sm:$0xf]
  %v30 = vld [vmem:[%s0 + $0x30] sm:$0xf]
  %v31 = vld [vmem:[%s0 + $0x34] sm:$0xf]
  %v32 = vld [vmem:[%s0 + $0x38] sm:$0xf]
  %v33 = vld [vmem:[%s0 + $0x3c] sm:$0xf]
  %v34 = vld [vmem:[%s1] sm:$0xf]
  %v35 = vld [vmem:[%s1 + $0x4] sm:$0xf]
  %v36 = vld [vmem:[%s1 + $0x8] sm:$0xf]
  %v37 = vld [vmem:[%s1 + $0xc] sm:$0xf]
  %v38 = vld [vmem:[%s2] sm:$0x1]
  %v40 = vperm.slane %v38, 0
  %v58 = vunpack.c.l.b16 %v18
  %v59 = vunpack.c.l.b16 %v19
  %v60 = vunpack.c.l.b16 %v20
  %v61 = vunpack.c.l.b16 %v21
  %v62 = vunpack.c.l.b16 %v22
  %v63 = vunpack.c.l.b16 %v23
  %v64 = vunpack.c.l.b16 %v24
  %v65 = vunpack.c.l.b16 %v25
  %v66 = vunpack.c.l.b16 %v26
  %v67 = vunpack.c.l.b16 %v27
  %v68 = vunpack.c.l.b16 %v28
  %v69 = vunpack.c.l.b16 %v29
  %v70 = vunpack.c.l.b16 %v30
  %v71 = vunpack.c.l.b16 %v31
  %v72 = vunpack.c.l.b16 %v32
  %v73 = vunpack.c.l.b16 %v33
  %v74 = vpack.c.b16 %v59, %v58
  %v75 = vpack.c.b16 %v61, %v60
  %v76 = vpack.c.b16 %v63, %v62
  %v77 = vpack.c.b16 %v65, %v64
  %v78 = vpack.c.b16 %v67, %v66
  %v79 = vpack.c.b16 %v69, %v68
  %v80 = vpack.c.b16 %v71, %v70
  %v81 = vpack.c.b16 %v73, %v72
  %v86 = vunpack.c.l.b16 %v34
  %v87 = vunpack.c.l.b16 %v35
  %v88 = vunpack.c.l.b16 %v36
  %v89 = vunpack.c.l.b16 %v37
  %v90 = vpack.c.b16 %v87, %v86
  %v91 = vpack.c.b16 %v89, %v88
  %vm94 = vcmask 261120
  %v96 = vsel %vm94, %v74, 0
  %v99 = vsel %vm94, %v75, 0
  %v102 = vsel %vm94, %v76, 0
  %v105 = vsel %vm94, %v77, 0
  %v108 = vsel %vm94, %v78, 0
  %v111 = vsel %vm94, %v79, 0
  %v114 = vsel %vm94, %v80, 0
  %v117 = vsel %vm94, %v81, 0
  %119 = vmatpush.bf16.msra.mxu0 0
  %120 = vmatpush.bf16.msra.mxu0 0
  %121 = vmatpush.bf16.msra.mxu0 0
  %122 = vmatpush.bf16.msra.mxu0 0
  %123 = vmatpush.bf16.msra.mxu0 0
  %124 = vmatpush.bf16.msra.mxu0 0
  %125 = vmatpush.bf16.msra.mxu0 %v91
  %126 = vmatpush.bf16.msra.mxu0 %v90
  %127 = vmatmul.bf16.gmra.mxu0 %v96
  %v128 = vpop.f32.mrf.mxu0
  %v129 = vadd.f32 %v40, %v128
  %v130 = vpop.f32.mrf.mxu0
  %v131 = vadd.f32 %v40, %v130
  %132 = vmatmul.bf16.gmra.mxu0 %v99
  %v133 = vpop.f32.mrf.mxu0
  %v134 = vadd.f32 %v40, %v133
  %v135 = vpop.f32.mrf.mxu0
  %v136 = vadd.f32 %v40, %v135
  %137 = vmatmul.bf16.gmra.mxu0 %v102
  %v138 = vpop.f32.mrf.mxu0
  %v139 = vadd.f32 %v40, %v138
  %v140 = vpop.f32.mrf.mxu0
  %v141 = vadd.f32 %v40, %v140
  %142 = vmatmul.bf16.gmra.mxu0 %v105
  %v143 = vpop.f32.mrf.mxu0
  %v144 = vadd.f32 %v40, %v143
  %v145 = vpop.f32.mrf.mxu0
  %v146 = vadd.f32 %v40, %v145
  %147 = vmatmul.bf16.gmra.mxu0 %v108
  %v148 = vpop.f32.mrf.mxu0
  %v149 = vadd.f32 %v40, %v148
  %v150 = vpop.f32.mrf.mxu0
  %v151 = vadd.f32 %v40, %v150
  %152 = vmatmul.bf16.gmra.mxu0 %v111
  %v153 = vpop.f32.mrf.mxu0
  %v154 = vadd.f32 %v40, %v153
  %v155 = vpop.f32.mrf.mxu0
  %v156 = vadd.f32 %v40, %v155
  %157 = vmatmul.bf16.gmra.mxu0 %v114
  %v158 = vpop.f32.mrf.mxu0
  %v159 = vadd.f32 %v40, %v158
  %v160 = vpop.f32.mrf.mxu0
  %v161 = vadd.f32 %v40, %v160
  %162 = vmatmul.bf16.gmra.mxu0 %v117
  %v163 = vpop.f32.mrf.mxu0
  %v164 = vadd.f32 %v40, %v163
  %v165 = vpop.f32.mrf.mxu0
  %v166 = vadd.f32 %v40, %v165
  %167 = vdwg.mxu0
  %v168 = vld [vmem:[%s3] sm:$0xff]
  %v169 = vld [vmem:[%s3 + $0x8] sm:$0xff]
  %v170 = vld [vmem:[%s3 + $0x10] sm:$0xff]
  %v171 = vld [vmem:[%s3 + $0x18] sm:$0xff]
  %v172 = vld [vmem:[%s3 + $0x20] sm:$0xff]
  %v173 = vld [vmem:[%s3 + $0x28] sm:$0xff]
  %v174 = vld [vmem:[%s3 + $0x30] sm:$0xff]
  %v175 = vld [vmem:[%s3 + $0x38] sm:$0xff]
  %v176 = vld [vmem:[%s3 + $0x40] sm:$0xff]
  %v177 = vld [vmem:[%s3 + $0x48] sm:$0xff]
  %v178 = vld [vmem:[%s3 + $0x50] sm:$0xff]
  %v179 = vld [vmem:[%s3 + $0x58] sm:$0xff]
  %v180 = vld [vmem:[%s3 + $0x60] sm:$0xff]
  %v181 = vld [vmem:[%s3 + $0x68] sm:$0xff]
  %v182 = vld [vmem:[%s3 + $0x70] sm:$0xff]
  %v183 = vld [vmem:[%s3 + $0x78] sm:$0xff]
  %v184 = vadd.f32 %v129, %v168
  %v185 = vadd.f32 %v131, %v169
  %v186 = vadd.f32 %v134, %v170
  %v187 = vadd.f32 %v136, %v171
  %v188 = vadd.f32 %v139, %v172
  %v189 = vadd.f32 %v141, %v173
  %v190 = vadd.f32 %v144, %v174
  %v191 = vadd.f32 %v146, %v175
  %v192 = vadd.f32 %v149, %v176
  %v193 = vadd.f32 %v151, %v177
  %v194 = vadd.f32 %v154, %v178
  %v195 = vadd.f32 %v156, %v179
  %v196 = vadd.f32 %v159, %v180
  %v197 = vadd.f32 %v161, %v181
  %v198 = vadd.f32 %v164, %v182
  %v199 = vadd.f32 %v166, %v183
  %200 = vst.msk [vmem:[%s4] sm:$0xff] %vm94, %v184
  %201 = vst.msk [vmem:[%s4 + $0x8] sm:$0xff] %vm94, %v185
  %202 = vst.msk [vmem:[%s4 + $0x10] sm:$0xff] %vm94, %v186
  %203 = vst.msk [vmem:[%s4 + $0x18] sm:$0xff] %vm94, %v187
  %204 = vst.msk [vmem:[%s4 + $0x20] sm:$0xff] %vm94, %v188
  %205 = vst.msk [vmem:[%s4 + $0x28] sm:$0xff] %vm94, %v189
  %206 = vst.msk [vmem:[%s4 + $0x30] sm:$0xff] %vm94, %v190
  %207 = vst.msk [vmem:[%s4 + $0x38] sm:$0xff] %vm94, %v191
  %208 = vst.msk [vmem:[%s4 + $0x40] sm:$0xff] %vm94, %v192
  %209 = vst.msk [vmem:[%s4 + $0x48] sm:$0xff] %vm94, %v193
  %210 = vst.msk [vmem:[%s4 + $0x50] sm:$0xff] %vm94, %v194
  %211 = vst.msk [vmem:[%s4 + $0x58] sm:$0xff] %vm94, %v195
  %212 = vst.msk [vmem:[%s4 + $0x60] sm:$0xff] %vm94, %v196
  %213 = vst.msk [vmem:[%s4 + $0x68] sm:$0xff] %vm94, %v197
  %214 = vst.msk [vmem:[%s4 + $0x70] sm:$0xff] %vm94, %v198
  %215 = vst.msk [vmem:[%s4 + $0x78] sm:$0xff] %vm94, %v199
  // Predicated region
  $region18: #{swin_encoder_block.7} parent=0 // pred_check
    _
  $region19: #{swin_encoder_block.7} parent=0 // pred_check_branch
    %217 = sbr.rel (0) target = $region21
  $region20: #{swin_encoder_block.7} parent=0 // pred_region
    _
  $region21: #{swin_encoder_block.7} parent=0 // pred_fallthru
    _
  // Predicated region
  $region22: #{swin_encoder_block.7} parent=0 // pred_check
    _
  $region23: #{swin_encoder_block.7} parent=0 // pred_check_branch
    %219 = sbr.rel (0) target = $region25
  $region24: #{swin_encoder_block.7} parent=0 // pred_region
    _
  $region25: #{swin_encoder_block.7} parent=0 // pred_fallthru
    _

// kernel: swin_encoder_block.6
$region0: #{swin_encoder_block.6}
  #allocation0 [shape = 'u32[]', space=smem, size = 0x4, offset = 0x4, fixed_abs, tag = 'smem constant byte address 0x4 - core index']
  #allocation1 [shape = 'u32[72,128]{1,0:T(1,128)}', space=vmem, size = 0x9000, scoped, tag = 'internal scratch']
  %s0 = inlined_call_operand.vmem [shape: bf16[2,4,16,96], index: 0, kind: input, shape index: {}]
  %s1 = inlined_call_operand.vmem [shape: f32[4,16,16], index: 1, kind: input, shape index: {}]
  %s2 = inlined_call_operand.vmem [shape: bf16[2,4,16,32], index: 2, kind: output, shape index: {}]
  %s3 = sld [smem:[#allocation0]]
  $region41: #{swin_encoder_block.6} parent=0
    _
  %s5 = ssub.s32 1, %s3
  %s6 = scalar_select 0, %s5, %s3
  loop: start=0, step=1, limit=4
  $region2: #{swin_encoder_block.6} parent=0 // loop_pre_header
    _
  $region3: #{swin_encoder_block.6} parent=0 // loop_header
    %s8 = sphi 0, %s12
    %p9 = scmp.ge.s32.totalorder %s8, 4
    %s18 = sphi 0, %s20
    %s21 = sphi 0, %s18
    %s22 = sphi 0, %s21
    %s38 = sphi 0, %s22
    %s42 = sphi 0, %s42
    %s44 = sphi 0, %s42
    %s45 = sphi 0, %s44
    %s59 = sphi 0, %s45
    %s65 = sphi 0, %s67
    %s68 = sphi 0, %s65
    %s69 = sphi 0, %s68
    %s85 = sphi 0, %s69
  $region4: #{swin_encoder_block.6} parent=0 // loop_header_branch
    %11 = sbr.rel (%p9) target = $region8
  $region5: #{swin_encoder_block.6} parent=0 // loop_body
    %s13 = ssub.s32 %s8, 1
    %s14 = ssub.s32 %s8, 2
    %s15 = sadd.s32 %s8, 1
    %s16 = ssub.s32 %s8, %s15
    %p17 = scmp.eq.s32.totalorder %s16, 0
    %s19 = sadd.s32 %s18, 1
    %s20 = scalar_select %p17, %s18, %s19
    %p23 = pneg %p17
    %p24 = scmp.eq.s32.totalorder %s8, 1
    %p25 = por %p23, %p24
    %p26 = scmp.ne.s32.totalorder %s18, %s21
    %p27 = scmp.eq.s32.totalorder %s8, 0
    %p28 = por %p26, %p27
    %p29 = scmp.ne.s32.totalorder %s18, %s21
    %p30 = scmp.eq.s32.totalorder %s13, 1
    %p31 = por %p29, %p30
    %p32 = scmp.ne.s32.totalorder %s21, %s22
    %p33 = scmp.eq.s32.totalorder %s13, 0
    %p34 = por %p32, %p33
    %p35 = scmp.ne.s32.totalorder %s21, %s22
    %p36 = scmp.eq.s32.totalorder %s14, 1
    %p37 = por %p35, %p36
    %p39 = scmp.ne.s32.totalorder %s22, %s38
    %p40 = scmp.eq.s32.totalorder %s14, 0
    %p41 = por %p39, %p40
    %s43 = sadd.s32 %s42, 1
    %p46 = scmp.eq.s32.totalorder %s8, 1
    %p47 = scmp.ne.s32.totalorder %s42, %s44
    %p48 = scmp.eq.s32.totalorder %s8, 0
    %p49 = por %p47, %p48
    %p50 = scmp.ne.s32.totalorder %s42, %s44
    %p51 = scmp.eq.s32.totalorder %s13, 1
    %p52 = por %p50, %p51
    %p53 = scmp.ne.s32.totalorder %s44, %s45
    %p54 = scmp.eq.s32.totalorder %s13, 0
    %p55 = por %p53, %p54
    %p56 = scmp.ne.s32.totalorder %s44, %s45
    %p57 = scmp.eq.s32.totalorder %s14, 1
    %p58 = por %p56, %p57
    %p60 = scmp.ne.s32.totalorder %s45, %s59
    %p61 = scmp.eq.s32.totalorder %s14, 0
    %p62 = por %p60, %p61
    %s63 = ssub.s32 %s8, %s15
    %p64 = scmp.eq.s32.totalorder %s63, 0
    %s66 = sadd.s32 %s65, 1
    %s67 = scalar_select %p64, %s65, %s66
    %p70 = pneg %p64
    %p71 = scmp.eq.s32.totalorder %s8, 1
    %p72 = por %p70, %p71
    %p73 = scmp.ne.s32.totalorder %s65, %s68
    %p74 = scmp.eq.s32.totalorder %s8, 0
    %p75 = por %p73, %p74
    %p76 = scmp.ne.s32.totalorder %s65, %s68
    %p77 = scmp.eq.s32.totalorder %s13, 1
    %p78 = por %p76, %p77
    %p79 = scmp.ne.s32.totalorder %s68, %s69
    %p80 = scmp.eq.s32.totalorder %s13, 0
    %p81 = por %p79, %p80
    %p82 = scmp.ne.s32.totalorder %s68, %s69
    %p83 = scmp.eq.s32.totalorder %s14, 1
    %p84 = por %p82, %p83
    %p86 = scmp.ne.s32.totalorder %s69, %s85
    %p87 = scmp.eq.s32.totalorder %s14, 0
    %p88 = por %p86, %p87
    %p89 = scmp.le.s32.totalorder 1, %s8
    %p90 = scmp.lt.s32.totalorder %s8, 3
    %p91 = pnand %p89, %p90
    %p92 = pneg %p91
    // Predicated region
    $region9: #{swin_encoder_block.6} parent=5 // pred_check
      _
    $region10: #{swin_encoder_block.6} parent=5 // pred_check_branch
      %94 = sbr.rel (%p91) target = $region12
    $region11: #{swin_encoder_block.6} parent=5 // pred_region
      %s95 = ssub.s32 %s8, 1
      // Predicated region
      $region13: #{swin_encoder_block.6} parent=11 // pred_check
        %p96 = pneg %p55
      $region14: #{swin_encoder_block.6} parent=11 // pred_check_branch
        %98 = sbr.rel (%p96) target = $region16
      $region15: #{swin_encoder_block.6} parent=11 // pred_region
        _
      $region16: #{swin_encoder_block.6} parent=11 // pred_fallthru
        _
    $region12: #{swin_encoder_block.6} parent=5 // pred_fallthru
      _
    %p99 = scmp.lt.s32.totalorder %s8, 2
    // Predicated region
    $region17: #{swin_encoder_block.6} parent=5 // pred_check
      %p100 = pneg %p99
    $region18: #{swin_encoder_block.6} parent=5 // pred_check_branch
      %102 = sbr.rel (%p100) target = $region20
    $region19: #{swin_encoder_block.6} parent=5 // pred_region
      // Predicated region
      $region21: #{swin_encoder_block.6} parent=19 // pred_check
        %p103 = pneg %p28
      $region22: #{swin_encoder_block.6} parent=19 // pred_check_branch
        %105 = sbr.rel (%p103) target = $region24
      $region23: #{swin_encoder_block.6} parent=19 // pred_region
        %p106 = scmp.lt.s32.totalorder %s8, 1
        %s107 = scalar_select %p106, %s8, 1
        %s108 = smul.addr %s107, 8
        %s109 = smul.addr %s108, 4
        %s110 = scalar_lea.vmem %s0, %s109
      $region24: #{swin_encoder_block.6} parent=19 // pred_fallthru
        _
    $region20: #{swin_encoder_block.6} parent=5 // pred_fallthru
      _
    %p111 = scmp.le.s32.totalorder 1, %s8
    %p112 = scmp.lt.s32.totalorder %s8, 3
    %p113 = pnand %p111, %p112
    %p114 = pneg %p113
    // Predicated region
    $region25: #{swin_encoder_block.6} parent=5 // pred_check
      _
    $region26: #{swin_encoder_block.6} parent=5 // pred_check_branch
      %116 = sbr.rel (%p113) target = $region28
    $region27: #{swin_encoder_block.6} parent=5 // pred_region
      %s117 = ssub.s32 %s8, 1
      %p118 = scmp.lt.s32.totalorder %s13, 1
      %s119 = scalar_select %p118, %s13, 1
      %s120 = smul.addr %s119, 8
      %s121 = smul.addr %s120, 4
      %s122 = scalar_lea.vmem %s0, %s121
      %p123 = pneg %p34
      %p124 = pneg %p31
      %p125 = pneg %p55
      %p126 = pneg %p52
      %p127 = pneg %p81
      %p128 = pneg %p78
      %p129 = scmp.lt.s32.totalorder %s13, 1
      %s130 = scalar_select %p129, %s13, 1
      %s131 = smul.addr %s130, 8
      %s132 = smul.addr %s131, 4
      %s133 = scalar_lea.vmem %s2, %s132
      %p134 = scmp.lt.s32.totalorder %s13, 1
      %s135 = scalar_select %p134, %s13, 1
      %s136 = smul.addr %s135, 8
      %s137 = smul.addr %s136, 4
      %s138 = scalar_lea.vmem %s0, %s137
      %p139 = scmp.lt.s32.totalorder %s13, 1
      %s140 = scalar_select %p139, %s13, 1
      %s141 = smul.addr %s140, 8
      %s142 = smul.addr %s141, 4
      %s143 = scalar_lea.vmem %s2, %s142
      %v145 = vld [vmem:[%s138] sm:$0xf]
      %v146 = vld [vmem:[%s138 + $0x4] sm:$0xf]
      %v147 = vld [vmem:[%s138 + $0x8] sm:$0xf]
      %v148 = vld [vmem:[%s138 + $0xc] sm:$0xf]
      %v149 = vld [vmem:[%s138 + $0x10] sm:$0xf]
      %v150 = vld [vmem:[%s138 + $0x14] sm:$0xf]
      %v151 = vld [vmem:[%s138 + $0x18] sm:$0xf]
      %v152 = vld [vmem:[%s138 + $0x1c] sm:$0xf]
      %v153 = vld [vmem:[%s1] sm:$0xff]
      %v154 = vld [vmem:[%s1 + $0x8] sm:$0xff]
      %v155 = vld [vmem:[%s1 + $0x10] sm:$0xff]
      %v156 = vld [vmem:[%s1 + $0x18] sm:$0xff]
      %v157 = vld [vmem:[%s1 + $0x20] sm:$0xff]
      %v158 = vld [vmem:[%s1 + $0x28] sm:$0xff]
      %v159 = vld [vmem:[%s1 + $0x30] sm:$0xff]
      %v160 = vld [vmem:[%s1 + $0x38] sm:$0xff]
      %v163 = vunpack.c.l.b16 %v145
      %v164 = vunpack.c.l.b16 %v146
      %v165 = vpack.c.b16 %v164, %v163
      %166 = vrot.lane.b32.xlu0 %v165, 96
      %v167 = vpop.permute.xlu0 %166
      %vm168 = vcmask 64512
      %v170 = vsel %vm168, %v165, 0
      %v173 = vsel %vm168, %v167, 0
      %175 = vmatpush.bf16.xpose.msra.mxu0 0
      %176 = vmatpush.bf16.xpose.msra.mxu0 0
      %177 = vmatpush.bf16.xpose.msra.mxu0 0
      %178 = vmatpush.bf16.xpose.msra.mxu0 0
      %179 = vmatpush.bf16.xpose.msra.mxu0 0
      %180 = vmatpush.bf16.xpose.msra.mxu0 0
      %181 = vmatpush.bf16.xpose.msra.mxu0 0
      %182 = vmatpush.bf16.xpose.msra.mxu0 %v173
      %183 = vmatmul.bf16.gmra.mxu0 %v170
      %v184 = vpop.f32.mrf.mxu0
      %v185 = vadd.f32 %v153, %v184
      %v186 = vpop.f32.mrf.mxu0
      %v187 = vadd.f32 %v154, %v186
      %188 = vdwg.mxu0
      %v191 = vunpack.c.l.b16 %v147
      %v192 = vunpack.c.l.b16 %v148
      %v193 = vpack.c.b16 %v192, %v191
      %194 = vrot.lane.b32.xlu0 %v193, 96
      %v195 = vpop.permute.xlu0 %194
      %v197 = vsel %vm168, %v193, 0
      %v200 = vsel %vm168, %v195, 0
      %202 = vmatpush.bf16.xpose.msra.mxu0 0
      %203 = vmatpush.bf16.xpose.msra.mxu0 0
      %204 = vmatpush.bf16.xpose.msra.mxu0 0
      %205 = vmatpush.bf16.xpose.msra.mxu0 0
      %206 = vmatpush.bf16.xpose.msra.mxu0 0
      %207 = vmatpush.bf16.xpose.msra.mxu0 0
      %208 = vmatpush.bf16.xpose.msra.mxu0 0
      %209 = vmatpush.bf16.xpose.msra.mxu0 %v200
      %210 = vmatmul.bf16.gmra.mxu0 %v197
      %v211 = vpop.f32.mrf.mxu0
      %v212 = vadd.f32 %v155, %v211
      %v213 = vpop.f32.mrf.mxu0
      %v214 = vadd.f32 %v156, %v213
      %215 = vdwg.mxu0
      %v218 = vunpack.c.l.b16 %v149
      %v219 = vunpack.c.l.b16 %v150
      %v220 = vpack.c.b16 %v219, %v218
      %221 = vrot.lane.b32.xlu0 %v220, 96
      %v222 = vpop.permute.xlu0 %221
      %v224 = vsel %vm168, %v220, 0
      %v227 = vsel %vm168, %v222, 0
      %229 = vmatpush.bf16.xpose.msra.mxu0 0
      %230 = vmatpush.bf16.xpose.msra.mxu0 0
      %231 = vmatpush.bf16.xpose.msra.mxu0 0
      %232 = vmatpush.bf16.xpose.msra.mxu0 0
      %233 = vmatpush.bf16.xpose.msra.mxu0 0
      %234 = vmatpush.bf16.xpose.msra.mxu0 0
      %235 = vmatpush.bf16.xpose.msra.mxu0 0
      %236 = vmatpush.bf16.xpose.msra.mxu0 %v227
      %237 = vmatmul.bf16.gmra.mxu0 %v224
      %v238 = vpop.f32.mrf.mxu0
      %v239 = vadd.f32 %v157, %v238
      %v240 = vpop.f32.mrf.mxu0
      %v241 = vadd.f32 %v158, %v240
      %242 = vdwg.mxu0
      %v245 = vunpack.c.l.b16 %v151
      %v246 = vunpack.c.l.b16 %v152
      %v247 = vpack.c.b16 %v246, %v245
      %248 = vrot.lane.b32.xlu0 %v247, 96
      %v249 = vpop.permute.xlu0 %248
      %v251 = vsel %vm168, %v247, 0
      %v254 = vsel %vm168, %v249, 0
      %256 = vmatpush.bf16.xpose.msra.mxu0 0
      %257 = vmatpush.bf16.xpose.msra.mxu0 0
      %258 = vmatpush.bf16.xpose.msra.mxu0 0
      %259 = vmatpush.bf16.xpose.msra.mxu0 0
      %260 = vmatpush.bf16.xpose.msra.mxu0 0
      %261 = vmatpush.bf16.xpose.msra.mxu0 0
      %262 = vmatpush.bf16.xpose.msra.mxu0 0
      %263 = vmatpush.bf16.xpose.msra.mxu0 %v254
      %264 = vmatmul.bf16.gmra.mxu0 %v251
      %v265 = vpop.f32.mrf.mxu0
      %v266 = vadd.f32 %v159, %v265
      %v267 = vpop.f32.mrf.mxu0
      %v268 = vadd.f32 %v160, %v267
      %269 = vdwg.mxu0
      %vm270 = vcmask 130048
      %v271 = vsel %vm270, %v185, -inf
      %272 = vmax.xlane.f32.xlu0 %v271
      %v273 = vpop.xlane.xlu0 %272
      %v274 = vsel %vm270, %v187, -inf
      %275 = vmax.xlane.f32.xlu0 %v274
      %v276 = vpop.xlane.xlu0 %275
      %v277 = vsel %vm270, %v212, -inf
      %278 = vmax.xlane.f32.xlu0 %v277
      %v279 = vpop.xlane.xlu0 %278
      %v280 = vsel %vm270, %v214, -inf
      %281 = vmax.xlane.f32.xlu0 %v280
      %v282 = vpop.xlane.xlu0 %281
      %v283 = vsel %vm270, %v239, -inf
      %284 = vmax.xlane.f32.xlu0 %v283
      %v285 = vpop.xlane.xlu0 %284
      %v286 = vsel %vm270, %v241, -inf
      %287 = vmax.xlane.f32.xlu0 %v286
      %v288 = vpop.xlane.xlu0 %287
      %v289 = vsel %vm270, %v266, -inf
      %290 = vmax.xlane.f32.xlu0 %v289
      %v291 = vpop.xlane.xlu0 %290
      %v292 = vsel %vm270, %v268, -inf
      %293 = vmax.xlane.f32.xlu0 %v292
      %v294 = vpop.xlane.xlu0 %293
      %v295 = vsub.f32 %v185, %v273
      %v296 = vsub.f32 %v187, %v276
      %v297 = vsub.f32 %v212, %v279
      %v298 = vsub.f32 %v214, %v282
      %v299 = vsub.f32 %v239, %v285
      %v300 = vsub.f32 %v241, %v288
      %v301 = vsub.f32 %v266, %v291
      %v302 = vsub.f32 %v268, %v294
      %v303 = vmul.f32 %v295, 1.442695
      %v304 = vpow.pop %v303
      %v305 = vmul.f32 %v296, 1.442695
      %v306 = vpow.pop %v305
      %v307 = vmul.f32 %v297, 1.442695
      %v308 = vpow.pop %v307
      %v309 = vmul.f32 %v298, 1.442695
      %v310 = vpow.pop %v309
      %v311 = vmul.f32 %v299, 1.442695
      %v312 = vpow.pop %v311
      %v313 = vmul.f32 %v300, 1.442695
      %v314 = vpow.pop %v313
      %v315 = vmul.f32 %v301, 1.442695
      %v316 = vpow.pop %v315
      %v317 = vmul.f32 %v302, 1.442695
      %v318 = vpow.pop %v317
      %v319 = vsel %vm270, %v304, 0.0
      %320 = vadd.xlane.f32.xlu0 %v319
      %v321 = vpop.xlane.xlu0 %320
      %v322 = vsel %vm270, %v306, 0.0
      %323 = vadd.xlane.f32.xlu0 %v322
      %v324 = vpop.xlane.xlu0 %323
      %v325 = vsel %vm270, %v308, 0.0
      %326 = vadd.xlane.f32.xlu0 %v325
      %v327 = vpop.xlane.xlu0 %326
      %v328 = vsel %vm270, %v310, 0.0
      %329 = vadd.xlane.f32.xlu0 %v328
      %v330 = vpop.xlane.xlu0 %329
      %v331 = vsel %vm270, %v312, 0.0
      %332 = vadd.xlane.f32.xlu0 %v331
      %v333 = vpop.xlane.xlu0 %332
      %v334 = vsel %vm270, %v314, 0.0
      %335 = vadd.xlane.f32.xlu0 %v334
      %v336 = vpop.xlane.xlu0 %335
      %v337 = vsel %vm270, %v316, 0.0
      %338 = vadd.xlane.f32.xlu0 %v337
      %v339 = vpop.xlane.xlu0 %338
      %v340 = vsel %vm270, %v318, 0.0
      %341 = vadd.xlane.f32.xlu0 %v340
      %v342 = vpop.xlane.xlu0 %341
      %v343 = vrcp.pop %v321
      %v344 = vrcp.pop %v324
      %v345 = vrcp.pop %v327
      %v346 = vrcp.pop %v330
      %v347 = vrcp.pop %v333
      %v348 = vrcp.pop %v336
      %v349 = vrcp.pop %v339
      %v350 = vrcp.pop %v342
      %v351 = vmul.f32 %v304, %v343
      %v352 = vmul.f32 %v306, %v344
      %v353 = vmul.f32 %v308, %v345
      %v354 = vmul.f32 %v310, %v346
      %v355 = vmul.f32 %v312, %v347
      %v356 = vmul.f32 %v314, %v348
      %v357 = vmul.f32 %v316, %v349
      %v358 = vmul.f32 %v318, %v350
      %v359 = vpack.c.bf16 %v351, %v351
      %v360 = vpack.c.bf16 %v352, %v352
      %v361 = vpack.c.bf16 %v353, %v353
      %v362 = vpack.c.bf16 %v354, %v354
      %v363 = vpack.c.bf16 %v355, %v355
      %v364 = vpack.c.bf16 %v356, %v356
      %v365 = vpack.c.bf16 %v357, %v357
      %v366 = vpack.c.bf16 %v358, %v358
      %v369 = vunpack.c.l.b16 %v359
      %v370 = vunpack.c.l.b16 %v360
      %v371 = vpack.c.b16 %v370, %v369
      %372 = vrot.lane.b32.xlu0 %v165, 64
      %v373 = vpop.permute.xlu0 %372
      %v376 = vsel %vm270, %v371, 0
      %378 = vmatpush.bf16.msra.mxu0 0
      %379 = vmatpush.bf16.msra.mxu0 0
      %380 = vmatpush.bf16.msra.mxu0 0
      %381 = vmatpush.bf16.msra.mxu0 0
      %382 = vmatpush.bf16.msra.mxu0 0
      %383 = vmatpush.bf16.msra.mxu0 0
      %384 = vmatpush.bf16.msra.mxu0 0
      %385 = vmatpush.bf16.msra.mxu0 %v373
      %386 = vmatmul.bf16.gmra.mxu0 %v376
      %v387 = vpop.f32.mrf.mxu0
      %v388 = vadd.f32 0.0, %v387
      %v389 = vpop.f32.mrf.mxu0
      %v390 = vadd.f32 0.0, %v389
      %391 = vdwg.mxu0
      %v394 = vunpack.c.l.b16 %v361
      %v395 = vunpack.c.l.b16 %v362
      %v396 = vpack.c.b16 %v395, %v394
      %397 = vrot.lane.b32.xlu0 %v193, 64
      %v398 = vpop.permute.xlu0 %397
      %v401 = vsel %vm270, %v396, 0
      %403 = vmatpush.bf16.msra.mxu0 0
      %404 = vmatpush.bf16.msra.mxu0 0
      %405 = vmatpush.bf16.msra.mxu0 0
      %406 = vmatpush.bf16.msra.mxu0 0
      %407 = vmatpush.bf16.msra.mxu0 0
      %408 = vmatpush.bf16.msra.mxu0 0
      %409 = vmatpush.bf16.msra.mxu0 0
      %410 = vmatpush.bf16.msra.mxu0 %v398
      %411 = vmatmul.bf16.gmra.mxu0 %v401
      %v412 = vpop.f32.mrf.mxu0
      %v413 = vadd.f32 0.0, %v412
      %v414 = vpop.f32.mrf.mxu0
      %v415 = vadd.f32 0.0, %v414
      %416 = vdwg.mxu0
      %v419 = vunpack.c.l.b16 %v363
      %v420 = vunpack.c.l.b16 %v364
      %v421 = vpack.c.b16 %v420, %v419
      %422 = vrot.lane.b32.xlu0 %v220, 64
      %v423 = vpop.permute.xlu0 %422
      %v426 = vsel %vm270, %v421, 0
      %428 = vmatpush.bf16.msra.mxu0 0
      %429 = vmatpush.bf16.msra.mxu0 0
      %430 = vmatpush.bf16.msra.mxu0 0
      %431 = vmatpush.bf16.msra.mxu0 0
      %432 = vmatpush.bf16.msra.mxu0 0
      %433 = vmatpush.bf16.msra.mxu0 0
      %434 = vmatpush.bf16.msra.mxu0 0
      %435 = vmatpush.bf16.msra.mxu0 %v423
      %436 = vmatmul.bf16.gmra.mxu0 %v426
      %v437 = vpop.f32.mrf.mxu0
      %v438 = vadd.f32 0.0, %v437
      %v439 = vpop.f32.mrf.mxu0
      %v440 = vadd.f32 0.0, %v439
      %441 = vdwg.mxu0
      %v444 = vunpack.c.l.b16 %v365
      %v445 = vunpack.c.l.b16 %v366
      %v446 = vpack.c.b16 %v445, %v444
      %447 = vrot.lane.b32.xlu0 %v247, 64
      %v448 = vpop.permute.xlu0 %447
      %v451 = vsel %vm270, %v446, 0
      %453 = vmatpush.bf16.msra.mxu0 0
      %454 = vmatpush.bf16.msra.mxu0 0
      %455 = vmatpush.bf16.msra.mxu0 0
      %456 = vmatpush.bf16.msra.mxu0 0
      %457 = vmatpush.bf16.msra.mxu0 0
      %458 = vmatpush.bf16.msra.mxu0 0
      %459 = vmatpush.bf16.msra.mxu0 0
      %460 = vmatpush.bf16.msra.mxu0 %v448
      %461 = vmatmul.bf16.gmra.mxu0 %v451
      %v462 = vpop.f32.mrf.mxu0
      %v463 = vadd.f32 0.0, %v462
      %v464 = vpop.f32.mrf.mxu0
      %v465 = vadd.f32 0.0, %v464
      %466 = vdwg.mxu0
      %467 = vrot.lane.b32.xlu0 %v165, 120
      %v468 = vpop.permute.xlu0 %467
      %469 = vrot.lane.b32.xlu0 %v165, 88
      %v470 = vpop.permute.xlu0 %469
      %v472 = vsel %vm168, %v468, 0
      %v475 = vsel %vm168, %v470, 0
      %477 = vmatpush.bf16.xpose.msra.mxu0 0
      %478 = vmatpush.bf16.xpose.msra.mxu0 0
      %479 = vmatpush.bf16.xpose.msra.mxu0 0
      %480 = vmatpush.bf16.xpose.msra.mxu0 0
      %481 = vmatpush.bf16.xpose.msra.mxu0 0
      %482 = vmatpush.bf16.xpose.msra.mxu0 0
      %483 = vmatpush.bf16.xpose.msra.mxu0 0
      %484 = vmatpush.bf16.xpose.msra.mxu0 %v475
      %485 = vmatmul.bf16.gmra.mxu0 %v472
      %v486 = vpop.f32.mrf.mxu0
      %v487 = vadd.f32 %v153, %v486
      %v488 = vpop.f32.mrf.mxu0
      %v489 = vadd.f32 %v154, %v488
      %490 = vdwg.mxu0
      %491 = vrot.lane.b32.xlu0 %v193, 120
      %v492 = vpop.permute.xlu0 %491
      %493 = vrot.lane.b32.xlu0 %v193, 88
      %v494 = vpop.permute.xlu0 %493
      %v496 = vsel %vm168, %v492, 0
      %v499 = vsel %vm168, %v494, 0
      %501 = vmatpush.bf16.xpose.msra.mxu0 0
      %502 = vmatpush.bf16.xpose.msra.mxu0 0
      %503 = vmatpush.bf16.xpose.msra.mxu0 0
      %504 = vmatpush.bf16.xpose.msra.mxu0 0
      %505 = vmatpush.bf16.xpose.msra.mxu0 0
      %506 = vmatpush.bf16.xpose.msra.mxu0 0
      %507 = vmatpush.bf16.xpose.msra.mxu0 0
      %508 = vmatpush.bf16.xpose.msra.mxu0 %v499
      %509 = vmatmul.bf16.gmra.mxu0 %v496
      %v510 = vpop.f32.mrf.mxu0
      %v511 = vadd.f32 %v155, %v510
      %v512 = vpop.f32.mrf.mxu0
      %v513 = vadd.f32 %v156, %v512
      %514 = vdwg.mxu0
      %515 = vrot.lane.b32.xlu0 %v220, 120
      %v516 = vpop.permute.xlu0 %515
      %517 = vrot.lane.b32.xlu0 %v220, 88
      %v518 = vpop.permute.xlu0 %517
      %v520 = vsel %vm168, %v516, 0
      %v523 = vsel %vm168, %v518, 0
      %525 = vmatpush.bf16.xpose.msra.mxu0 0
      %526 = vmatpush.bf16.xpose.msra.mxu0 0
      %527 = vmatpush.bf16.xpose.msra.mxu0 0
      %528 = vmatpush.bf16.xpose.msra.mxu0 0
      %529 = vmatpush.bf16.xpose.msra.mxu0 0
      %530 = vmatpush.bf16.xpose.msra.mxu0 0
      %531 = vmatpush.bf16.xpose.msra.mxu0 0
      %532 = vmatpush.bf16.xpose.msra.mxu0 %v523
      %533 = vmatmul.bf16.gmra.mxu0 %v520
      %v534 = vpop.f32.mrf.mxu0
      %v535 = vadd.f32 %v157, %v534
      %v536 = vpop.f32.mrf.mxu0
      %v537 = vadd.f32 %v158, %v536
      %538 = vdwg.mxu0
      %539 = vrot.lane.b32.xlu0 %v247, 120
      %v540 = vpop.permute.xlu0 %539
      %541 = vrot.lane.b32.xlu0 %v247, 88
      %v542 = vpop.permute.xlu0 %541
      %v544 = vsel %vm168, %v540, 0
      %v547 = vsel %vm168, %v542, 0
      %549 = vmatpush.bf16.xpose.msra.mxu0 0
      %550 = vmatpush.bf16.xpose.msra.mxu0 0
      %551 = vmatpush.bf16.xpose.msra.mxu0 0
      %552 = vmatpush.bf16.xpose.msra.mxu0 0
      %553 = vmatpush.bf16.xpose.msra.mxu0 0
      %554 = vmatpush.bf16.xpose.msra.mxu0 0
      %555 = vmatpush.bf16.xpose.msra.mxu0 0
      %556 = vmatpush.bf16.xpose.msra.mxu0 %v547
      %557 = vmatmul.bf16.gmra.mxu0 %v544
      %v558 = vpop.f32.mrf.mxu0
      %v559 = vadd.f32 %v159, %v558
      %v560 = vpop.f32.mrf.mxu0
      %v561 = vadd.f32 %v160, %v560
      %562 = vdwg.mxu0
      %v563 = vsel %vm270, %v487, -inf
      %564 = vmax.xlane.f32.xlu0 %v563
      %v565 = vpop.xlane.xlu0 %564
      %v566 = vsel %vm270, %v489, -inf
      %567 = vmax.xlane.f32.xlu0 %v566
      %v568 = vpop.xlane.xlu0 %567
      %v569 = vsel %vm270, %v511, -inf
      %570 = vmax.xlane.f32.xlu0 %v569
      %v571 = vpop.xlane.xlu0 %570
      %v572 = vsel %vm270, %v513, -inf
      %573 = vmax.xlane.f32.xlu0 %v572
      %v574 = vpop.xlane.xlu0 %573
      %v575 = vsel %vm270, %v535, -inf
      %576 = vmax.xlane.f32.xlu0 %v575
      %v577 = vpop.xlane.xlu0 %576
      %v578 = vsel %vm270, %v537, -inf
      %579 = vmax.xlane.f32.xlu0 %v578
      %v580 = vpop.xlane.xlu0 %579
      %v581 = vsel %vm270, %v559, -inf
      %582 = vmax.xlane.f32.xlu0 %v581
      %v583 = vpop.xlane.xlu0 %582
      %v584 = vsel %vm270, %v561, -inf
      %585 = vmax.xlane.f32.xlu0 %v584
      %v586 = vpop.xlane.xlu0 %585
      %v587 = vsub.f32 %v487, %v565
      %v588 = vsub.f32 %v489, %v568
      %v589 = vsub.f32 %v511, %v571
      %v590 = vsub.f32 %v513, %v574
      %v591 = vsub.f32 %v535, %v577
      %v592 = vsub.f32 %v537, %v580
      %v593 = vsub.f32 %v559, %v583
      %v594 = vsub.f32 %v561, %v586
      %v595 = vmul.f32 %v587, 1.442695
      %v596 = vpow.pop %v595
      %v597 = vmul.f32 %v588, 1.442695
      %v598 = vpow.pop %v597
      %v599 = vmul.f32 %v589, 1.442695
      %v600 = vpow.pop %v599
      %v601 = vmul.f32 %v590, 1.442695
      %v602 = vpow.pop %v601
      %v603 = vmul.f32 %v591, 1.442695
      %v604 = vpow.pop %v603
      %v605 = vmul.f32 %v592, 1.442695
      %v606 = vpow.pop %v605
      %v607 = vmul.f32 %v593, 1.442695
      %v608 = vpow.pop %v607
      %v609 = vmul.f32 %v594, 1.442695
      %v610 = vpow.pop %v609
      %v611 = vsel %vm270, %v596, 0.0
      %612 = vadd.xlane.f32.xlu0 %v611
      %v613 = vpop.xlane.xlu0 %612
      %v614 = vsel %vm270, %v598, 0.0
      %615 = vadd.xlane.f32.xlu0 %v614
      %v616 = vpop.xlane.xlu0 %615
      %v617 = vsel %vm270, %v600, 0.0
      %618 = vadd.xlane.f32.xlu0 %v617
      %v619 = vpop.xlane.xlu0 %618
      %v620 = vsel %vm270, %v602, 0.0
      %621 = vadd.xlane.f32.xlu0 %v620
      %v622 = vpop.xlane.xlu0 %621
      %v623 = vsel %vm270, %v604, 0.0
      %624 = vadd.xlane.f32.xlu0 %v623
      %v625 = vpop.xlane.xlu0 %624
      %v626 = vsel %vm270, %v606, 0.0
      %627 = vadd.xlane.f32.xlu0 %v626
      %v628 = vpop.xlane.xlu0 %627
      %v629 = vsel %vm270, %v608, 0.0
      %630 = vadd.xlane.f32.xlu0 %v629
      %v631 = vpop.xlane.xlu0 %630
      %v632 = vsel %vm270, %v610, 0.0
      %633 = vadd.xlane.f32.xlu0 %v632
      %v634 = vpop.xlane.xlu0 %633
      %v635 = vrcp.pop %v613
      %v636 = vrcp.pop %v616
      %v637 = vrcp.pop %v619
      %v638 = vrcp.pop %v622
      %v639 = vrcp.pop %v625
      %v640 = vrcp.pop %v628
      %v641 = vrcp.pop %v631
      %v642 = vrcp.pop %v634
      %v643 = vmul.f32 %v596, %v635
      %v644 = vmul.f32 %v598, %v636
      %v645 = vmul.f32 %v600, %v637
      %v646 = vmul.f32 %v602, %v638
      %v647 = vmul.f32 %v604, %v639
      %v648 = vmul.f32 %v606, %v640
      %v649 = vmul.f32 %v608, %v641
      %v650 = vmul.f32 %v610, %v642
      %v651 = vpack.c.bf16 %v643, %v643
      %v652 = vpack.c.bf16 %v644, %v644
      %v653 = vpack.c.bf16 %v645, %v645
      %v654 = vpack.c.bf16 %v646, %v646
      %v655 = vpack.c.bf16 %v647, %v647
      %v656 = vpack.c.bf16 %v648, %v648
      %v657 = vpack.c.bf16 %v649, %v649
      %v658 = vpack.c.bf16 %v650, %v650
      %v661 = vunpack.c.l.b16 %v651
      %v662 = vunpack.c.l.b16 %v652
      %v663 = vpack.c.b16 %v662, %v661
      %664 = vrot.lane.b32.xlu0 %v165, 56
      %v665 = vpop.permute.xlu0 %664
      %v668 = vsel %vm270, %v663, 0
      %670 = vmatpush.bf16.msra.mxu0 0
      %671 = vmatpush.bf16.msra.mxu0 0
      %672 = vmatpush.bf16.msra.mxu0 0
      %673 = vmatpush.bf16.msra.mxu0 0
      %674 = vmatpush.bf16.msra.mxu0 0
      %675 = vmatpush.bf16.msra.mxu0 0
      %676 = vmatpush.bf16.msra.mxu0 0
      %677 = vmatpush.bf16.msra.mxu0 %v665
      %678 = vmatmul.bf16.gmra.mxu0 %v668
      %v679 = vpop.f32.mrf.mxu0
      %v680 = vadd.f32 0.0, %v679
      %v681 = vpop.f32.mrf.mxu0
      %v682 = vadd.f32 0.0, %v681
      %683 = vdwg.mxu0
      %v686 = vunpack.c.l.b16 %v653
      %v687 = vunpack.c.l.b16 %v654
      %v688 = vpack.c.b16 %v687, %v686
      %689 = vrot.lane.b32.xlu0 %v193, 56
      %v690 = vpop.permute.xlu0 %689
      %v693 = vsel %vm270, %v688, 0
      %695 = vmatpush.bf16.msra.mxu0 0
      %696 = vmatpush.bf16.msra.mxu0 0
      %697 = vmatpush.bf16.msra.mxu0 0
      %698 = vmatpush.bf16.msra.mxu0 0
      %699 = vmatpush.bf16.msra.mxu0 0
      %700 = vmatpush.bf16.msra.mxu0 0
      %701 = vmatpush.bf16.msra.mxu0 0
      %702 = vmatpush.bf16.msra.mxu0 %v690
      %703 = vmatmul.bf16.gmra.mxu0 %v693
      %v704 = vpop.f32.mrf.mxu0
      %v705 = vadd.f32 0.0, %v704
      %v706 = vpop.f32.mrf.mxu0
      %v707 = vadd.f32 0.0, %v706
      %708 = vdwg.mxu0
      %v711 = vunpack.c.l.b16 %v655
      %v712 = vunpack.c.l.b16 %v656
      %v713 = vpack.c.b16 %v712, %v711
      %714 = vrot.lane.b32.xlu0 %v220, 56
      %v715 = vpop.permute.xlu0 %714
      %v718 = vsel %vm270, %v713, 0
      %720 = vmatpush.bf16.msra.mxu0 0
      %721 = vmatpush.bf16.msra.mxu0 0
      %722 = vmatpush.bf16.msra.mxu0 0
      %723 = vmatpush.bf16.msra.mxu0 0
      %724 = vmatpush.bf16.msra.mxu0 0
      %725 = vmatpush.bf16.msra.mxu0 0
      %726 = vmatpush.bf16.msra.mxu0 0
      %727 = vmatpush.bf16.msra.mxu0 %v715
      %728 = vmatmul.bf16.gmra.mxu0 %v718
      %v729 = vpop.f32.mrf.mxu0
      %v730 = vadd.f32 0.0, %v729
      %v731 = vpop.f32.mrf.mxu0
      %v732 = vadd.f32 0.0, %v731
      %733 = vdwg.mxu0
      %v736 = vunpack.c.l.b16 %v657
      %v737 = vunpack.c.l.b16 %v658
      %v738 = vpack.c.b16 %v737, %v736
      %739 = vrot.lane.b32.xlu0 %v247, 56
      %v740 = vpop.permute.xlu0 %739
      %v743 = vsel %vm270, %v738, 0
      %745 = vmatpush.bf16.msra.mxu0 0
      %746 = vmatpush.bf16.msra.mxu0 0
      %747 = vmatpush.bf16.msra.mxu0 0
      %748 = vmatpush.bf16.msra.mxu0 0
      %749 = vmatpush.bf16.msra.mxu0 0
      %750 = vmatpush.bf16.msra.mxu0 0
      %751 = vmatpush.bf16.msra.mxu0 0
      %752 = vmatpush.bf16.msra.mxu0 %v740
      %753 = vmatmul.bf16.gmra.mxu0 %v743
      %v754 = vpop.f32.mrf.mxu0
      %v755 = vadd.f32 0.0, %v754
      %v756 = vpop.f32.mrf.mxu0
      %v757 = vadd.f32 0.0, %v756
      %758 = vdwg.mxu0
      %759 = vrot.lane.b32.xlu0 %v165, 112
      %v760 = vpop.permute.xlu0 %759
      %761 = vrot.lane.b32.xlu0 %v165, 80
      %v762 = vpop.permute.xlu0 %761
      %v764 = vsel %vm168, %v760, 0
      %v767 = vsel %vm168, %v762, 0
      %769 = vmatpush.bf16.xpose.msra.mxu0 0
      %770 = vmatpush.bf16.xpose.msra.mxu0 0
      %771 = vmatpush.bf16.xpose.msra.mxu0 0
      %772 = vmatpush.bf16.xpose.msra.mxu0 0
      %773 = vmatpush.bf16.xpose.msra.mxu0 0
      %774 = vmatpush.bf16.xpose.msra.mxu0 0
      %775 = vmatpush.bf16.xpose.msra.mxu0 0
      %776 = vmatpush.bf16.xpose.msra.mxu0 %v767
      %777 = vmatmul.bf16.gmra.mxu0 %v764
      %v778 = vpop.f32.mrf.mxu0
      %v779 = vadd.f32 %v153, %v778
      %v780 = vpop.f32.mrf.mxu0
      %v781 = vadd.f32 %v154, %v780
      %782 = vdwg.mxu0
      %783 = vrot.lane.b32.xlu0 %v193, 112
      %v784 = vpop.permute.xlu0 %783
      %785 = vrot.lane.b32.xlu0 %v193, 80
      %v786 = vpop.permute.xlu0 %785
      %v788 = vsel %vm168, %v784, 0
      %v791 = vsel %vm168, %v786, 0
      %793 = vmatpush.bf16.xpose.msra.mxu0 0
      %794 = vmatpush.bf16.xpose.msra.mxu0 0
      %795 = vmatpush.bf16.xpose.msra.mxu0 0
      %796 = vmatpush.bf16.xpose.msra.mxu0 0
      %797 = vmatpush.bf16.xpose.msra.mxu0 0
      %798 = vmatpush.bf16.xpose.msra.mxu0 0
      %799 = vmatpush.bf16.xpose.msra.mxu0 0
      %800 = vmatpush.bf16.xpose.msra.mxu0 %v791
      %801 = vmatmul.bf16.gmra.mxu0 %v788
      %v802 = vpop.f32.mrf.mxu0
      %v803 = vadd.f32 %v155, %v802
      %v804 = vpop.f32.mrf.mxu0
      %v805 = vadd.f32 %v156, %v804
      %806 = vdwg.mxu0
      %807 = vrot.lane.b32.xlu0 %v220, 112
      %v808 = vpop.permute.xlu0 %807
      %809 = vrot.lane.b32.xlu0 %v220, 80
      %v810 = vpop.permute.xlu0 %809
      %v812 = vsel %vm168, %v808, 0
      %v815 = vsel %vm168, %v810, 0
      %817 = vmatpush.bf16.xpose.msra.mxu0 0
      %818 = vmatpush.bf16.xpose.msra.mxu0 0
      %819 = vmatpush.bf16.xpose.msra.mxu0 0
      %820 = vmatpush.bf16.xpose.msra.mxu0 0
      %821 = vmatpush.bf16.xpose.msra.mxu0 0
      %822 = vmatpush.bf16.xpose.msra.mxu0 0
      %823 = vmatpush.bf16.xpose.msra.mxu0 0
      %824 = vmatpush.bf16.xpose.msra.mxu0 %v815
      %825 = vmatmul.bf16.gmra.mxu0 %v812
      %v826 = vpop.f32.mrf.mxu0
      %v827 = vadd.f32 %v157, %v826
      %v828 = vpop.f32.mrf.mxu0
      %v829 = vadd.f32 %v158, %v828
      %830 = vdwg.mxu0
      %831 = vrot.lane.b32.xlu0 %v247, 112
      %v832 = vpop.permute.xlu0 %831
      %833 = vrot.lane.b32.xlu0 %v247, 80
      %v834 = vpop.permute.xlu0 %833
      %v836 = vsel %vm168, %v832, 0
      %v839 = vsel %vm168, %v834, 0
      %841 = vmatpush.bf16.xpose.msra.mxu0 0
      %842 = vmatpush.bf16.xpose.msra.mxu0 0
      %843 = vmatpush.bf16.xpose.msra.mxu0 0
      %844 = vmatpush.bf16.xpose.msra.mxu0 0
      %845 = vmatpush.bf16.xpose.msra.mxu0 0
      %846 = vmatpush.bf16.xpose.msra.mxu0 0
      %847 = vmatpush.bf16.xpose.msra.mxu0 0
      %848 = vmatpush.bf16.xpose.msra.mxu0 %v839
      %849 = vmatmul.bf16.gmra.mxu0 %v836
      %v850 = vpop.f32.mrf.mxu0
      %v851 = vadd.f32 %v159, %v850
      %v852 = vpop.f32.mrf.mxu0
      %v853 = vadd.f32 %v160, %v852
      %854 = vdwg.mxu0
      %v855 = vsel %vm270, %v779, -inf
      %856 = vmax.xlane.f32.xlu0 %v855
      %v857 = vpop.xlane.xlu0 %856
      %v858 = vsel %vm270, %v781, -inf
      %859 = vmax.xlane.f32.xlu0 %v858
      %v860 = vpop.xlane.xlu0 %859
      %v861 = vsel %vm270, %v803, -inf
      %862 = vmax.xlane.f32.xlu0 %v861
      %v863 = vpop.xlane.xlu0 %862
      %v864 = vsel %vm270, %v805, -inf
      %865 = vmax.xlane.f32.xlu0 %v864
      %v866 = vpop.xlane.xlu0 %865
      %v867 = vsel %vm270, %v827, -inf
      %868 = vmax.xlane.f32.xlu0 %v867
      %v869 = vpop.xlane.xlu0 %868
      %v870 = vsel %vm270, %v829, -inf
      %871 = vmax.xlane.f32.xlu0 %v870
      %v872 = vpop.xlane.xlu0 %871
      %v873 = vsel %vm270, %v851, -inf
      %874 = vmax.xlane.f32.xlu0 %v873
      %v875 = vpop.xlane.xlu0 %874
      %v876 = vsel %vm270, %v853, -inf
      %877 = vmax.xlane.f32.xlu0 %v876
      %v878 = vpop.xlane.xlu0 %877
      %v879 = vsub.f32 %v779, %v857
      %v880 = vsub.f32 %v781, %v860
      %v881 = vsub.f32 %v803, %v863
      %v882 = vsub.f32 %v805, %v866
      %v883 = vsub.f32 %v827, %v869
      %v884 = vsub.f32 %v829, %v872
      %v885 = vsub.f32 %v851, %v875
      %v886 = vsub.f32 %v853, %v878
      %v887 = vmul.f32 %v879, 1.442695
      %v888 = vpow.pop %v887
      %v889 = vmul.f32 %v880, 1.442695
      %v890 = vpow.pop %v889
      %v891 = vmul.f32 %v881, 1.442695
      %v892 = vpow.pop %v891
      %v893 = vmul.f32 %v882, 1.442695
      %v894 = vpow.pop %v893
      %v895 = vmul.f32 %v883, 1.442695
      %v896 = vpow.pop %v895
      %v897 = vmul.f32 %v884, 1.442695
      %v898 = vpow.pop %v897
      %v899 = vmul.f32 %v885, 1.442695
      %v900 = vpow.pop %v899
      %v901 = vmul.f32 %v886, 1.442695
      %v902 = vpow.pop %v901
      %v903 = vsel %vm270, %v888, 0.0
      %904 = vadd.xlane.f32.xlu0 %v903
      %v905 = vpop.xlane.xlu0 %904
      %v906 = vsel %vm270, %v890, 0.0
      %907 = vadd.xlane.f32.xlu0 %v906
      %v908 = vpop.xlane.xlu0 %907
      %v909 = vsel %vm270, %v892, 0.0
      %910 = vadd.xlane.f32.xlu0 %v909
      %v911 = vpop.xlane.xlu0 %910
      %v912 = vsel %vm270, %v894, 0.0
      %913 = vadd.xlane.f32.xlu0 %v912
      %v914 = vpop.xlane.xlu0 %913
      %v915 = vsel %vm270, %v896, 0.0
      %916 = vadd.xlane.f32.xlu0 %v915
      %v917 = vpop.xlane.xlu0 %916
      %v918 = vsel %vm270, %v898, 0.0
      %919 = vadd.xlane.f32.xlu0 %v918
      %v920 = vpop.xlane.xlu0 %919
      %v921 = vsel %vm270, %v900, 0.0
      %922 = vadd.xlane.f32.xlu0 %v921
      %v923 = vpop.xlane.xlu0 %922
      %v924 = vsel %vm270, %v902, 0.0
      %925 = vadd.xlane.f32.xlu0 %v924
      %v926 = vpop.xlane.xlu0 %925
      %v927 = vrcp.pop %v905
      %v928 = vrcp.pop %v908
      %v929 = vrcp.pop %v911
      %v930 = vrcp.pop %v914
      %v931 = vrcp.pop %v917
      %v932 = vrcp.pop %v920
      %v933 = vrcp.pop %v923
      %v934 = vrcp.pop %v926
      %v935 = vmul.f32 %v888, %v927
      %v936 = vmul.f32 %v890, %v928
      %v937 = vmul.f32 %v892, %v929
      %v938 = vmul.f32 %v894, %v930
      %v939 = vmul.f32 %v896, %v931
      %v940 = vmul.f32 %v898, %v932
      %v941 = vmul.f32 %v900, %v933
      %v942 = vmul.f32 %v902, %v934
      %v943 = vpack.c.bf16 %v935, %v935
      %v944 = vpack.c.bf16 %v936, %v936
      %v945 = vpack.c.bf16 %v937, %v937
      %v946 = vpack.c.bf16 %v938, %v938
      %v947 = vpack.c.bf16 %v939, %v939
      %v948 = vpack.c.bf16 %v940, %v940
      %v949 = vpack.c.bf16 %v941, %v941
      %v950 = vpack.c.bf16 %v942, %v942
      %v953 = vunpack.c.l.b16 %v943
      %v954 = vunpack.c.l.b16 %v944
      %v955 = vpack.c.b16 %v954, %v953
      %956 = vrot.lane.b32.xlu0 %v165, 48
      %v957 = vpop.permute.xlu0 %956
      %v960 = vsel %vm270, %v955, 0
      %962 = vmatpush.bf16.msra.mxu0 0
      %963 = vmatpush.bf16.msra.mxu0 0
      %964 = vmatpush.bf16.msra.mxu0 0
      %965 = vmatpush.bf16.msra.mxu0 0
      %966 = vmatpush.bf16.msra.mxu0 0
      %967 = vmatpush.bf16.msra.mxu0 0
      %968 = vmatpush.bf16.msra.mxu0 0
      %969 = vmatpush.bf16.msra.mxu0 %v957
      %970 = vmatmul.bf16.gmra.mxu0 %v960
      %v971 = vpop.f32.mrf.mxu0
      %v972 = vadd.f32 0.0, %v971
      %v973 = vpop.f32.mrf.mxu0
      %v974 = vadd.f32 0.0, %v973
      %975 = vdwg.mxu0
      %v978 = vunpack.c.l.b16 %v945
      %v979 = vunpack.c.l.b16 %v946
      %v980 = vpack.c.b16 %v979, %v978
      %981 = vrot.lane.b32.xlu0 %v193, 48
      %v982 = vpop.permute.xlu0 %981
      %v985 = vsel %vm270, %v980, 0
      %987 = vmatpush.bf16.msra.mxu0 0
      %988 = vmatpush.bf16.msra.mxu0 0
      %989 = vmatpush.bf16.msra.mxu0 0
      %990 = vmatpush.bf16.msra.mxu0 0
      %991 = vmatpush.bf16.msra.mxu0 0
      %992 = vmatpush.bf16.msra.mxu0 0
      %993 = vmatpush.bf16.msra.mxu0 0
      %994 = vmatpush.bf16.msra.mxu0 %v982
      %995 = vmatmul.bf16.gmra.mxu0 %v985
      %v996 = vpop.f32.mrf.mxu0
      %v997 = vadd.f32 0.0, %v996
      %v998 = vpop.f32.mrf.mxu0
      %v999 = vadd.f32 0.0, %v998
      %1000 = vdwg.mxu0
      %v1003 = vunpack.c.l.b16 %v947
      %v1004 = vunpack.c.l.b16 %v948
      %v1005 = vpack.c.b16 %v1004, %v1003
      %1006 = vrot.lane.b32.xlu0 %v220, 48
      %v1007 = vpop.permute.xlu0 %1006
      %v1010 = vsel %vm270, %v1005, 0
      %1012 = vmatpush.bf16.msra.mxu0 0
      %1013 = vmatpush.bf16.msra.mxu0 0
      %1014 = vmatpush.bf16.msra.mxu0 0
      %1015 = vmatpush.bf16.msra.mxu0 0
      %1016 = vmatpush.bf16.msra.mxu0 0
      %1017 = vmatpush.bf16.msra.mxu0 0
      %1018 = vmatpush.bf16.msra.mxu0 0
      %1019 = vmatpush.bf16.msra.mxu0 %v1007
      %1020 = vmatmul.bf16.gmra.mxu0 %v1010
      %v1021 = vpop.f32.mrf.mxu0
      %v1022 = vadd.f32 0.0, %v1021
      %v1023 = vpop.f32.mrf.mxu0
      %v1024 = vadd.f32 0.0, %v1023
      %1025 = vdwg.mxu0
      %v1028 = vunpack.c.l.b16 %v949
      %v1029 = vunpack.c.l.b16 %v950
      %v1030 = vpack.c.b16 %v1029, %v1028
      %1031 = vrot.lane.b32.xlu0 %v247, 48
      %v1032 = vpop.permute.xlu0 %1031
      %v1035 = vsel %vm270, %v1030, 0
      %1037 = vmatpush.bf16.msra.mxu0 0
      %1038 = vmatpush.bf16.msra.mxu0 0
      %1039 = vmatpush.bf16.msra.mxu0 0
      %1040 = vmatpush.bf16.msra.mxu0 0
      %1041 = vmatpush.bf16.msra.mxu0 0
      %1042 = vmatpush.bf16.msra.mxu0 0
      %1043 = vmatpush.bf16.msra.mxu0 0
      %1044 = vmatpush.bf16.msra.mxu0 %v1032
      %1045 = vmatmul.bf16.gmra.mxu0 %v1035
      %v1046 = vpop.f32.mrf.mxu0
      %v1047 = vadd.f32 0.0, %v1046
      %v1048 = vpop.f32.mrf.mxu0
      %v1049 = vadd.f32 0.0, %v1048
      %1050 = vdwg.mxu0
      %1051 = vrot.lane.b32.xlu0 %v165, 104
      %v1052 = vpop.permute.xlu0 %1051
      %1053 = vrot.lane.b32.xlu0 %v165, 72
      %v1054 = vpop.permute.xlu0 %1053
      %v1056 = vsel %vm168, %v1052, 0
      %v1059 = vsel %vm168, %v1054, 0
      %1061 = vmatpush.bf16.xpose.msra.mxu0 0
      %1062 = vmatpush.bf16.xpose.msra.mxu0 0
      %1063 = vmatpush.bf16.xpose.msra.mxu0 0
      %1064 = vmatpush.bf16.xpose.msra.mxu0 0
      %1065 = vmatpush.bf16.xpose.msra.mxu0 0
      %1066 = vmatpush.bf16.xpose.msra.mxu0 0
      %1067 = vmatpush.bf16.xpose.msra.mxu0 0
      %1068 = vmatpush.bf16.xpose.msra.mxu0 %v1059
      %1069 = vmatmul.bf16.gmra.mxu0 %v1056
      %v1070 = vpop.f32.mrf.mxu0
      %v1071 = vadd.f32 %v153, %v1070
      %v1072 = vpop.f32.mrf.mxu0
      %v1073 = vadd.f32 %v154, %v1072
      %1074 = vdwg.mxu0
      %1075 = vrot.lane.b32.xlu0 %v193, 104
      %v1076 = vpop.permute.xlu0 %1075
      %1077 = vrot.lane.b32.xlu0 %v193, 72
      %v1078 = vpop.permute.xlu0 %1077
      %v1080 = vsel %vm168, %v1076, 0
      %v1083 = vsel %vm168, %v1078, 0
      %1085 = vmatpush.bf16.xpose.msra.mxu0 0
      %1086 = vmatpush.bf16.xpose.msra.mxu0 0
      %1087 = vmatpush.bf16.xpose.msra.mxu0 0
      %1088 = vmatpush.bf16.xpose.msra.mxu0 0
      %1089 = vmatpush.bf16.xpose.msra.mxu0 0
      %1090 = vmatpush.bf16.xpose.msra.mxu0 0
      %1091 = vmatpush.bf16.xpose.msra.mxu0 0
      %1092 = vmatpush.bf16.xpose.msra.mxu0 %v1083
      %1093 = vmatmul.bf16.gmra.mxu0 %v1080
      %v1094 = vpop.f32.mrf.mxu0
      %v1095 = vadd.f32 %v155, %v1094
      %v1096 = vpop.f32.mrf.mxu0
      %v1097 = vadd.f32 %v156, %v1096
      %1098 = vdwg.mxu0
      %1099 = vrot.lane.b32.xlu0 %v220, 104
      %v1100 = vpop.permute.xlu0 %1099
      %1101 = vrot.lane.b32.xlu0 %v220, 72
      %v1102 = vpop.permute.xlu0 %1101
      %v1104 = vsel %vm168, %v1100, 0
      %v1107 = vsel %vm168, %v1102, 0
      %1109 = vmatpush.bf16.xpose.msra.mxu0 0
      %1110 = vmatpush.bf16.xpose.msra.mxu0 0
      %1111 = vmatpush.bf16.xpose.msra.mxu0 0
      %1112 = vmatpush.bf16.xpose.msra.mxu0 0
      %1113 = vmatpush.bf16.xpose.msra.mxu0 0
      %1114 = vmatpush.bf16.xpose.msra.mxu0 0
      %1115 = vmatpush.bf16.xpose.msra.mxu0 0
      %1116 = vmatpush.bf16.xpose.msra.mxu0 %v1107
      %1117 = vmatmul.bf16.gmra.mxu0 %v1104
      %v1118 = vpop.f32.mrf.mxu0
      %v1119 = vadd.f32 %v157, %v1118
      %v1120 = vpop.f32.mrf.mxu0
      %v1121 = vadd.f32 %v158, %v1120
      %1122 = vdwg.mxu0
      %1123 = vrot.lane.b32.xlu0 %v247, 104
      %v1124 = vpop.permute.xlu0 %1123
      %1125 = vrot.lane.b32.xlu0 %v247, 72
      %v1126 = vpop.permute.xlu0 %1125
      %v1128 = vsel %vm168, %v1124, 0
      %v1131 = vsel %vm168, %v1126, 0
      %1133 = vmatpush.bf16.xpose.msra.mxu0 0
      %1134 = vmatpush.bf16.xpose.msra.mxu0 0
      %1135 = vmatpush.bf16.xpose.msra.mxu0 0
      %1136 = vmatpush.bf16.xpose.msra.mxu0 0
      %1137 = vmatpush.bf16.xpose.msra.mxu0 0
      %1138 = vmatpush.bf16.xpose.msra.mxu0 0
      %1139 = vmatpush.bf16.xpose.msra.mxu0 0
      %1140 = vmatpush.bf16.xpose.msra.mxu0 %v1131
      %1141 = vmatmul.bf16.gmra.mxu0 %v1128
      %v1142 = vpop.f32.mrf.mxu0
      %v1143 = vadd.f32 %v159, %v1142
      %v1144 = vpop.f32.mrf.mxu0
      %v1145 = vadd.f32 %v160, %v1144
      %1146 = vdwg.mxu0
      %v1147 = vsel %vm270, %v1071, -inf
      %1148 = vmax.xlane.f32.xlu0 %v1147
      %v1149 = vpop.xlane.xlu0 %1148
      %v1150 = vsel %vm270, %v1073, -inf
      %1151 = vmax.xlane.f32.xlu0 %v1150
      %v1152 = vpop.xlane.xlu0 %1151
      %v1153 = vsel %vm270, %v1095, -inf
      %1154 = vmax.xlane.f32.xlu0 %v1153
      %v1155 = vpop.xlane.xlu0 %1154
      %v1156 = vsel %vm270, %v1097, -inf
      %1157 = vmax.xlane.f32.xlu0 %v1156
      %v1158 = vpop.xlane.xlu0 %1157
      %v1159 = vsel %vm270, %v1119, -inf
      %1160 = vmax.xlane.f32.xlu0 %v1159
      %v1161 = vpop.xlane.xlu0 %1160
      %v1162 = vsel %vm270, %v1121, -inf
      %1163 = vmax.xlane.f32.xlu0 %v1162
      %v1164 = vpop.xlane.xlu0 %1163
      %v1165 = vsel %vm270, %v1143, -inf
      %1166 = vmax.xlane.f32.xlu0 %v1165
      %v1167 = vpop.xlane.xlu0 %1166
      %v1168 = vsel %vm270, %v1145, -inf
      %1169 = vmax.xlane.f32.xlu0 %v1168
      %v1170 = vpop.xlane.xlu0 %1169
      %v1171 = vsub.f32 %v1071, %v1149
      %v1172 = vsub.f32 %v1073, %v1152
      %v1173 = vsub.f32 %v1095, %v1155
      %v1174 = vsub.f32 %v1097, %v1158
      %v1175 = vsub.f32 %v1119, %v1161
      %v1176 = vsub.f32 %v1121, %v1164
      %v1177 = vsub.f32 %v1143, %v1167
      %v1178 = vsub.f32 %v1145, %v1170
      %v1179 = vmul.f32 %v1171, 1.442695
      %v1180 = vpow.pop %v1179
      %v1181 = vmul.f32 %v1172, 1.442695
      %v1182 = vpow.pop %v1181
      %v1183 = vmul.f32 %v1173, 1.442695
      %v1184 = vpow.pop %v1183
      %v1185 = vmul.f32 %v1174, 1.442695
      %v1186 = vpow.pop %v1185
      %v1187 = vmul.f32 %v1175, 1.442695
      %v1188 = vpow.pop %v1187
      %v1189 = vmul.f32 %v1176, 1.442695
      %v1190 = vpow.pop %v1189
      %v1191 = vmul.f32 %v1177, 1.442695
      %v1192 = vpow.pop %v1191
      %v1193 = vmul.f32 %v1178, 1.442695
      %v1194 = vpow.pop %v1193
      %v1195 = vsel %vm270, %v1180, 0.0
      %1196 = vadd.xlane.f32.xlu0 %v1195
      %v1197 = vpop.xlane.xlu0 %1196
      %v1198 = vsel %vm270, %v1182, 0.0
      %1199 = vadd.xlane.f32.xlu0 %v1198
      %v1200 = vpop.xlane.xlu0 %1199
      %v1201 = vsel %vm270, %v1184, 0.0
      %1202 = vadd.xlane.f32.xlu0 %v1201
      %v1203 = vpop.xlane.xlu0 %1202
      %v1204 = vsel %vm270, %v1186, 0.0
      %1205 = vadd.xlane.f32.xlu0 %v1204
      %v1206 = vpop.xlane.xlu0 %1205
      %v1207 = vsel %vm270, %v1188, 0.0
      %1208 = vadd.xlane.f32.xlu0 %v1207
      %v1209 = vpop.xlane.xlu0 %1208
      %v1210 = vsel %vm270, %v1190, 0.0
      %1211 = vadd.xlane.f32.xlu0 %v1210
      %v1212 = vpop.xlane.xlu0 %1211
      %v1213 = vsel %vm270, %v1192, 0.0
      %1214 = vadd.xlane.f32.xlu0 %v1213
      %v1215 = vpop.xlane.xlu0 %1214
      %v1216 = vsel %vm270, %v1194, 0.0
      %1217 = vadd.xlane.f32.xlu0 %v1216
      %v1218 = vpop.xlane.xlu0 %1217
      %v1219 = vrcp.pop %v1197
      %v1220 = vrcp.pop %v1200
      %v1221 = vrcp.pop %v1203
      %v1222 = vrcp.pop %v1206
      %v1223 = vrcp.pop %v1209
      %v1224 = vrcp.pop %v1212
      %v1225 = vrcp.pop %v1215
      %v1226 = vrcp.pop %v1218
      %v1227 = vmul.f32 %v1180, %v1219
      %v1228 = vmul.f32 %v1182, %v1220
      %v1229 = vmul.f32 %v1184, %v1221
      %v1230 = vmul.f32 %v1186, %v1222
      %v1231 = vmul.f32 %v1188, %v1223
      %v1232 = vmul.f32 %v1190, %v1224
      %v1233 = vmul.f32 %v1192, %v1225
      %v1234 = vmul.f32 %v1194, %v1226
      %v1235 = vpack.c.bf16 %v1227, %v1227
      %v1236 = vpack.c.bf16 %v1228, %v1228
      %v1237 = vpack.c.bf16 %v1229, %v1229
      %v1238 = vpack.c.bf16 %v1230, %v1230
      %v1239 = vpack.c.bf16 %v1231, %v1231
      %v1240 = vpack.c.bf16 %v1232, %v1232
      %v1241 = vpack.c.bf16 %v1233, %v1233
      %v1242 = vpack.c.bf16 %v1234, %v1234
      %v1245 = vunpack.c.l.b16 %v1235
      %v1246 = vunpack.c.l.b16 %v1236
      %v1247 = vpack.c.b16 %v1246, %v1245
      %1248 = vrot.lane.b32.xlu0 %v165, 40
      %v1249 = vpop.permute.xlu0 %1248
      %v1252 = vsel %vm270, %v1247, 0
      %1254 = vmatpush.bf16.msra.mxu0 0
      %1255 = vmatpush.bf16.msra.mxu0 0
      %1256 = vmatpush.bf16.msra.mxu0 0
      %1257 = vmatpush.bf16.msra.mxu0 0
      %1258 = vmatpush.bf16.msra.mxu0 0
      %1259 = vmatpush.bf16.msra.mxu0 0
      %1260 = vmatpush.bf16.msra.mxu0 0
      %1261 = vmatpush.bf16.msra.mxu0 %v1249
      %1262 = vmatmul.bf16.gmra.mxu0 %v1252
      %v1263 = vpop.f32.mrf.mxu0
      %v1264 = vadd.f32 0.0, %v1263
      %v1265 = vpop.f32.mrf.mxu0
      %v1266 = vadd.f32 0.0, %v1265
      %1267 = vdwg.mxu0
      %v1270 = vunpack.c.l.b16 %v1237
      %v1271 = vunpack.c.l.b16 %v1238
      %v1272 = vpack.c.b16 %v1271, %v1270
      %1273 = vrot.lane.b32.xlu0 %v193, 40
      %v1274 = vpop.permute.xlu0 %1273
      %v1277 = vsel %vm270, %v1272, 0
      %1279 = vmatpush.bf16.msra.mxu0 0
      %1280 = vmatpush.bf16.msra.mxu0 0
      %1281 = vmatpush.bf16.msra.mxu0 0
      %1282 = vmatpush.bf16.msra.mxu0 0
      %1283 = vmatpush.bf16.msra.mxu0 0
      %1284 = vmatpush.bf16.msra.mxu0 0
      %1285 = vmatpush.bf16.msra.mxu0 0
      %1286 = vmatpush.bf16.msra.mxu0 %v1274
      %1287 = vmatmul.bf16.gmra.mxu0 %v1277
      %v1288 = vpop.f32.mrf.mxu0
      %v1289 = vadd.f32 0.0, %v1288
      %v1290 = vpop.f32.mrf.mxu0
      %v1291 = vadd.f32 0.0, %v1290
      %1292 = vdwg.mxu0
      %v1295 = vunpack.c.l.b16 %v1239
      %v1296 = vunpack.c.l.b16 %v1240
      %v1297 = vpack.c.b16 %v1296, %v1295
      %1298 = vrot.lane.b32.xlu0 %v220, 40
      %v1299 = vpop.permute.xlu0 %1298
      %v1302 = vsel %vm270, %v1297, 0
      %1304 = vmatpush.bf16.msra.mxu0 0
      %1305 = vmatpush.bf16.msra.mxu0 0
      %1306 = vmatpush.bf16.msra.mxu0 0
      %1307 = vmatpush.bf16.msra.mxu0 0
      %1308 = vmatpush.bf16.msra.mxu0 0
      %1309 = vmatpush.bf16.msra.mxu0 0
      %1310 = vmatpush.bf16.msra.mxu0 0
      %1311 = vmatpush.bf16.msra.mxu0 %v1299
      %1312 = vmatmul.bf16.gmra.mxu0 %v1302
      %v1313 = vpop.f32.mrf.mxu0
      %v1314 = vadd.f32 0.0, %v1313
      %v1315 = vpop.f32.mrf.mxu0
      %v1316 = vadd.f32 0.0, %v1315
      %1317 = vdwg.mxu0
      %v1320 = vunpack.c.l.b16 %v1241
      %v1321 = vunpack.c.l.b16 %v1242
      %v1322 = vpack.c.b16 %v1321, %v1320
      %1323 = vrot.lane.b32.xlu0 %v247, 40
      %v1324 = vpop.permute.xlu0 %1323
      %v1327 = vsel %vm270, %v1322, 0
      %1329 = vmatpush.bf16.msra.mxu0 0
      %1330 = vmatpush.bf16.msra.mxu0 0
      %1331 = vmatpush.bf16.msra.mxu0 0
      %1332 = vmatpush.bf16.msra.mxu0 0
      %1333 = vmatpush.bf16.msra.mxu0 0
      %1334 = vmatpush.bf16.msra.mxu0 0
      %1335 = vmatpush.bf16.msra.mxu0 0
      %1336 = vmatpush.bf16.msra.mxu0 %v1324
      %1337 = vmatmul.bf16.gmra.mxu0 %v1327
      %v1338 = vpop.f32.mrf.mxu0
      %v1339 = vadd.f32 0.0, %v1338
      %v1340 = vpop.f32.mrf.mxu0
      %v1341 = vadd.f32 0.0, %v1340
      %1342 = vdwg.mxu0
      %1351 = vrot.lane.b32.xlu0 %v680, 8
      %v1352 = vpop.permute.xlu0 %1351
      %1353 = vrot.lane.b32.xlu0 %v682, 8
      %v1354 = vpop.permute.xlu0 %1353
      %1355 = vrot.lane.b32.xlu0 %v705, 8
      %v1356 = vpop.permute.xlu0 %1355
      %1357 = vrot.lane.b32.xlu0 %v707, 8
      %v1358 = vpop.permute.xlu0 %1357
      %1359 = vrot.lane.b32.xlu0 %v730, 8
      %v1360 = vpop.permute.xlu0 %1359
      %1361 = vrot.lane.b32.xlu0 %v732, 8
      %v1362 = vpop.permute.xlu0 %1361
      %1363 = vrot.lane.b32.xlu0 %v755, 8
      %v1364 = vpop.permute.xlu0 %1363
      %1365 = vrot.lane.b32.xlu0 %v757, 8
      %v1366 = vpop.permute.xlu0 %1365
      %1383 = vrot.lane.b32.xlu0 %v972, 16
      %v1384 = vpop.permute.xlu0 %1383
      %1385 = vrot.lane.b32.xlu0 %v974, 16
      %v1386 = vpop.permute.xlu0 %1385
      %1387 = vrot.lane.b32.xlu0 %v997, 16
      %v1388 = vpop.permute.xlu0 %1387
      %1389 = vrot.lane.b32.xlu0 %v999, 16
      %v1390 = vpop.permute.xlu0 %1389
      %1391 = vrot.lane.b32.xlu0 %v1022, 16
      %v1392 = vpop.permute.xlu0 %1391
      %1393 = vrot.lane.b32.xlu0 %v1024, 16
      %v1394 = vpop.permute.xlu0 %1393
      %1395 = vrot.lane.b32.xlu0 %v1047, 16
      %v1396 = vpop.permute.xlu0 %1395
      %1397 = vrot.lane.b32.xlu0 %v1049, 16
      %v1398 = vpop.permute.xlu0 %1397
      %1415 = vrot.lane.b32.xlu0 %v1264, 24
      %v1416 = vpop.permute.xlu0 %1415
      %1417 = vrot.lane.b32.xlu0 %v1266, 24
      %v1418 = vpop.permute.xlu0 %1417
      %1419 = vrot.lane.b32.xlu0 %v1289, 24
      %v1420 = vpop.permute.xlu0 %1419
      %1421 = vrot.lane.b32.xlu0 %v1291, 24
      %v1422 = vpop.permute.xlu0 %1421
      %1423 = vrot.lane.b32.xlu0 %v1314, 24
      %v1424 = vpop.permute.xlu0 %1423
      %1425 = vrot.lane.b32.xlu0 %v1316, 24
      %v1426 = vpop.permute.xlu0 %1425
      %1427 = vrot.lane.b32.xlu0 %v1339, 24
      %v1428 = vpop.permute.xlu0 %1427
      %1429 = vrot.lane.b32.xlu0 %v1341, 24
      %v1430 = vpop.permute.xlu0 %1429
      %v1439 = vsel %vm168, %v388, %v1352
      %v1440 = vsel %vm168, %v390, %v1354
      %v1441 = vsel %vm168, %v413, %v1356
      %v1442 = vsel %vm168, %v415, %v1358
      %v1443 = vsel %vm168, %v438, %v1360
      %v1444 = vsel %vm168, %v440, %v1362
      %v1445 = vsel %vm168, %v463, %v1364
      %v1446 = vsel %vm168, %v465, %v1366
      %v1447 = vsel %vm270, %v1439, %v1384
      %v1448 = vsel %vm270, %v1440, %v1386
      %v1449 = vsel %vm270, %v1441, %v1388
      %v1450 = vsel %vm270, %v1442, %v1390
      %v1451 = vsel %vm270, %v1443, %v1392
      %v1452 = vsel %vm270, %v1444, %v1394
      %v1453 = vsel %vm270, %v1445, %v1396
      %v1454 = vsel %vm270, %v1446, %v1398
      %vm1455 = vcmask 195584
      %v1456 = vsel %vm1455, %v1447, %v1416
      %v1457 = vsel %vm1455, %v1448, %v1418
      %v1458 = vsel %vm1455, %v1449, %v1420
      %v1459 = vsel %vm1455, %v1450, %v1422
      %v1460 = vsel %vm1455, %v1451, %v1424
      %v1461 = vsel %vm1455, %v1452, %v1426
      %v1462 = vsel %vm1455, %v1453, %v1428
      %v1463 = vsel %vm1455, %v1454, %v1430
      %v1464 = vpack.c.bf16 %v1456, %v1456
      %v1465 = vpack.c.bf16 %v1457, %v1457
      %v1466 = vpack.c.bf16 %v1458, %v1458
      %v1467 = vpack.c.bf16 %v1459, %v1459
      %v1468 = vpack.c.bf16 %v1460, %v1460
      %v1469 = vpack.c.bf16 %v1461, %v1461
      %v1470 = vpack.c.bf16 %v1462, %v1462
      %v1471 = vpack.c.bf16 %v1463, %v1463
      %vm1472 = vcmask 257024
      %1473 = vst.msk [vmem:[%s143] sm:$0xf] %vm1472, %v1464
      %1474 = vst.msk [vmem:[%s143 + $0x4] sm:$0xf] %vm1472, %v1465
      %1475 = vst.msk [vmem:[%s143 + $0x8] sm:$0xf] %vm1472, %v1466
      %1476 = vst.msk [vmem:[%s143 + $0xc] sm:$0xf] %vm1472, %v1467
      %1477 = vst.msk [vmem:[%s143 + $0x10] sm:$0xf] %vm1472, %v1468
      %1478 = vst.msk [vmem:[%s143 + $0x14] sm:$0xf] %vm1472, %v1469
      %1479 = vst.msk [vmem:[%s143 + $0x18] sm:$0xf] %vm1472, %v1470
      %1480 = vst.msk [vmem:[%s143 + $0x1c] sm:$0xf] %vm1472, %v1471
      %p1481 = scmp.lt.s32.totalorder %s13, 1
      %s1482 = scalar_select %p1481, %s13, 1
      %s1483 = smul.addr %s1482, 8
      %s1484 = smul.addr %s1483, 4
      %s1485 = scalar_lea.vmem %s2, %s1484
      // Predicated region
      $region29: #{swin_encoder_block.6} parent=27 // pred_check
        %p1486 = pneg %p78
      $region30: #{swin_encoder_block.6} parent=27 // pred_check_branch
        %1488 = sbr.rel (%p1486) target = $region32
      $region31: #{swin_encoder_block.6} parent=27 // pred_region
        _
      $region32: #{swin_encoder_block.6} parent=27 // pred_fallthru
        _
    $region28: #{swin_encoder_block.6} parent=5 // pred_fallthru
      _
    %p1489 = scmp.le.s32.totalorder 2, %s8
    // Predicated region
    $region33: #{swin_encoder_block.6} parent=5 // pred_check
      %p1490 = pneg %p1489
    $region34: #{swin_encoder_block.6} parent=5 // pred_check_branch
      %1492 = sbr.rel (%p1490) target = $region36
    $region35: #{swin_encoder_block.6} parent=5 // pred_region
      %s1493 = ssub.s32 %s8, 2
      // Predicated region
      $region37: #{swin_encoder_block.6} parent=35 // pred_check
        %p1494 = pneg %p84
      $region38: #{swin_encoder_block.6} parent=35 // pred_check_branch
        %1496 = sbr.rel (%p1494) target = $region40
      $region39: #{swin_encoder_block.6} parent=35 // pred_region
        %p1497 = scmp.lt.s32.totalorder %s14, 1
        %s1498 = scalar_select %p1497, %s14, 1
        %s1499 = smul.addr %s1498, 8
        %s1500 = smul.addr %s1499, 4
        %s1501 = scalar_lea.vmem %s2, %s1500
      $region40: #{swin_encoder_block.6} parent=35 // pred_fallthru
        _
    $region36: #{swin_encoder_block.6} parent=5 // pred_fallthru
      _
  $region6: #{swin_encoder_block.6} parent=0 // loop_footer
    %s12 = sadd.s32 1, %s8
  $region7: #{swin_encoder_block.6} parent=0 // loop_footer_branch
    %7 = sbr.rel target = $region3
  $region8: #{swin_encoder_block.6} parent=0 // loop_exit
    _

// kernel: swin_encoder_block.9
$region0: #{swin_encoder_block.9}
  #allocation0 [shape = 'u32[]', space=smem, size = 0x4, offset = 0x4, fixed_abs, tag = 'smem constant byte address 0x4 - core index']
  #allocation1 [shape = 'u32[72,128]{1,0:T(1,128)}', space=vmem, size = 0x9000, scoped, tag = 'internal scratch']
  %s0 = inlined_call_operand.vmem [shape: bf16[128,128], index: 0, kind: input, shape index: {}]
  %s1 = inlined_call_operand.vmem [shape: bf16[128,32], index: 1, kind: input, shape index: {}]
  %s2 = inlined_call_operand.vmem [shape: f32[1,32], index: 2, kind: input, shape index: {}]
  %s3 = inlined_call_operand.vmem [shape: f32[128,32], index: 3, kind: input, shape index: {}]
  %s4 = inlined_call_operand.vmem [shape: f32[128,32], index: 4, kind: output, shape index: {}]
  %s5 = sld [smem:[#allocation0]]
  $region26: #{swin_encoder_block.9} parent=0
    _
  %s7 = ssub.s32 1, %s5
  %s8 = scalar_select 0, %s7, %s5
  // Predicated region
  $region2: #{swin_encoder_block.9} parent=0 // pred_check
    _
  $region3: #{swin_encoder_block.9} parent=0 // pred_check_branch
    %10 = sbr.rel (0) target = $region5
  $region4: #{swin_encoder_block.9} parent=0 // pred_region
    _
  $region5: #{swin_encoder_block.9} parent=0 // pred_fallthru
    _
  // Predicated region
  $region6: #{swin_encoder_block.9} parent=0 // pred_check
    _
  $region7: #{swin_encoder_block.9} parent=0 // pred_check_branch
    %12 = sbr.rel (0) target = $region9
  $region8: #{swin_encoder_block.9} parent=0 // pred_region
    _
  $region9: #{swin_encoder_block.9} parent=0 // pred_fallthru
    _
  // Predicated region
  $region10: #{swin_encoder_block.9} parent=0 // pred_check
    _
  $region11: #{swin_encoder_block.9} parent=0 // pred_check_branch
    %14 = sbr.rel (0) target = $region13
  $region12: #{swin_encoder_block.9} parent=0 // pred_region
    _
  $region13: #{swin_encoder_block.9} parent=0 // pred_fallthru
    _
  // Predicated region
  $region14: #{swin_encoder_block.9} parent=0 // pred_check
    _
  $region15: #{swin_encoder_block.9} parent=0 // pred_check_branch
    %16 = sbr.rel (0) target = $region17
  $region16: #{swin_encoder_block.9} parent=0 // pred_region
    _
  $region17: #{swin_encoder_block.9} parent=0 // pred_fallthru
    _
  %v17 = vld [vmem:[%s0] sm:$0xf]
  %v18 = vld [vmem:[%s0 + $0x4] sm:$0xf]
  %v19 = vld [vmem:[%s0 + $0x8] sm:$0xf]
  %v20 = vld [vmem:[%s0 + $0xc] sm:$0xf]
  %v21 = vld [vmem:[%s0 + $0x10] sm:$0xf]
  %v22 = vld [vmem:[%s0 + $0x14] sm:$0xf]
  %v23 = vld [vmem:[%s0 + $0x18] sm:$0xf]
  %v24 = vld [vmem:[%s0 + $0x1c] sm:$0xf]
  %v25 = vld [vmem:[%s0 + $0x20] sm:$0xf]
  %v26 = vld [vmem:[%s0 + $0x24] sm:$0xf]
  %v27 = vld [vmem:[%s0 + $0x28] sm:$0xf]
  %v28 = vld [vmem:[%s0 + $0x2c] sm:$0xf]
  %v29 = vld [vmem:[%s0 + $0x30] sm:$0xf]
  %v30 = vld [vmem:[%s0 + $0x34] sm:$0xf]
  %v31 = vld [vmem:[%s0 + $0x38] sm:$0xf]
  %v32 = vld [vmem:[%s0 + $0x3c] sm:$0xf]
  %v33 = vld [vmem:[%s1] sm:$0xf]
  %v34 = vld [vmem:[%s1 + $0x4] sm:$0xf]
  %v35 = vld [vmem:[%s1 + $0x8] sm:$0xf]
  %v36 = vld [vmem:[%s1 + $0xc] sm:$0xf]
  %v37 = vld [vmem:[%s1 + $0x10] sm:$0xf]
  %v38 = vld [vmem:[%s1 + $0x14] sm:$0xf]
  %v39 = vld [vmem:[%s1 + $0x18] sm:$0xf]
  %v40 = vld [vmem:[%s1 + $0x1c] sm:$0xf]
  %v41 = vld [vmem:[%s1 + $0x20] sm:$0xf]
  %v42 = vld [vmem:[%s1 + $0x24] sm:$0xf]
  %v43 = vld [vmem:[%s1 + $0x28] sm:$0xf]
  %v44 = vld [vmem:[%s1 + $0x2c] sm:$0xf]
  %v45 = vld [vmem:[%s1 + $0x30] sm:$0xf]
  %v46 = vld [vmem:[%s1 + $0x34] sm:$0xf]
  %v47 = vld [vmem:[%s1 + $0x38] sm:$0xf]
  %v48 = vld [vmem:[%s1 + $0x3c] sm:$0xf]
  %v49 = vld [vmem:[%s2] sm:$0x1]
  %v51 = vperm.slane %v49, 0
  %v69 = vunpack.c.l.b16 %v17
  %v70 = vunpack.c.l.b16 %v18
  %v71 = vunpack.c.l.b16 %v19
  %v72 = vunpack.c.l.b16 %v20
  %v73 = vunpack.c.l.b16 %v21
  %v74 = vunpack.c.l.b16 %v22
  %v75 = vunpack.c.l.b16 %v23
  %v76 = vunpack.c.l.b16 %v24
  %v77 = vunpack.c.l.b16 %v25
  %v78 = vunpack.c.l.b16 %v26
  %v79 = vunpack.c.l.b16 %v27
  %v80 = vunpack.c.l.b16 %v28
  %v81 = vunpack.c.l.b16 %v29
  %v82 = vunpack.c.l.b16 %v30
  %v83 = vunpack.c.l.b16 %v31
  %v84 = vunpack.c.l.b16 %v32
  %v85 = vpack.c.b16 %v70, %v69
  %v86 = vpack.c.b16 %v72, %v71
  %v87 = vpack.c.b16 %v74, %v73
  %v88 = vpack.c.b16 %v76, %v75
  %v89 = vpack.c.b16 %v78, %v77
  %v90 = vpack.c.b16 %v80, %v79
  %v91 = vpack.c.b16 %v82, %v81
  %v92 = vpack.c.b16 %v84, %v83
  %v117 = vunpack.c.l.b16 %v33
  %v118 = vunpack.c.l.b16 %v34
  %v119 = vunpack.c.l.b16 %v35
  %v120 = vunpack.c.l.b16 %v36
  %v121 = vunpack.c.l.b16 %v37
  %v122 = vunpack.c.l.b16 %v38
  %v123 = vunpack.c.l.b16 %v39
  %v124 = vunpack.c.l.b16 %v40
  %v125 = vunpack.c.l.b16 %v41
  %v126 = vunpack.c.l.b16 %v42
  %v127 = vunpack.c.l.b16 %v43
  %v128 = vunpack.c.l.b16 %v44
  %v129 = vunpack.c.l.b16 %v45
  %v130 = vunpack.c.l.b16 %v46
  %v131 = vunpack.c.l.b16 %v47
  %v132 = vunpack.c.l.b16 %v48
  %v133 = vpack.c.b16 %v118, %v117
  %v134 = vpack.c.b16 %v120, %v119
  %v135 = vpack.c.b16 %v122, %v121
  %v136 = vpack.c.b16 %v124, %v123
  %v137 = vpack.c.b16 %v126, %v125
  %v138 = vpack.c.b16 %v128, %v127
  %v139 = vpack.c.b16 %v130, %v129
  %v140 = vpack.c.b16 %v132, %v131
  %149 = vmatpush.bf16.msra.mxu0 %v140
  %150 = vmatpush.bf16.msra.mxu0 %v139
  %151 = vmatpush.bf16.msra.mxu0 %v138
  %152 = vmatpush.bf16.msra.mxu0 %v137
  %153 = vmatpush.bf16.msra.mxu0 %v136
  %154 = vmatpush.bf16.msra.mxu0 %v135
  %155 = vmatpush.bf16.msra.mxu0 %v134
  %156 = vmatpush.bf16.msra.mxu0 %v133
  %157 = vmatmul.bf16.gmra.mxu0 %v85
  %v158 = vpop.f32.mrf.mxu0
  %v159 = vadd.f32 %v51, %v158
  %v160 = vpop.f32.mrf.mxu0
  %v161 = vadd.f32 %v51, %v160
  %162 = vmatmul.bf16.gmra.mxu0 %v86
  %v163 = vpop.f32.mrf.mxu0
  %v164 = vadd.f32 %v51, %v163
  %v165 = vpop.f32.mrf.mxu0
  %v166 = vadd.f32 %v51, %v165
  %167 = vmatmul.bf16.gmra.mxu0 %v87
  %v168 = vpop.f32.mrf.mxu0
  %v169 = vadd.f32 %v51, %v168
  %v170 = vpop.f32.mrf.mxu0
  %v171 = vadd.f32 %v51, %v170
  %172 = vmatmul.bf16.gmra.mxu0 %v88
  %v173 = vpop.f32.mrf.mxu0
  %v174 = vadd.f32 %v51, %v173
  %v175 = vpop.f32.mrf.mxu0
  %v176 = vadd.f32 %v51, %v175
  %177 = vmatmul.bf16.gmra.mxu0 %v89
  %v178 = vpop.f32.mrf.mxu0
  %v179 = vadd.f32 %v51, %v178
  %v180 = vpop.f32.mrf.mxu0
  %v181 = vadd.f32 %v51, %v180
  %182 = vmatmul.bf16.gmra.mxu0 %v90
  %v183 = vpop.f32.mrf.mxu0
  %v184 = vadd.f32 %v51, %v183
  %v185 = vpop.f32.mrf.mxu0
  %v186 = vadd.f32 %v51, %v185
  %187 = vmatmul.bf16.gmra.mxu0 %v91
  %v188 = vpop.f32.mrf.mxu0
  %v189 = vadd.f32 %v51, %v188
  %v190 = vpop.f32.mrf.mxu0
  %v191 = vadd.f32 %v51, %v190
  %192 = vmatmul.bf16.gmra.mxu0 %v92
  %v193 = vpop.f32.mrf.mxu0
  %v194 = vadd.f32 %v51, %v193
  %v195 = vpop.f32.mrf.mxu0
  %v196 = vadd.f32 %v51, %v195
  %197 = vdwg.mxu0
  %v198 = vld [vmem:[%s3] sm:$0xff]
  %v199 = vld [vmem:[%s3 + $0x8] sm:$0xff]
  %v200 = vld [vmem:[%s3 + $0x10] sm:$0xff]
  %v201 = vld [vmem:[%s3 + $0x18] sm:$0xff]
  %v202 = vld [vmem:[%s3 + $0x20] sm:$0xff]
  %v203 = vld [vmem:[%s3 + $0x28] sm:$0xff]
  %v204 = vld [vmem:[%s3 + $0x30] sm:$0xff]
  %v205 = vld [vmem:[%s3 + $0x38] sm:$0xff]
  %v206 = vld [vmem:[%s3 + $0x40] sm:$0xff]
  %v207 = vld [vmem:[%s3 + $0x48] sm:$0xff]
  %v208 = vld [vmem:[%s3 + $0x50] sm:$0xff]
  %v209 = vld [vmem:[%s3 + $0x58] sm:$0xff]
  %v210 = vld [vmem:[%s3 + $0x60] sm:$0xff]
  %v211 = vld [vmem:[%s3 + $0x68] sm:$0xff]
  %v212 = vld [vmem:[%s3 + $0x70] sm:$0xff]
  %v213 = vld [vmem:[%s3 + $0x78] sm:$0xff]
  %v214 = vadd.f32 %v159, %v198
  %v215 = vadd.f32 %v161, %v199
  %v216 = vadd.f32 %v164, %v200
  %v217 = vadd.f32 %v166, %v201
  %v218 = vadd.f32 %v169, %v202
  %v219 = vadd.f32 %v171, %v203
  %v220 = vadd.f32 %v174, %v204
  %v221 = vadd.f32 %v176, %v205
  %v222 = vadd.f32 %v179, %v206
  %v223 = vadd.f32 %v181, %v207
  %v224 = vadd.f32 %v184, %v208
  %v225 = vadd.f32 %v186, %v209
  %v226 = vadd.f32 %v189, %v210
  %v227 = vadd.f32 %v191, %v211
  %v228 = vadd.f32 %v194, %v212
  %v229 = vadd.f32 %v196, %v213
  %vm230 = vcmask 261120
  %231 = vst.msk [vmem:[%s4] sm:$0xff] %vm230, %v214
  %232 = vst.msk [vmem:[%s4 + $0x8] sm:$0xff] %vm230, %v215
  %233 = vst.msk [vmem:[%s4 + $0x10] sm:$0xff] %vm230, %v216
  %234 = vst.msk [vmem:[%s4 + $0x18] sm:$0xff] %vm230, %v217
  %235 = vst.msk [vmem:[%s4 + $0x20] sm:$0xff] %vm230, %v218
  %236 = vst.msk [vmem:[%s4 + $0x28] sm:$0xff] %vm230, %v219
  %237 = vst.msk [vmem:[%s4 + $0x30] sm:$0xff] %vm230, %v220
  %238 = vst.msk [vmem:[%s4 + $0x38] sm:$0xff] %vm230, %v221
  %239 = vst.msk [vmem:[%s4 + $0x40] sm:$0xff] %vm230, %v222
  %240 = vst.msk [vmem:[%s4 + $0x48] sm:$0xff] %vm230, %v223
  %241 = vst.msk [vmem:[%s4 + $0x50] sm:$0xff] %vm230, %v224
  %242 = vst.msk [vmem:[%s4 + $0x58] sm:$0xff] %vm230, %v225
  %243 = vst.msk [vmem:[%s4 + $0x60] sm:$0xff] %vm230, %v226
  %244 = vst.msk [vmem:[%s4 + $0x68] sm:$0xff] %vm230, %v227
  %245 = vst.msk [vmem:[%s4 + $0x70] sm:$0xff] %vm230, %v228
  %246 = vst.msk [vmem:[%s4 + $0x78] sm:$0xff] %vm230, %v229
  // Predicated region
  $region18: #{swin_encoder_block.9} parent=0 // pred_check
    _
  $region19: #{swin_encoder_block.9} parent=0 // pred_check_branch
    %248 = sbr.rel (0) target = $region21
  $region20: #{swin_encoder_block.9} parent=0 // pred_region
    _
  $region21: #{swin_encoder_block.9} parent=0 // pred_fallthru
    _
  // Predicated region
  $region22: #{swin_encoder_block.9} parent=0 // pred_check
    _
  $region23: #{swin_encoder_block.9} parent=0 // pred_check_branch
    %250 = sbr.rel (0) target = $region25
  $region24: #{swin_encoder_block.9} parent=0 // pred_region
    _
  $region25: #{swin_encoder_block.9} parent=0 // pred_fallthru
    _

// kernel: swin_encoder_block.8
$region0: #{swin_encoder_block.8}
  #allocation0 [shape = 'u32[]', space=smem, size = 0x4, offset = 0x4, fixed_abs, tag = 'smem constant byte address 0x4 - core index']
  #allocation1 [shape = 'u32[72,128]{1,0:T(1,128)}', space=vmem, size = 0x9000, scoped, tag = 'internal scratch']
  %s0 = inlined_call_operand.vmem [shape: f32[128,32], index: 0, kind: input, shape index: {}]
  %s1 = inlined_call_operand.vmem [shape: f32[1,32], index: 1, kind: input, shape index: {}]
  %s2 = inlined_call_operand.vmem [shape: f32[1,32], index: 2, kind: input, shape index: {}]
  %s3 = inlined_call_operand.vmem [shape: bf16[32,128], index: 3, kind: input, shape index: {}]
  %s4 = inlined_call_operand.vmem [shape: f32[1,128], index: 4, kind: input, shape index: {}]
  %s5 = inlined_call_operand.vmem [shape: bf16[128,128], index: 5, kind: output, shape index: {}]
  %s6 = sld [smem:[#allocation0]]
  $region30: #{swin_encoder_block.8} parent=0
    _
  %s8 = ssub.s32 1, %s6
  %s9 = scalar_select 0, %s8, %s6
  // Predicated region
  $region2: #{swin_encoder_block.8} parent=0 // pred_check
    _
  $region3: #{swin_encoder_block.8} parent=0 // pred_check_branch
    %11 = sbr.rel (0) target = $region5
  $region4: #{swin_encoder_block.8} parent=0 // pred_region
    _
  $region5: #{swin_encoder_block.8} parent=0 // pred_fallthru
    _
  // Predicated region
  $region6: #{swin_encoder_block.8} parent=0 // pred_check
    _
  $region7: #{swin_encoder_block.8} parent=0 // pred_check_branch
    %13 = sbr.rel (0) target = $region9
  $region8: #{swin_encoder_block.8} parent=0 // pred_region
    _
  $region9: #{swin_encoder_block.8} parent=0 // pred_fallthru
    _
  // Predicated region
  $region10: #{swin_encoder_block.8} parent=0 // pred_check
    _
  $region11: #{swin_encoder_block.8} parent=0 // pred_check_branch
    %15 = sbr.rel (0) target = $region13
  $region12: #{swin_encoder_block.8} parent=0 // pred_region
    _
  $region13: #{swin_encoder_block.8} parent=0 // pred_fallthru
    _
  // Predicated region
  $region14: #{swin_encoder_block.8} parent=0 // pred_check
    _
  $region15: #{swin_encoder_block.8} parent=0 // pred_check_branch
    %17 = sbr.rel (0) target = $region17
  $region16: #{swin_encoder_block.8} parent=0 // pred_region
    _
  $region17: #{swin_encoder_block.8} parent=0 // pred_fallthru
    _
  // Predicated region
  $region18: #{swin_encoder_block.8} parent=0 // pred_check
    _
  $region19: #{swin_encoder_block.8} parent=0 // pred_check_branch
    %19 = sbr.rel (0) target = $region21
  $region20: #{swin_encoder_block.8} parent=0 // pred_region
    _
  $region21: #{swin_encoder_block.8} parent=0 // pred_fallthru
    _
  %v21 = vld [vmem:[%s0] sm:$0xff]
  %v22 = vld [vmem:[%s0 + $0x8] sm:$0xff]
  %v23 = vld [vmem:[%s0 + $0x10] sm:$0xff]
  %v24 = vld [vmem:[%s0 + $0x18] sm:$0xff]
  %v25 = vld [vmem:[%s0 + $0x20] sm:$0xff]
  %v26 = vld [vmem:[%s0 + $0x28] sm:$0xff]
  %v27 = vld [vmem:[%s0 + $0x30] sm:$0xff]
  %v28 = vld [vmem:[%s0 + $0x38] sm:$0xff]
  %v29 = vld [vmem:[%s0 + $0x40] sm:$0xff]
  %v30 = vld [vmem:[%s0 + $0x48] sm:$0xff]
  %v31 = vld [vmem:[%s0 + $0x50] sm:$0xff]
  %v32 = vld [vmem:[%s0 + $0x58] sm:$0xff]
  %v33 = vld [vmem:[%s0 + $0x60] sm:$0xff]
  %v34 = vld [vmem:[%s0 + $0x68] sm:$0xff]
  %v35 = vld [vmem:[%s0 + $0x70] sm:$0xff]
  %v36 = vld [vmem:[%s0 + $0x78] sm:$0xff]
  %vm37 = vcmask 261120
  %v38 = vsel %vm37, %v21, 0.0
  %39 = vadd.xlane.f32.xlu0 %v38
  %v40 = vpop.xlane.xlu0 %39
  %v41 = vsel %vm37, %v22, 0.0
  %42 = vadd.xlane.f32.xlu0 %v41
  %v43 = vpop.xlane.xlu0 %42
  %v44 = vsel %vm37, %v23, 0.0
  %45 = vadd.xlane.f32.xlu0 %v44
  %v46 = vpop.xlane.xlu0 %45
  %v47 = vsel %vm37, %v24, 0.0
  %48 = vadd.xlane.f32.xlu0 %v47
  %v49 = vpop.xlane.xlu0 %48
  %v50 = vsel %vm37, %v25, 0.0
  %51 = vadd.xlane.f32.xlu0 %v50
  %v52 = vpop.xlane.xlu0 %51
  %v53 = vsel %vm37, %v26, 0.0
  %54 = vadd.xlane.f32.xlu0 %v53
  %v55 = vpop.xlane.xlu0 %54
  %v56 = vsel %vm37, %v27, 0.0
  %57 = vadd.xlane.f32.xlu0 %v56
  %v58 = vpop.xlane.xlu0 %57
  %v59 = vsel %vm37, %v28, 0.0
  %60 = vadd.xlane.f32.xlu0 %v59
  %v61 = vpop.xlane.xlu0 %60
  %v62 = vsel %vm37, %v29, 0.0
  %63 = vadd.xlane.f32.xlu0 %v62
  %v64 = vpop.xlane.xlu0 %63
  %v65 = vsel %vm37, %v30, 0.0
  %66 = vadd.xlane.f32.xlu0 %v65
  %v67 = vpop.xlane.xlu0 %66
  %v68 = vsel %vm37, %v31, 0.0
  %69 = vadd.xlane.f32.xlu0 %v68
  %v70 = vpop.xlane.xlu0 %69
  %v71 = vsel %vm37, %v32, 0.0
  %72 = vadd.xlane.f32.xlu0 %v71
  %v73 = vpop.xlane.xlu0 %72
  %v74 = vsel %vm37, %v33, 0.0
  %75 = vadd.xlane.f32.xlu0 %v74
  %v76 = vpop.xlane.xlu0 %75
  %v77 = vsel %vm37, %v34, 0.0
  %78 = vadd.xlane.f32.xlu0 %v77
  %v79 = vpop.xlane.xlu0 %78
  %v80 = vsel %vm37, %v35, 0.0
  %81 = vadd.xlane.f32.xlu0 %v80
  %v82 = vpop.xlane.xlu0 %81
  %v83 = vsel %vm37, %v36, 0.0
  %84 = vadd.xlane.f32.xlu0 %v83
  %v85 = vpop.xlane.xlu0 %84
  %v86 = vrcp.pop 32.0
  %v87 = vmul.f32 32.0, %v86
  %v88 = vsub.f32 1.0, %v87
  %v89 = vmul.f32 %v86, %v88
  %v90 = vadd.f32 %v86, %v89
  %vm91 = vweird.f32 %v86
  %v92 = vsel %vm91, %v86, %v90
  %v93 = vmul.f32 %v40, %v92
  %v94 = vmul.f32 %v43, %v92
  %v95 = vmul.f32 %v46, %v92
  %v96 = vmul.f32 %v49, %v92
  %v97 = vmul.f32 %v52, %v92
  %v98 = vmul.f32 %v55, %v92
  %v99 = vmul.f32 %v58, %v92
  %v100 = vmul.f32 %v61, %v92
  %v101 = vmul.f32 %v64, %v92
  %v102 = vmul.f32 %v67, %v92
  %v103 = vmul.f32 %v70, %v92
  %v104 = vmul.f32 %v73, %v92
  %v105 = vmul.f32 %v76, %v92
  %v106 = vmul.f32 %v79, %v92
  %v107 = vmul.f32 %v82, %v92
  %v108 = vmul.f32 %v85, %v92
  %v109 = vsub.f32 %v21, %v93
  %v110 = vsub.f32 %v22, %v94
  %v111 = vsub.f32 %v23, %v95
  %v112 = vsub.f32 %v24, %v96
  %v113 = vsub.f32 %v25, %v97
  %v114 = vsub.f32 %v26, %v98
  %v115 = vsub.f32 %v27, %v99
  %v116 = vsub.f32 %v28, %v100
  %v117 = vsub.f32 %v29, %v101
  %v118 = vsub.f32 %v30, %v102
  %v119 = vsub.f32 %v31, %v103
  %v120 = vsub.f32 %v32, %v104
  %v121 = vsub.f32 %v33, %v105
  %v122 = vsub.f32 %v34, %v106
  %v123 = vsub.f32 %v35, %v107
  %v124 = vsub.f32 %v36, %v108
  %v125 = vmul.f32 %v109, %v109
  %v126 = vmul.f32 %v110, %v110
  %v127 = vmul.f32 %v111, %v111
  %v128 = vmul.f32 %v112, %v112
  %v129 = vmul.f32 %v113, %v113
  %v130 = vmul.f32 %v114, %v114
  %v131 = vmul.f32 %v115, %v115
  %v132 = vmul.f32 %v116, %v116
  %v133 = vmul.f32 %v117, %v117
  %v134 = vmul.f32 %v118, %v118
  %v135 = vmul.f32 %v119, %v119
  %v136 = vmul.f32 %v120, %v120
  %v137 = vmul.f32 %v121, %v121
  %v138 = vmul.f32 %v122, %v122
  %v139 = vmul.f32 %v123, %v123
  %v140 = vmul.f32 %v124, %v124
  %v141 = vsel %vm37, %v125, 0.0
  %142 = vadd.xlane.f32.xlu0 %v141
  %v143 = vpop.xlane.xlu0 %142
  %v144 = vsel %vm37, %v126, 0.0
  %145 = vadd.xlane.f32.xlu0 %v144
  %v146 = vpop.xlane.xlu0 %145
  %v147 = vsel %vm37, %v127, 0.0
  %148 = vadd.xlane.f32.xlu0 %v147
  %v149 = vpop.xlane.xlu0 %148
  %v150 = vsel %vm37, %v128, 0.0
  %151 = vadd.xlane.f32.xlu0 %v150
  %v152 = vpop.xlane.xlu0 %151
  %v153 = vsel %vm37, %v129, 0.0
  %154 = vadd.xlane.f32.xlu0 %v153
  %v155 = vpop.xlane.xlu0 %154
  %v156 = vsel %vm37, %v130, 0.0
  %157 = vadd.xlane.f32.xlu0 %v156
  %v158 = vpop.xlane.xlu0 %157
  %v159 = vsel %vm37, %v131, 0.0
  %160 = vadd.xlane.f32.xlu0 %v159
  %v161 = vpop.xlane.xlu0 %160
  %v162 = vsel %vm37, %v132, 0.0
  %163 = vadd.xlane.f32.xlu0 %v162
  %v164 = vpop.xlane.xlu0 %163
  %v165 = vsel %vm37, %v133, 0.0
  %166 = vadd.xlane.f32.xlu0 %v165
  %v167 = vpop.xlane.xlu0 %166
  %v168 = vsel %vm37, %v134, 0.0
  %169 = vadd.xlane.f32.xlu0 %v168
  %v170 = vpop.xlane.xlu0 %169
  %v171 = vsel %vm37, %v135, 0.0
  %172 = vadd.xlane.f32.xlu0 %v171
  %v173 = vpop.xlane.xlu0 %172
  %v174 = vsel %vm37, %v136, 0.0
  %175 = vadd.xlane.f32.xlu0 %v174
  %v176 = vpop.xlane.xlu0 %175
  %v177 = vsel %vm37, %v137, 0.0
  %178 = vadd.xlane.f32.xlu0 %v177
  %v179 = vpop.xlane.xlu0 %178
  %v180 = vsel %vm37, %v138, 0.0
  %181 = vadd.xlane.f32.xlu0 %v180
  %v182 = vpop.xlane.xlu0 %181
  %v183 = vsel %vm37, %v139, 0.0
  %184 = vadd.xlane.f32.xlu0 %v183
  %v185 = vpop.xlane.xlu0 %184
  %v186 = vsel %vm37, %v140, 0.0
  %187 = vadd.xlane.f32.xlu0 %v186
  %v188 = vpop.xlane.xlu0 %187
  %v189 = vmul.f32 %v143, %v92
  %v190 = vmul.f32 %v146, %v92
  %v191 = vmul.f32 %v149, %v92
  %v192 = vmul.f32 %v152, %v92
  %v193 = vmul.f32 %v155, %v92
  %v194 = vmul.f32 %v158, %v92
  %v195 = vmul.f32 %v161, %v92
  %v196 = vmul.f32 %v164, %v92
  %v197 = vmul.f32 %v167, %v92
  %v198 = vmul.f32 %v170, %v92
  %v199 = vmul.f32 %v173, %v92
  %v200 = vmul.f32 %v176, %v92
  %v201 = vmul.f32 %v179, %v92
  %v202 = vmul.f32 %v182, %v92
  %v203 = vmul.f32 %v185, %v92
  %v204 = vmul.f32 %v188, %v92
  %v205 = vadd.f32 %v189, 1e-05
  %v206 = vadd.f32 %v190, 1e-05
  %v207 = vadd.f32 %v191, 1e-05
  %v208 = vadd.f32 %v192, 1e-05
  %v209 = vadd.f32 %v193, 1e-05
  %v210 = vadd.f32 %v194, 1e-05
  %v211 = vadd.f32 %v195, 1e-05
  %v212 = vadd.f32 %v196, 1e-05
  %v213 = vadd.f32 %v197, 1e-05
  %v214 = vadd.f32 %v198, 1e-05
  %v215 = vadd.f32 %v199, 1e-05
  %v216 = vadd.f32 %v200, 1e-05
  %v217 = vadd.f32 %v201, 1e-05
  %v218 = vadd.f32 %v202, 1e-05
  %v219 = vadd.f32 %v203, 1e-05
  %v220 = vadd.f32 %v204, 1e-05
  %v221 = vrsqrt.pop %v205
  %v222 = vmul.f32 %v221, %v205
  %v223 = vmul.f32 %v222, %v221
  %v224 = vmul.f32 0.5, %v223
  %v225 = vsub.f32 1.5, %v224
  %v226 = vmul.f32 %v221, %v225
  %vm227 = vweird.f32 %v205
  %vm228 = vweird.f32 %v221
  %vm229 = vmor %vm227, %vm228
  %v230 = vsel %vm229, %v221, %v226
  %v231 = vrsqrt.pop %v206
  %v232 = vmul.f32 %v231, %v206
  %v233 = vmul.f32 %v232, %v231
  %v234 = vmul.f32 0.5, %v233
  %v235 = vsub.f32 1.5, %v234
  %v236 = vmul.f32 %v231, %v235
  %vm237 = vweird.f32 %v206
  %vm238 = vweird.f32 %v231
  %vm239 = vmor %vm237, %vm238
  %v240 = vsel %vm239, %v231, %v236
  %v241 = vrsqrt.pop %v207
  %v242 = vmul.f32 %v241, %v207
  %v243 = vmul.f32 %v242, %v241
  %v244 = vmul.f32 0.5, %v243
  %v245 = vsub.f32 1.5, %v244
  %v246 = vmul.f32 %v241, %v245
  %vm247 = vweird.f32 %v207
  %vm248 = vweird.f32 %v241
  %vm249 = vmor %vm247, %vm248
  %v250 = vsel %vm249, %v241, %v246
  %v251 = vrsqrt.pop %v208
  %v252 = vmul.f32 %v251, %v208
  %v253 = vmul.f32 %v252, %v251
  %v254 = vmul.f32 0.5, %v253
  %v255 = vsub.f32 1.5, %v254
  %v256 = vmul.f32 %v251, %v255
  %vm257 = vweird.f32 %v208
  %vm258 = vweird.f32 %v251
  %vm259 = vmor %vm257, %vm258
  %v260 = vsel %vm259, %v251, %v256
  %v261 = vrsqrt.pop %v209
  %v262 = vmul.f32 %v261, %v209
  %v263 = vmul.f32 %v262, %v261
  %v264 = vmul.f32 0.5, %v263
  %v265 = vsub.f32 1.5, %v264
  %v266 = vmul.f32 %v261, %v265
  %vm267 = vweird.f32 %v209
  %vm268 = vweird.f32 %v261
  %vm269 = vmor %vm267, %vm268
  %v270 = vsel %vm269, %v261, %v266
  %v271 = vrsqrt.pop %v210
  %v272 = vmul.f32 %v271, %v210
  %v273 = vmul.f32 %v272, %v271
  %v274 = vmul.f32 0.5, %v273
  %v275 = vsub.f32 1.5, %v274
  %v276 = vmul.f32 %v271, %v275
  %vm277 = vweird.f32 %v210
  %vm278 = vweird.f32 %v271
  %vm279 = vmor %vm277, %vm278
  %v280 = vsel %vm279, %v271, %v276
  %v281 = vrsqrt.pop %v211
  %v282 = vmul.f32 %v281, %v211
  %v283 = vmul.f32 %v282, %v281
  %v284 = vmul.f32 0.5, %v283
  %v285 = vsub.f32 1.5, %v284
  %v286 = vmul.f32 %v281, %v285
  %vm287 = vweird.f32 %v211
  %vm288 = vweird.f32 %v281
  %vm289 = vmor %vm287, %vm288
  %v290 = vsel %vm289, %v281, %v286
  %v291 = vrsqrt.pop %v212
  %v292 = vmul.f32 %v291, %v212
  %v293 = vmul.f32 %v292, %v291
  %v294 = vmul.f32 0.5, %v293
  %v295 = vsub.f32 1.5, %v294
  %v296 = vmul.f32 %v291, %v295
  %vm297 = vweird.f32 %v212
  %vm298 = vweird.f32 %v291
  %vm299 = vmor %vm297, %vm298
  %v300 = vsel %vm299, %v291, %v296
  %v301 = vrsqrt.pop %v213
  %v302 = vmul.f32 %v301, %v213
  %v303 = vmul.f32 %v302, %v301
  %v304 = vmul.f32 0.5, %v303
  %v305 = vsub.f32 1.5, %v304
  %v306 = vmul.f32 %v301, %v305
  %vm307 = vweird.f32 %v213
  %vm308 = vweird.f32 %v301
  %vm309 = vmor %vm307, %vm308
  %v310 = vsel %vm309, %v301, %v306
  %v311 = vrsqrt.pop %v214
  %v312 = vmul.f32 %v311, %v214
  %v313 = vmul.f32 %v312, %v311
  %v314 = vmul.f32 0.5, %v313
  %v315 = vsub.f32 1.5, %v314
  %v316 = vmul.f32 %v311, %v315
  %vm317 = vweird.f32 %v214
  %vm318 = vweird.f32 %v311
  %vm319 = vmor %vm317, %vm318
  %v320 = vsel %vm319, %v311, %v316
  %v321 = vrsqrt.pop %v215
  %v322 = vmul.f32 %v321, %v215
  %v323 = vmul.f32 %v322, %v321
  %v324 = vmul.f32 0.5, %v323
  %v325 = vsub.f32 1.5, %v324
  %v326 = vmul.f32 %v321, %v325
  %vm327 = vweird.f32 %v215
  %vm328 = vweird.f32 %v321
  %vm329 = vmor %vm327, %vm328
  %v330 = vsel %vm329, %v321, %v326
  %v331 = vrsqrt.pop %v216
  %v332 = vmul.f32 %v331, %v216
  %v333 = vmul.f32 %v332, %v331
  %v334 = vmul.f32 0.5, %v333
  %v335 = vsub.f32 1.5, %v334
  %v336 = vmul.f32 %v331, %v335
  %vm337 = vweird.f32 %v216
  %vm338 = vweird.f32 %v331
  %vm339 = vmor %vm337, %vm338
  %v340 = vsel %vm339, %v331, %v336
  %v341 = vrsqrt.pop %v217
  %v342 = vmul.f32 %v341, %v217
  %v343 = vmul.f32 %v342, %v341
  %v344 = vmul.f32 0.5, %v343
  %v345 = vsub.f32 1.5, %v344
  %v346 = vmul.f32 %v341, %v345
  %vm347 = vweird.f32 %v217
  %vm348 = vweird.f32 %v341
  %vm349 = vmor %vm347, %vm348
  %v350 = vsel %vm349, %v341, %v346
  %v351 = vrsqrt.pop %v218
  %v352 = vmul.f32 %v351, %v218
  %v353 = vmul.f32 %v352, %v351
  %v354 = vmul.f32 0.5, %v353
  %v355 = vsub.f32 1.5, %v354
  %v356 = vmul.f32 %v351, %v355
  %vm357 = vweird.f32 %v218
  %vm358 = vweird.f32 %v351
  %vm359 = vmor %vm357, %vm358
  %v360 = vsel %vm359, %v351, %v356
  %v361 = vrsqrt.pop %v219
  %v362 = vmul.f32 %v361, %v219
  %v363 = vmul.f32 %v362, %v361
  %v364 = vmul.f32 0.5, %v363
  %v365 = vsub.f32 1.5, %v364
  %v366 = vmul.f32 %v361, %v365
  %vm367 = vweird.f32 %v219
  %vm368 = vweird.f32 %v361
  %vm369 = vmor %vm367, %vm368
  %v370 = vsel %vm369, %v361, %v366
  %v371 = vrsqrt.pop %v220
  %v372 = vmul.f32 %v371, %v220
  %v373 = vmul.f32 %v372, %v371
  %v374 = vmul.f32 0.5, %v373
  %v375 = vsub.f32 1.5, %v374
  %v376 = vmul.f32 %v371, %v375
  %vm377 = vweird.f32 %v220
  %vm378 = vweird.f32 %v371
  %vm379 = vmor %vm377, %vm378
  %v380 = vsel %vm379, %v371, %v376
  %v381 = vmul.f32 %v109, %v230
  %v382 = vmul.f32 %v110, %v240
  %v383 = vmul.f32 %v111, %v250
  %v384 = vmul.f32 %v112, %v260
  %v385 = vmul.f32 %v113, %v270
  %v386 = vmul.f32 %v114, %v280
  %v387 = vmul.f32 %v115, %v290
  %v388 = vmul.f32 %v116, %v300
  %v389 = vmul.f32 %v117, %v310
  %v390 = vmul.f32 %v118, %v320
  %v391 = vmul.f32 %v119, %v330
  %v392 = vmul.f32 %v120, %v340
  %v393 = vmul.f32 %v121, %v350
  %v394 = vmul.f32 %v122, %v360
  %v395 = vmul.f32 %v123, %v370
  %v396 = vmul.f32 %v124, %v380
  %v397 = vld [vmem:[%s1] sm:$0x1]
  %v399 = vperm.slane %v397, 0
  %v401 = vmul.f32 %v381, %v399
  %v402 = vmul.f32 %v382, %v399
  %v403 = vmul.f32 %v383, %v399
  %v404 = vmul.f32 %v384, %v399
  %v405 = vmul.f32 %v385, %v399
  %v406 = vmul.f32 %v386, %v399
  %v407 = vmul.f32 %v387, %v399
  %v408 = vmul.f32 %v388, %v399
  %v409 = vmul.f32 %v389, %v399
  %v410 = vmul.f32 %v390, %v399
  %v411 = vmul.f32 %v391, %v399
  %v412 = vmul.f32 %v392, %v399
  %v413 = vmul.f32 %v393, %v399
  %v414 = vmul.f32 %v394, %v399
  %v415 = vmul.f32 %v395, %v399
  %v416 = vmul.f32 %v396, %v399
  %v417 = vld [vmem:[%s2] sm:$0x1]
  %v419 = vperm.slane %v417, 0
  %v421 = vadd.f32 %v401, %v419
  %v422 = vadd.f32 %v402, %v419
  %v423 = vadd.f32 %v403, %v419
  %v424 = vadd.f32 %v404, %v419
  %v425 = vadd.f32 %v405, %v419
  %v426 = vadd.f32 %v406, %v419
  %v427 = vadd.f32 %v407, %v419
  %v428 = vadd.f32 %v408, %v419
  %v429 = vadd.f32 %v409, %v419
  %v430 = vadd.f32 %v410, %v419
  %v431 = vadd.f32 %v411, %v419
  %v432 = vadd.f32 %v412, %v419
  %v433 = vadd.f32 %v413, %v419
  %v434 = vadd.f32 %v414, %v419
  %v435 = vadd.f32 %v415, %v419
  %v436 = vadd.f32 %v416, %v419
  %v437 = vpack.c.bf16 %v422, %v421
  %v438 = vpack.c.bf16 %v424, %v423
  %v439 = vpack.c.bf16 %v426, %v425
  %v440 = vpack.c.bf16 %v428, %v427
  %v441 = vpack.c.bf16 %v430, %v429
  %v442 = vpack.c.bf16 %v432, %v431
  %v443 = vpack.c.bf16 %v434, %v433
  %v444 = vpack.c.bf16 %v436, %v435
  %v445 = vld [vmem:[%s3] sm:$0xf]
  %v446 = vld [vmem:[%s3 + $0x4] sm:$0xf]
  %v447 = vld [vmem:[%s3 + $0x8] sm:$0xf]
  %v448 = vld [vmem:[%s3 + $0xc] sm:$0xf]
  %v449 = vld [vmem:[%s4] sm:$0x1]
  %v451 = vperm.slane %v449, 0
  %v457 = vunpack.c.l.b16 %v445
  %v458 = vunpack.c.l.b16 %v446
  %v459 = vunpack.c.l.b16 %v447
  %v460 = vunpack.c.l.b16 %v448
  %v461 = vpack.c.b16 %v458, %v457
  %v462 = vpack.c.b16 %v460, %v459
  %v466 = vsel %vm37, %v437, 0
  %v469 = vsel %vm37, %v438, 0
  %v472 = vsel %vm37, %v439, 0
  %v475 = vsel %vm37, %v440, 0
  %v478 = vsel %vm37, %v441, 0
  %v481 = vsel %vm37, %v442, 0
  %v484 = vsel %vm37, %v443, 0
  %v487 = vsel %vm37, %v444, 0
  %489 = vmatpush.bf16.msra.mxu0 0
  %490 = vmatpush.bf16.msra.mxu0 0
  %491 = vmatpush.bf16.msra.mxu0 0
  %492 = vmatpush.bf16.msra.mxu0 0
  %493 = vmatpush.bf16.msra.mxu0 0
  %494 = vmatpush.bf16.msra.mxu0 0
  %495 = vmatpush.bf16.msra.mxu0 %v462
  %496 = vmatpush.bf16.msra.mxu0 %v461
  %497 = vmatmul.bf16.gmra.mxu0 %v466
  %v498 = vpop.f32.mrf.mxu0
  %v499 = vadd.f32 %v451, %v498
  %v500 = vpop.f32.mrf.mxu0
  %v501 = vadd.f32 %v451, %v500
  %502 = vmatmul.bf16.gmra.mxu0 %v469
  %v503 = vpop.f32.mrf.mxu0
  %v504 = vadd.f32 %v451, %v503
  %v505 = vpop.f32.mrf.mxu0
  %v506 = vadd.f32 %v451, %v505
  %507 = vmatmul.bf16.gmra.mxu0 %v472
  %v508 = vpop.f32.mrf.mxu0
  %v509 = vadd.f32 %v451, %v508
  %v510 = vpop.f32.mrf.mxu0
  %v511 = vadd.f32 %v451, %v510
  %512 = vmatmul.bf16.gmra.mxu0 %v475
  %v513 = vpop.f32.mrf.mxu0
  %v514 = vadd.f32 %v451, %v513
  %v515 = vpop.f32.mrf.mxu0
  %v516 = vadd.f32 %v451, %v515
  %517 = vmatmul.bf16.gmra.mxu0 %v478
  %v518 = vpop.f32.mrf.mxu0
  %v519 = vadd.f32 %v451, %v518
  %v520 = vpop.f32.mrf.mxu0
  %v521 = vadd.f32 %v451, %v520
  %522 = vmatmul.bf16.gmra.mxu0 %v481
  %v523 = vpop.f32.mrf.mxu0
  %v524 = vadd.f32 %v451, %v523
  %v525 = vpop.f32.mrf.mxu0
  %v526 = vadd.f32 %v451, %v525
  %527 = vmatmul.bf16.gmra.mxu0 %v484
  %v528 = vpop.f32.mrf.mxu0
  %v529 = vadd.f32 %v451, %v528
  %v530 = vpop.f32.mrf.mxu0
  %v531 = vadd.f32 %v451, %v530
  %532 = vmatmul.bf16.gmra.mxu0 %v487
  %v533 = vpop.f32.mrf.mxu0
  %v534 = vadd.f32 %v451, %v533
  %v535 = vpop.f32.mrf.mxu0
  %v536 = vadd.f32 %v451, %v535
  %537 = vdwg.mxu0
  %v538 = vmul.f32 %v499, 0.5
  %v539 = vmul.f32 %v501, 0.5
  %v540 = vmul.f32 %v504, 0.5
  %v541 = vmul.f32 %v506, 0.5
  %v542 = vmul.f32 %v509, 0.5
  %v543 = vmul.f32 %v511, 0.5
  %v544 = vmul.f32 %v514, 0.5
  %v545 = vmul.f32 %v516, 0.5
  %v546 = vmul.f32 %v519, 0.5
  %v547 = vmul.f32 %v521, 0.5
  %v548 = vmul.f32 %v524, 0.5
  %v549 = vmul.f32 %v526, 0.5
  %v550 = vmul.f32 %v529, 0.5
  %v551 = vmul.f32 %v531, 0.5
  %v552 = vmul.f32 %v534, 0.5
  %v553 = vmul.f32 %v536, 0.5
  %v554 = vmul.f32 %v499, 0.70710677
  %v555 = vmul.f32 %v501, 0.70710677
  %v556 = vmul.f32 %v504, 0.70710677
  %v557 = vmul.f32 %v506, 0.70710677
  %v558 = vmul.f32 %v509, 0.70710677
  %v559 = vmul.f32 %v511, 0.70710677
  %v560 = vmul.f32 %v514, 0.70710677
  %v561 = vmul.f32 %v516, 0.70710677
  %v562 = vmul.f32 %v519, 0.70710677
  %v563 = vmul.f32 %v521, 0.70710677
  %v564 = vmul.f32 %v524, 0.70710677
  %v565 = vmul.f32 %v526, 0.70710677
  %v566 = vmul.f32 %v529, 0.70710677
  %v567 = vmul.f32 %v531, 0.70710677
  %v568 = vmul.f32 %v534, 0.70710677
  %v569 = vmul.f32 %v536, 0.70710677
  %v570 = vand.u32 2147483647, %v554
  %v571 = vand.u32 2147483647, %v555
  %v572 = vand.u32 2147483647, %v556
  %v573 = vand.u32 2147483647, %v557
  %v574 = vand.u32 2147483647, %v558
  %v575 = vand.u32 2147483647, %v559
  %v576 = vand.u32 2147483647, %v560
  %v577 = vand.u32 2147483647, %v561
  %v578 = vand.u32 2147483647, %v562
  %v579 = vand.u32 2147483647, %v563
  %v580 = vand.u32 2147483647, %v564
  %v581 = vand.u32 2147483647, %v565
  %v582 = vand.u32 2147483647, %v566
  %v583 = vand.u32 2147483647, %v567
  %v584 = vand.u32 2147483647, %v568
  %v585 = vand.u32 2147483647, %v569
  %v586 = vmul.f32 %v570, 0.3275911
  %v587 = vmul.f32 %v571, 0.3275911
  %v588 = vmul.f32 %v572, 0.3275911
  %v589 = vmul.f32 %v573, 0.3275911
  %v590 = vmul.f32 %v574, 0.3275911
  %v591 = vmul.f32 %v575, 0.3275911
  %v592 = vmul.f32 %v576, 0.3275911
  %v593 = vmul.f32 %v577, 0.3275911
  %v594 = vmul.f32 %v578, 0.3275911
  %v595 = vmul.f32 %v579, 0.3275911
  %v596 = vmul.f32 %v580, 0.3275911
  %v597 = vmul.f32 %v581, 0.3275911
  %v598 = vmul.f32 %v582, 0.3275911
  %v599 = vmul.f32 %v583, 0.3275911
  %v600 = vmul.f32 %v584, 0.3275911
  %v601 = vmul.f32 %v585, 0.3275911
  %v602 = vadd.f32 %v586, 1.0
  %v603 = vadd.f32 %v587, 1.0
  %v604 = vadd.f32 %v588, 1.0
  %v605 = vadd.f32 %v589, 1.0
  %v606 = vadd.f32 %v590, 1.0
  %v607 = vadd.f32 %v591, 1.0
  %v608 = vadd.f32 %v592, 1.0
  %v609 = vadd.f32 %v593, 1.0
  %v610 = vadd.f32 %v594, 1.0
  %v611 = vadd.f32 %v595, 1.0
  %v612 = vadd.f32 %v596, 1.0
  %v613 = vadd.f32 %v597, 1.0
  %v614 = vadd.f32 %v598, 1.0
  %v615 = vadd.f32 %v599, 1.0
  %v616 = vadd.f32 %v600, 1.0
  %v617 = vadd.f32 %v601, 1.0
  %v618 = vrcp.pop %v602
  %v619 = vmul.f32 %v602, %v618
  %v620 = vsub.f32 1.0, %v619
  %v621 = vmul.f32 %v618, %v620
  %v622 = vadd.f32 %v618, %v621
  %vm623 = vweird.f32 %v602
  %vm624 = vweird.f32 %v618
  %vm625 = vmor %vm623, %vm624
  %v626 = vsel %vm625, %v618, %v622
  %v627 = vand.u32 2147483647, %v602
  %vm628 = vcmp.eq.f32.partialorder %v627, 8.507059e+37
  %v629 = vand.u32 %v602, 2147483648
  %v630 = vor.u32 1.1754944e-38, %v629
  %v631 = vsel %vm628, %v630, %v626
  %v632 = vmul.f32 1.0, %v631
  %v633 = vrcp.pop %v603
  %v634 = vmul.f32 %v603, %v633
  %v635 = vsub.f32 1.0, %v634
  %v636 = vmul.f32 %v633, %v635
  %v637 = vadd.f32 %v633, %v636
  %vm638 = vweird.f32 %v603
  %vm639 = vweird.f32 %v633
  %vm640 = vmor %vm638, %vm639
  %v641 = vsel %vm640, %v633, %v637
  %v642 = vand.u32 2147483647, %v603
  %vm643 = vcmp.eq.f32.partialorder %v642, 8.507059e+37
  %v644 = vand.u32 %v603, 2147483648
  %v645 = vor.u32 1.1754944e-38, %v644
  %v646 = vsel %vm643, %v645, %v641
  %v647 = vmul.f32 1.0, %v646
  %v648 = vrcp.pop %v604
  %v649 = vmul.f32 %v604, %v648
  %v650 = vsub.f32 1.0, %v649
  %v651 = vmul.f32 %v648, %v650
  %v652 = vadd.f32 %v648, %v651
  %vm653 = vweird.f32 %v604
  %vm654 = vweird.f32 %v648
  %vm655 = vmor %vm653, %vm654
  %v656 = vsel %vm655, %v648, %v652
  %v657 = vand.u32 2147483647, %v604
  %vm658 = vcmp.eq.f32.partialorder %v657, 8.507059e+37
  %v659 = vand.u32 %v604, 2147483648
  %v660 = vor.u32 1.1754944e-38, %v659
  %v661 = vsel %vm658, %v660, %v656
  %v662 = vmul.f32 1.0, %v661
  %v663 = vrcp.pop %v605
  %v664 = vmul.f32 %v605, %v663
  %v665 = vsub.f32 1.0, %v664
  %v666 = vmul.f32 %v663, %v665
  %v667 = vadd.f32 %v663, %v666
  %vm668 = vweird.f32 %v605
  %vm669 = vweird.f32 %v663
  %vm670 = vmor %vm668, %vm669
  %v671 = vsel %vm670, %v663, %v667
  %v672 = vand.u32 2147483647, %v605
  %vm673 = vcmp.eq.f32.partialorder %v672, 8.507059e+37
  %v674 = vand.u32 %v605, 2147483648
  %v675 = vor.u32 1.1754944e-38, %v674
  %v676 = vsel %vm673, %v675, %v671
  %v677 = vmul.f32 1.0, %v676
  %v678 = vrcp.pop %v606
  %v679 = vmul.f32 %v606, %v678
  %v680 = vsub.f32 1.0, %v679
  %v681 = vmul.f32 %v678, %v680
  %v682 = vadd.f32 %v678, %v681
  %vm683 = vweird.f32 %v606
  %vm684 = vweird.f32 %v678
  %vm685 = vmor %vm683, %vm684
  %v686 = vsel %vm685, %v678, %v682
  %v687 = vand.u32 2147483647, %v606
  %vm688 = vcmp.eq.f32.partialorder %v687, 8.507059e+37
  %v689 = vand.u32 %v606, 2147483648
  %v690 = vor.u32 1.1754944e-38, %v689
  %v691 = vsel %vm688, %v690, %v686
  %v692 = vmul.f32 1.0, %v691
  %v693 = vrcp.pop %v607
  %v694 = vmul.f32 %v607, %v693
  %v695 = vsub.f32 1.0, %v694
  %v696 = vmul.f32 %v693, %v695
  %v697 = vadd.f32 %v693, %v696
  %vm698 = vweird.f32 %v607
  %vm699 = vweird.f32 %v693
  %vm700 = vmor %vm698, %vm699
  %v701 = vsel %vm700, %v693, %v697
  %v702 = vand.u32 2147483647, %v607
  %vm703 = vcmp.eq.f32.partialorder %v702, 8.507059e+37
  %v704 = vand.u32 %v607, 2147483648
  %v705 = vor.u32 1.1754944e-38, %v704
  %v706 = vsel %vm703, %v705, %v701
  %v707 = vmul.f32 1.0, %v706
  %v708 = vrcp.pop %v608
  %v709 = vmul.f32 %v608, %v708
  %v710 = vsub.f32 1.0, %v709
  %v711 = vmul.f32 %v708, %v710
  %v712 = vadd.f32 %v708, %v711
  %vm713 = vweird.f32 %v608
  %vm714 = vweird.f32 %v708
  %vm715 = vmor %vm713, %vm714
  %v716 = vsel %vm715, %v708, %v712
  %v717 = vand.u32 2147483647, %v608
  %vm718 = vcmp.eq.f32.partialorder %v717, 8.507059e+37
  %v719 = vand.u32 %v608, 2147483648
  %v720 = vor.u32 1.1754944e-38, %v719
  %v721 = vsel %vm718, %v720, %v716
  %v722 = vmul.f32 1.0, %v721
  %v723 = vrcp.pop %v609
  %v724 = vmul.f32 %v609, %v723
  %v725 = vsub.f32 1.0, %v724
  %v726 = vmul.f32 %v723, %v725
  %v727 = vadd.f32 %v723, %v726
  %vm728 = vweird.f32 %v609
  %vm729 = vweird.f32 %v723
  %vm730 = vmor %vm728, %vm729
  %v731 = vsel %vm730, %v723, %v727
  %v732 = vand.u32 2147483647, %v609
  %vm733 = vcmp.eq.f32.partialorder %v732, 8.507059e+37
  %v734 = vand.u32 %v609, 2147483648
  %v735 = vor.u32 1.1754944e-38, %v734
  %v736 = vsel %vm733, %v735, %v731
  %v737 = vmul.f32 1.0, %v736
  %v738 = vrcp.pop %v610
  %v739 = vmul.f32 %v610, %v738
  %v740 = vsub.f32 1.0, %v739
  %v741 = vmul.f32 %v738, %v740
  %v742 = vadd.f32 %v738, %v741
  %vm743 = vweird.f32 %v610
  %vm744 = vweird.f32 %v738
  %vm745 = vmor %vm743, %vm744
  %v746 = vsel %vm745, %v738, %v742
  %v747 = vand.u32 2147483647, %v610
  %vm748 = vcmp.eq.f32.partialorder %v747, 8.507059e+37
  %v749 = vand.u32 %v610, 2147483648
  %v750 = vor.u32 1.1754944e-38, %v749
  %v751 = vsel %vm748, %v750, %v746
  %v752 = vmul.f32 1.0, %v751
  %v753 = vrcp.pop %v611
  %v754 = vmul.f32 %v611, %v753
  %v755 = vsub.f32 1.0, %v754
  %v756 = vmul.f32 %v753, %v755
  %v757 = vadd.f32 %v753, %v756
  %vm758 = vweird.f32 %v611
  %vm759 = vweird.f32 %v753
  %vm760 = vmor %vm758, %vm759
  %v761 = vsel %vm760, %v753, %v757
  %v762 = vand.u32 2147483647, %v611
  %vm763 = vcmp.eq.f32.partialorder %v762, 8.507059e+37
  %v764 = vand.u32 %v611, 2147483648
  %v765 = vor.u32 1.1754944e-38, %v764
  %v766 = vsel %vm763, %v765, %v761
  %v767 = vmul.f32 1.0, %v766
  %v768 = vrcp.pop %v612
  %v769 = vmul.f32 %v612, %v768
  %v770 = vsub.f32 1.0, %v769
  %v771 = vmul.f32 %v768, %v770
  %v772 = vadd.f32 %v768, %v771
  %vm773 = vweird.f32 %v612
  %vm774 = vweird.f32 %v768
  %vm775 = vmor %vm773, %vm774
  %v776 = vsel %vm775, %v768, %v772
  %v777 = vand.u32 2147483647, %v612
  %vm778 = vcmp.eq.f32.partialorder %v777, 8.507059e+37
  %v779 = vand.u32 %v612, 2147483648
  %v780 = vor.u32 1.1754944e-38, %v779
  %v781 = vsel %vm778, %v780, %v776
  %v782 = vmul.f32 1.0, %v781
  %v783 = vrcp.pop %v613
  %v784 = vmul.f32 %v613, %v783
  %v785 = vsub.f32 1.0, %v784
  %v786 = vmul.f32 %v783, %v785
  %v787 = vadd.f32 %v783, %v786
  %vm788 = vweird.f32 %v613
  %vm789 = vweird.f32 %v783
  %vm790 = vmor %vm788, %vm789
  %v791 = vsel %vm790, %v783, %v787
  %v792 = vand.u32 2147483647, %v613
  %vm793 = vcmp.eq.f32.partialorder %v792, 8.507059e+37
  %v794 = vand.u32 %v613, 2147483648
  %v795 = vor.u32 1.1754944e-38, %v794
  %v796 = vsel %vm793, %v795, %v791
  %v797 = vmul.f32 1.0, %v796
  %v798 = vrcp.pop %v614
  %v799 = vmul.f32 %v614, %v798
  %v800 = vsub.f32 1.0, %v799
  %v801 = vmul.f32 %v798, %v800
  %v802 = vadd.f32 %v798, %v801
  %vm803 = vweird.f32 %v614
  %vm804 = vweird.f32 %v798
  %vm805 = vmor %vm803, %vm804
  %v806 = vsel %vm805, %v798, %v802
  %v807 = vand.u32 2147483647, %v614
  %vm808 = vcmp.eq.f32.partialorder %v807, 8.507059e+37
  %v809 = vand.u32 %v614, 2147483648
  %v810 = vor.u32 1.1754944e-38, %v809
  %v811 = vsel %vm808, %v810, %v806
  %v812 = vmul.f32 1.0, %v811
  %v813 = vrcp.pop %v615
  %v814 = vmul.f32 %v615, %v813
  %v815 = vsub.f32 1.0, %v814
  %v816 = vmul.f32 %v813, %v815
  %v817 = vadd.f32 %v813, %v816
  %vm818 = vweird.f32 %v615
  %vm819 = vweird.f32 %v813
  %vm820 = vmor %vm818, %vm819
  %v821 = vsel %vm820, %v813, %v817
  %v822 = vand.u32 2147483647, %v615
  %vm823 = vcmp.eq.f32.partialorder %v822, 8.507059e+37
  %v824 = vand.u32 %v615, 2147483648
  %v825 = vor.u32 1.1754944e-38, %v824
  %v826 = vsel %vm823, %v825, %v821
  %v827 = vmul.f32 1.0, %v826
  %v828 = vrcp.pop %v616
  %v829 = vmul.f32 %v616, %v828
  %v830 = vsub.f32 1.0, %v829
  %v831 = vmul.f32 %v828, %v830
  %v832 = vadd.f32 %v828, %v831
  %vm833 = vweird.f32 %v616
  %vm834 = vweird.f32 %v828
  %vm835 = vmor %vm833, %vm834
  %v836 = vsel %vm835, %v828, %v832
  %v837 = vand.u32 2147483647, %v616
  %vm838 = vcmp.eq.f32.partialorder %v837, 8.507059e+37
  %v839 = vand.u32 %v616, 2147483648
  %v840 = vor.u32 1.1754944e-38, %v839
  %v841 = vsel %vm838, %v840, %v836
  %v842 = vmul.f32 1.0, %v841
  %v843 = vrcp.pop %v617
  %v844 = vmul.f32 %v617, %v843
  %v845 = vsub.f32 1.0, %v844
  %v846 = vmul.f32 %v843, %v845
  %v847 = vadd.f32 %v843, %v846
  %vm848 = vweird.f32 %v617
  %vm849 = vweird.f32 %v843
  %vm850 = vmor %vm848, %vm849
  %v851 = vsel %vm850, %v843, %v847
  %v852 = vand.u32 2147483647, %v617
  %vm853 = vcmp.eq.f32.partialorder %v852, 8.507059e+37
  %v854 = vand.u32 %v617, 2147483648
  %v855 = vor.u32 1.1754944e-38, %v854
  %v856 = vsel %vm853, %v855, %v851
  %v857 = vmul.f32 1.0, %v856
  %v858 = vmul.f32 %v632, 1.0614054
  %v859 = vmul.f32 %v647, 1.0614054
  %v860 = vmul.f32 %v662, 1.0614054
  %v861 = vmul.f32 %v677, 1.0614054
  %v862 = vmul.f32 %v692, 1.0614054
  %v863 = vmul.f32 %v707, 1.0614054
  %v864 = vmul.f32 %v722, 1.0614054
  %v865 = vmul.f32 %v737, 1.0614054
  %v866 = vmul.f32 %v752, 1.0614054
  %v867 = vmul.f32 %v767, 1.0614054
  %v868 = vmul.f32 %v782, 1.0614054
  %v869 = vmul.f32 %v797, 1.0614054
  %v870 = vmul.f32 %v812, 1.0614054
  %v871 = vmul.f32 %v827, 1.0614054
  %v872 = vmul.f32 %v842, 1.0614054
  %v873 = vmul.f32 %v857, 1.0614054
  %v874 = vadd.f32 %v858, -1.4531521
  %v875 = vadd.f32 %v859, -1.4531521
  %v876 = vadd.f32 %v860, -1.4531521
  %v877 = vadd.f32 %v861, -1.4531521
  %v878 = vadd.f32 %v862, -1.4531521
  %v879 = vadd.f32 %v863, -1.4531521
  %v880 = vadd.f32 %v864, -1.4531521
  %v881 = vadd.f32 %v865, -1.4531521
  %v882 = vadd.f32 %v866, -1.4531521
  %v883 = vadd.f32 %v867, -1.4531521
  %v884 = vadd.f32 %v868, -1.4531521
  %v885 = vadd.f32 %v869, -1.4531521
  %v886 = vadd.f32 %v870, -1.4531521
  %v887 = vadd.f32 %v871, -1.4531521
  %v888 = vadd.f32 %v872, -1.4531521
  %v889 = vadd.f32 %v873, -1.4531521
  %v890 = vmul.f32 %v874, %v632
  %v891 = vmul.f32 %v875, %v647
  %v892 = vmul.f32 %v876, %v662
  %v893 = vmul.f32 %v877, %v677
  %v894 = vmul.f32 %v878, %v692
  %v895 = vmul.f32 %v879, %v707
  %v896 = vmul.f32 %v880, %v722
  %v897 = vmul.f32 %v881, %v737
  %v898 = vmul.f32 %v882, %v752
  %v899 = vmul.f32 %v883, %v767
  %v900 = vmul.f32 %v884, %v782
  %v901 = vmul.f32 %v885, %v797
  %v902 = vmul.f32 %v886, %v812
  %v903 = vmul.f32 %v887, %v827
  %v904 = vmul.f32 %v888, %v842
  %v905 = vmul.f32 %v889, %v857
  %v906 = vadd.f32 %v890, 1.4214138
  %v907 = vadd.f32 %v891, 1.4214138
  %v908 = vadd.f32 %v892, 1.4214138
  %v909 = vadd.f32 %v893, 1.4214138
  %v910 = vadd.f32 %v894, 1.4214138
  %v911 = vadd.f32 %v895, 1.4214138
  %v912 = vadd.f32 %v896, 1.4214138
  %v913 = vadd.f32 %v897, 1.4214138
  %v914 = vadd.f32 %v898, 1.4214138
  %v915 = vadd.f32 %v899, 1.4214138
  %v916 = vadd.f32 %v900, 1.4214138
  %v917 = vadd.f32 %v901, 1.4214138
  %v918 = vadd.f32 %v902, 1.4214138
  %v919 = vadd.f32 %v903, 1.4214138
  %v920 = vadd.f32 %v904, 1.4214138
  %v921 = vadd.f32 %v905, 1.4214138
  %v922 = vmul.f32 %v906, %v632
  %v923 = vmul.f32 %v907, %v647
  %v924 = vmul.f32 %v908, %v662
  %v925 = vmul.f32 %v909, %v677
  %v926 = vmul.f32 %v910, %v692
  %v927 = vmul.f32 %v911, %v707
  %v928 = vmul.f32 %v912, %v722
  %v929 = vmul.f32 %v913, %v737
  %v930 = vmul.f32 %v914, %v752
  %v931 = vmul.f32 %v915, %v767
  %v932 = vmul.f32 %v916, %v782
  %v933 = vmul.f32 %v917, %v797
  %v934 = vmul.f32 %v918, %v812
  %v935 = vmul.f32 %v919, %v827
  %v936 = vmul.f32 %v920, %v842
  %v937 = vmul.f32 %v921, %v857
  %v938 = vadd.f32 %v922, -0.28449672
  %v939 = vadd.f32 %v923, -0.28449672
  %v940 = vadd.f32 %v924, -0.28449672
  %v941 = vadd.f32 %v925, -0.28449672
  %v942 = vadd.f32 %v926, -0.28449672
  %v943 = vadd.f32 %v927, -0.28449672
  %v944 = vadd.f32 %v928, -0.28449672
  %v945 = vadd.f32 %v929, -0.28449672
  %v946 = vadd.f32 %v930, -0.28449672
  %v947 = vadd.f32 %v931, -0.28449672
  %v948 = vadd.f32 %v932, -0.28449672
  %v949 = vadd.f32 %v933, -0.28449672
  %v950 = vadd.f32 %v934, -0.28449672
  %v951 = vadd.f32 %v935, -0.28449672
  %v952 = vadd.f32 %v936, -0.28449672
  %v953 = vadd.f32 %v937, -0.28449672
  %v954 = vmul.f32 %v938, %v632
  %v955 = vmul.f32 %v939, %v647
  %v956 = vmul.f32 %v940, %v662
  %v957 = vmul.f32 %v941, %v677
  %v958 = vmul.f32 %v942, %v692
  %v959 = vmul.f32 %v943, %v707
  %v960 = vmul.f32 %v944, %v722
  %v961 = vmul.f32 %v945, %v737
  %v962 = vmul.f32 %v946, %v752
  %v963 = vmul.f32 %v947, %v767
  %v964 = vmul.f32 %v948, %v782
  %v965 = vmul.f32 %v949, %v797
  %v966 = vmul.f32 %v950, %v812
  %v967 = vmul.f32 %v951, %v827
  %v968 = vmul.f32 %v952, %v842
  %v969 = vmul.f32 %v953, %v857
  %v970 = vadd.f32 %v954, 0.2548296
  %v971 = vadd.f32 %v955, 0.2548296
  %v972 = vadd.f32 %v956, 0.2548296
  %v973 = vadd.f32 %v957, 0.2548296
  %v974 = vadd.f32 %v958, 0.2548296
  %v975 = vadd.f32 %v959, 0.2548296
  %v976 = vadd.f32 %v960, 0.2548296
  %v977 = vadd.f32 %v961, 0.2548296
  %v978 = vadd.f32 %v962, 0.2548296
  %v979 = vadd.f32 %v963, 0.2548296
  %v980 = vadd.f32 %v964, 0.2548296
  %v981 = vadd.f32 %v965, 0.2548296
  %v982 = vadd.f32 %v966, 0.2548296
  %v983 = vadd.f32 %v967, 0.2548296
  %v984 = vadd.f32 %v968, 0.2548296
  %v985 = vadd.f32 %v969, 0.2548296
  %v986 = vmul.f32 %v970, %v632
  %v987 = vmul.f32 %v971, %v647
  %v988 = vmul.f32 %v972, %v662
  %v989 = vmul.f32 %v973, %v677
  %v990 = vmul.f32 %v974, %v692
  %v991 = vmul.f32 %v975, %v707
  %v992 = vmul.f32 %v976, %v722
  %v993 = vmul.f32 %v977, %v737
  %v994 = vmul.f32 %v978, %v752
  %v995 = vmul.f32 %v979, %v767
  %v996 = vmul.f32 %v980, %v782
  %v997 = vmul.f32 %v981, %v797
  %v998 = vmul.f32 %v982, %v812
  %v999 = vmul.f32 %v983, %v827
  %v1000 = vmul.f32 %v984, %v842
  %v1001 = vmul.f32 %v985, %v857
  %v1002 = vsub.f32 0.0, %v570
  %v1003 = vsub.f32 0.0, %v571
  %v1004 = vsub.f32 0.0, %v572
  %v1005 = vsub.f32 0.0, %v573
  %v1006 = vsub.f32 0.0, %v574
  %v1007 = vsub.f32 0.0, %v575
  %v1008 = vsub.f32 0.0, %v576
  %v1009 = vsub.f32 0.0, %v577
  %v1010 = vsub.f32 0.0, %v578
  %v1011 = vsub.f32 0.0, %v579
  %v1012 = vsub.f32 0.0, %v580
  %v1013 = vsub.f32 0.0, %v581
  %v1014 = vsub.f32 0.0, %v582
  %v1015 = vsub.f32 0.0, %v583
  %v1016 = vsub.f32 0.0, %v584
  %v1017 = vsub.f32 0.0, %v585
  %v1018 = vmul.f32 %v1002, %v570
  %v1019 = vmul.f32 %v1003, %v571
  %v1020 = vmul.f32 %v1004, %v572
  %v1021 = vmul.f32 %v1005, %v573
  %v1022 = vmul.f32 %v1006, %v574
  %v1023 = vmul.f32 %v1007, %v575
  %v1024 = vmul.f32 %v1008, %v576
  %v1025 = vmul.f32 %v1009, %v577
  %v1026 = vmul.f32 %v1010, %v578
  %v1027 = vmul.f32 %v1011, %v579
  %v1028 = vmul.f32 %v1012, %v580
  %v1029 = vmul.f32 %v1013, %v581
  %v1030 = vmul.f32 %v1014, %v582
  %v1031 = vmul.f32 %v1015, %v583
  %v1032 = vmul.f32 %v1016, %v584
  %v1033 = vmul.f32 %v1017, %v585
  %v1034 = vmul.f32 %v1018, 1.442695
  %v1035 = vpow.pop %v1034
  %v1036 = vmul.f32 %v1019, 1.442695
  %v1037 = vpow.pop %v1036
  %v1038 = vmul.f32 %v1020, 1.442695
  %v1039 = vpow.pop %v1038
  %v1040 = vmul.f32 %v1021, 1.442695
  %v1041 = vpow.pop %v1040
  %v1042 = vmul.f32 %v1022, 1.442695
  %v1043 = vpow.pop %v1042
  %v1044 = vmul.f32 %v1023, 1.442695
  %v1045 = vpow.pop %v1044
  %v1046 = vmul.f32 %v1024, 1.442695
  %v1047 = vpow.pop %v1046
  %v1048 = vmul.f32 %v1025, 1.442695
  %v1049 = vpow.pop %v1048
  %v1050 = vmul.f32 %v1026, 1.442695
  %v1051 = vpow.pop %v1050
  %v1052 = vmul.f32 %v1027, 1.442695
  %v1053 = vpow.pop %v1052
  %v1054 = vmul.f32 %v1028, 1.442695
  %v1055 = vpow.pop %v1054
  %v1056 = vmul.f32 %v1029, 1.442695
  %v1057 = vpow.pop %v1056
  %v1058 = vmul.f32 %v1030, 1.442695
  %v1059 = vpow.pop %v1058
  %v1060 = vmul.f32 %v1031, 1.442695
  %v1061 = vpow.pop %v1060
  %v1062 = vmul.f32 %v1032, 1.442695
  %v1063 = vpow.pop %v1062
  %v1064 = vmul.f32 %v1033, 1.442695
  %v1065 = vpow.pop %v1064
  %v1066 = vmul.f32 %v986, %v1035
  %v1067 = vmul.f32 %v987, %v1037
  %v1068 = vmul.f32 %v988, %v1039
  %v1069 = vmul.f32 %v989, %v1041
  %v1070 = vmul.f32 %v990, %v1043
  %v1071 = vmul.f32 %v991, %v1045
  %v1072 = vmul.f32 %v992, %v1047
  %v1073 = vmul.f32 %v993, %v1049
  %v1074 = vmul.f32 %v994, %v1051
  %v1075 = vmul.f32 %v995, %v1053
  %v1076 = vmul.f32 %v996, %v1055
  %v1077 = vmul.f32 %v997, %v1057
  %v1078 = vmul.f32 %v998, %v1059
  %v1079 = vmul.f32 %v999, %v1061
  %v1080 = vmul.f32 %v1000, %v1063
  %v1081 = vmul.f32 %v1001, %v1065
  %v1082 = vsub.f32 1.0, %v1066
  %v1083 = vsub.f32 1.0, %v1067
  %v1084 = vsub.f32 1.0, %v1068
  %v1085 = vsub.f32 1.0, %v1069
  %v1086 = vsub.f32 1.0, %v1070
  %v1087 = vsub.f32 1.0, %v1071
  %v1088 = vsub.f32 1.0, %v1072
  %v1089 = vsub.f32 1.0, %v1073
  %v1090 = vsub.f32 1.0, %v1074
  %v1091 = vsub.f32 1.0, %v1075
  %v1092 = vsub.f32 1.0, %v1076
  %v1093 = vsub.f32 1.0, %v1077
  %v1094 = vsub.f32 1.0, %v1078
  %v1095 = vsub.f32 1.0, %v1079
  %v1096 = vsub.f32 1.0, %v1080
  %v1097 = vsub.f32 1.0, %v1081
  %vm1098 = vcmp.ge.f32.partialorder %v554, 0.0
  %vm1099 = vcmp.ge.f32.partialorder %v555, 0.0
  %vm1100 = vcmp.ge.f32.partialorder %v556, 0.0
  %vm1101 = vcmp.ge.f32.partialorder %v557, 0.0
  %vm1102 = vcmp.ge.f32.partialorder %v558, 0.0
  %vm1103 = vcmp.ge.f32.partialorder %v559, 0.0
  %vm1104 = vcmp.ge.f32.partialorder %v560, 0.0
  %vm1105 = vcmp.ge.f32.partialorder %v561, 0.0
  %vm1106 = vcmp.ge.f32.partialorder %v562, 0.0
  %vm1107 = vcmp.ge.f32.partialorder %v563, 0.0
  %vm1108 = vcmp.ge.f32.partialorder %v564, 0.0
  %vm1109 = vcmp.ge.f32.partialorder %v565, 0.0
  %vm1110 = vcmp.ge.f32.partialorder %v566, 0.0
  %vm1111 = vcmp.ge.f32.partialorder %v567, 0.0
  %vm1112 = vcmp.ge.f32.partialorder %v568, 0.0
  %vm1113 = vcmp.ge.f32.partialorder %v569, 0.0
  %v1114 = vsub.f32 0.0, %v1082
  %v1115 = vsub.f32 0.0, %v1083
  %v1116 = vsub.f32 0.0, %v1084
  %v1117 = vsub.f32 0.0, %v1085
  %v1118 = vsub.f32 0.0, %v1086
  %v1119 = vsub.f32 0.0, %v1087
  %v1120 = vsub.f32 0.0, %v1088
  %v1121 = vsub.f32 0.0, %v1089
  %v1122 = vsub.f32 0.0, %v1090
  %v1123 = vsub.f32 0.0, %v1091
  %v1124 = vsub.f32 0.0, %v1092
  %v1125 = vsub.f32 0.0, %v1093
  %v1126 = vsub.f32 0.0, %v1094
  %v1127 = vsub.f32 0.0, %v1095
  %v1128 = vsub.f32 0.0, %v1096
  %v1129 = vsub.f32 0.0, %v1097
  %v1130 = vsel %vm1098, %v1082, %v1114
  %v1131 = vsel %vm1099, %v1083, %v1115
  %v1132 = vsel %vm1100, %v1084, %v1116
  %v1133 = vsel %vm1101, %v1085, %v1117
  %v1134 = vsel %vm1102, %v1086, %v1118
  %v1135 = vsel %vm1103, %v1087, %v1119
  %v1136 = vsel %vm1104, %v1088, %v1120
  %v1137 = vsel %vm1105, %v1089, %v1121
  %v1138 = vsel %vm1106, %v1090, %v1122
  %v1139 = vsel %vm1107, %v1091, %v1123
  %v1140 = vsel %vm1108, %v1092, %v1124
  %v1141 = vsel %vm1109, %v1093, %v1125
  %v1142 = vsel %vm1110, %v1094, %v1126
  %v1143 = vsel %vm1111, %v1095, %v1127
  %v1144 = vsel %vm1112, %v1096, %v1128
  %v1145 = vsel %vm1113, %v1097, %v1129
  %v1146 = vadd.f32 %v1130, 1.0
  %v1147 = vadd.f32 %v1131, 1.0
  %v1148 = vadd.f32 %v1132, 1.0
  %v1149 = vadd.f32 %v1133, 1.0
  %v1150 = vadd.f32 %v1134, 1.0
  %v1151 = vadd.f32 %v1135, 1.0
  %v1152 = vadd.f32 %v1136, 1.0
  %v1153 = vadd.f32 %v1137, 1.0
  %v1154 = vadd.f32 %v1138, 1.0
  %v1155 = vadd.f32 %v1139, 1.0
  %v1156 = vadd.f32 %v1140, 1.0
  %v1157 = vadd.f32 %v1141, 1.0
  %v1158 = vadd.f32 %v1142, 1.0
  %v1159 = vadd.f32 %v1143, 1.0
  %v1160 = vadd.f32 %v1144, 1.0
  %v1161 = vadd.f32 %v1145, 1.0
  %v1162 = vmul.f32 %v538, %v1146
  %v1163 = vmul.f32 %v539, %v1147
  %v1164 = vmul.f32 %v540, %v1148
  %v1165 = vmul.f32 %v541, %v1149
  %v1166 = vmul.f32 %v542, %v1150
  %v1167 = vmul.f32 %v543, %v1151
  %v1168 = vmul.f32 %v544, %v1152
  %v1169 = vmul.f32 %v545, %v1153
  %v1170 = vmul.f32 %v546, %v1154
  %v1171 = vmul.f32 %v547, %v1155
  %v1172 = vmul.f32 %v548, %v1156
  %v1173 = vmul.f32 %v549, %v1157
  %v1174 = vmul.f32 %v550, %v1158
  %v1175 = vmul.f32 %v551, %v1159
  %v1176 = vmul.f32 %v552, %v1160
  %v1177 = vmul.f32 %v553, %v1161
  %v1178 = vpack.c.bf16 %v1162, %v1162
  %v1179 = vpack.c.bf16 %v1163, %v1163
  %v1180 = vpack.c.bf16 %v1164, %v1164
  %v1181 = vpack.c.bf16 %v1165, %v1165
  %v1182 = vpack.c.bf16 %v1166, %v1166
  %v1183 = vpack.c.bf16 %v1167, %v1167
  %v1184 = vpack.c.bf16 %v1168, %v1168
  %v1185 = vpack.c.bf16 %v1169, %v1169
  %v1186 = vpack.c.bf16 %v1170, %v1170
  %v1187 = vpack.c.bf16 %v1171, %v1171
  %v1188 = vpack.c.bf16 %v1172, %v1172
  %v1189 = vpack.c.bf16 %v1173, %v1173
  %v1190 = vpack.c.bf16 %v1174, %v1174
  %v1191 = vpack.c.bf16 %v1175, %v1175
  %v1192 = vpack.c.bf16 %v1176, %v1176
  %v1193 = vpack.c.bf16 %v1177, %v1177
  %1194 = vst [vmem:[%s5] sm:$0xf] %v1178
  %1195 = vst [vmem:[%s5 + $0x4] sm:$0xf] %v1179
  %1196 = vst [vmem:[%s5 + $0x8] sm:$0xf] %v1180
  %1197 = vst [vmem:[%s5 + $0xc] sm:$0xf] %v1181
  %1198 = vst [vmem:[%s5 + $0x10] sm:$0xf] %v1182
  %1199 = vst [vmem:[%s5 + $0x14] sm:$0xf] %v1183
  %1200 = vst [vmem:[%s5 + $0x18] sm:$0xf] %v1184
  %1201 = vst [vmem:[%s5 + $0x1c] sm:$0xf] %v1185
  %1202 = vst [vmem:[%s5 + $0x20] sm:$0xf] %v1186
  %1203 = vst [vmem:[%s5 + $0x24] sm:$0xf] %v1187
  %1204 = vst [vmem:[%s5 + $0x28] sm:$0xf] %v1188
  %1205 = vst [vmem:[%s5 + $0x2c] sm:$0xf] %v1189
  %1206 = vst [vmem:[%s5 + $0x30] sm:$0xf] %v1190
  %1207 = vst [vmem:[%s5 + $0x34] sm:$0xf] %v1191
  %1208 = vst [vmem:[%s5 + $0x38] sm:$0xf] %v1192
  %1209 = vst [vmem:[%s5 + $0x3c] sm:$0xf] %v1193
  // Predicated region
  $region22: #{swin_encoder_block.8} parent=0 // pred_check
    _
  $region23: #{swin_encoder_block.8} parent=0 // pred_check_branch
    %1211 = sbr.rel (0) target = $region25
  $region24: #{swin_encoder_block.8} parent=0 // pred_region
    _
  $region25: #{swin_encoder_block.8} parent=0 // pred_fallthru
    _
  // Predicated region
  $region26: #{swin_encoder_block.8} parent=0 // pred_check
    _
  $region27: #{swin_encoder_block.8} parent=0 // pred_check_branch
    %1213 = sbr.rel (0) target = $region29
  $region28: #{swin_encoder_block.8} parent=0 // pred_region
    _
  $region29: #{swin_encoder_block.8} parent=0 // pred_fallthru
    _

</llo_original>
